<compile_context>
chip_gen: v7x
topology: tpu7x:2x2x1
jax: 0.10.0
libtpu: 0.0.40
codegen_flags: <defaults>
</compile_context>

<pallas_src>
import functools

import jax
import jax.numpy as jnp
import numpy as np
from jax.experimental import pallas as pl
from jax.experimental.pallas import tpu as pltpu


def _round_up(x, m):
    return (x + m - 1) // m * m


# --------------------------------------------------------------------------
# Fused kernel: bottomup gate + fusion + 3x3 conv (+BN fold) + ReLU.
# One batch image per grid step.
# --------------------------------------------------------------------------
def _fused_kernel(td_ref, xh_ref, xl_ref, bw1_ref, bb1_ref, bw2_ref, bb2_ref,
                  w3_ref, b3_ref, out_ref, *, H, W, HT, F):
    f32 = jnp.float32
    cd = bw1_ref.dtype                       # MXU compute dtype (bf16 or f32)
    HW = H * W
    C = out_ref.shape[-1]

    xh = xh_ref[...].astype(f32)             # (HW, C)
    xl = xl_ref[...].astype(f32)             # (HW, C)
    td = td_ref[...]                         # (1, C) hoisted topdown gate

    # ---- bottomup gate: 1x1 -> BN(folded) -> ReLU -> 1x1 -> BN -> sigmoid ----
    h1 = jnp.dot(xl.astype(cd), bw1_ref[...], preferred_element_type=f32)
    h1 = jnp.maximum(h1 + bb1_ref[...], 0.0)                    # (HW, Cbp)
    bu = jax.nn.sigmoid(
        jnp.dot(h1.astype(cd), bw2_ref[...], preferred_element_type=f32)
        + bb2_ref[...])                                         # (HW, C)

    # ---- fusion: xs = 2*(xl*topdown + xh*bottomup) ----
    xs = 2.0 * (xl * td + xh * bu)                              # (HW, C) f32

    # ---- conv preamble: three pre-shifted, edge-masked operand copies -------
    # Flat row-major image with F zero rows above/below (F >= W + 1).  The
    # three copies realize the kx = -1/0/+1 column shift of the 3x3 stencil;
    # the "wrapped" pixels a column shift drags in from neighbouring rows
    # (the x[.,-1] / x[.,W] taps, which must be zero) are masked once here.
    zpad = jnp.zeros((F, C), f32)
    pdf = jnp.concatenate([zpad, xs, zpad], axis=0)             # (HW + 2F, C)
    Lp = HW + 2 * W
    base = F - W
    col = jax.lax.broadcasted_iota(jnp.int32, (Lp, C), 0)
    col = (col & (W - 1)) if (W & (W - 1)) == 0 else (col % W)
    pd_mid = pdf[base:base + Lp, :].astype(cd)
    pd_lft = jnp.where(col != 0, pdf[base - 1:base - 1 + Lp, :], 0.0).astype(cd)
    pd_rgt = jnp.where(col != W - 1, pdf[base + 1:base + 1 + Lp, :], 0.0).astype(cd)

    b3 = b3_ref[...]                                            # (1, C)

    # ---- 3x3 conv: 9 shifted matmuls into a traced f32 accumulator, chunked
    #      over output rows; all slab slices start at multiples of W. ---------
    n_chunks = -(-H // HT)
    for ci in range(n_chunks):
        r0 = ci * HT
        m = min(HT, H - r0) * W
        acc = jnp.zeros((m, C), f32)
        for ky in range(3):
            s = (r0 + ky) * W                                   # aligned slab start
            acc = acc + jnp.dot(pd_lft[s:s + m, :], w3_ref[3 * ky + 0],
                                preferred_element_type=f32)
            acc = acc + jnp.dot(pd_mid[s:s + m, :], w3_ref[3 * ky + 1],
                                preferred_element_type=f32)
            acc = acc + jnp.dot(pd_rgt[s:s + m, :], w3_ref[3 * ky + 2],
                                preferred_element_type=f32)
        # folded-BN bias + ReLU once per chunk, one coalesced store.
        out_ref[r0 * W:r0 * W + m, :] = jnp.maximum(acc + b3, 0.0).astype(out_ref.dtype)


# --------------------------------------------------------------------------
# NHWC entry point (no layout transposes); NCHW wrapper below matches the
# PyTorch-style API.
# --------------------------------------------------------------------------
def asym_bi_cha_fuse_nhwc(xh, xl, p, compute_dtype=jnp.bfloat16):
    # TODO(synk): bilinear interpolate of xl to xh's size not implemented.
    assert xh.shape == xl.shape, "resize branch not implemented"
    N, H, W, C = xh.shape
    HW = H * W
    Cb = p['bw1'].shape[1]
    Cbp = _round_up(Cb, 128)                   # lane-dense bottleneck width
    cd = compute_dtype

    # ---- hoisted topdown gate (tiny; stays in plain JAX) ----
    pooled = jnp.mean(xh, axis=(1, 2))                                     # (N, C)
    t = jax.nn.relu(pooled @ p['tw1'] + p['tb1'])
    td = jax.nn.sigmoid(t @ p['tw2'] + p['tb2']).reshape(N, 1, C)          # (N, 1, C)

    # ---- kernel-side params: zero-pad Cb -> Cbp (inert), compute-dtype cast ----
    bw1 = jnp.zeros((C, Cbp), cd).at[:, :Cb].set(p['bw1'].astype(cd))
    bb1 = jnp.zeros((1, Cbp), jnp.float32).at[:, :Cb].set(p['bb1'].reshape(1, Cb))
    bw2 = jnp.zeros((Cbp, C), cd).at[:Cb, :].set(p['bw2'].astype(cd))
    bb2 = p['bb2'].reshape(1, C).astype(jnp.float32)
    w3 = p['w3'].reshape(9, C, C).astype(cd)   # (ky*3+kx, Cin, Cout), BN folded
    b3 = p['b3'].reshape(1, C).astype(jnp.float32)

    xh2 = xh.reshape(N, HW, C)                 # contiguous (free) reshapes
    xl2 = xl.reshape(N, HW, C)

    HT = max(1, min(H, max(1, 128 // W)))      # conv rows per accumulator chunk
    F = _round_up(W + 1, 8)                    # zero rows above/below flat image

    full2 = lambda b: (0, 0)
    out = pl.pallas_call(
        functools.partial(_fused_kernel, H=H, W=W, HT=HT, F=F),
        out_shape=jax.ShapeDtypeStruct((N, HW, C), jnp.float32),
        grid=(N,),
        in_specs=[
            pl.BlockSpec((None, 1, C), lambda b: (b, 0, 0)),      # topdown gate
            pl.BlockSpec((None, HW, C), lambda b: (b, 0, 0)),     # xh
            pl.BlockSpec((None, HW, C), lambda b: (b, 0, 0)),     # xl
            pl.BlockSpec((C, Cbp), full2),                        # bottomup w1
            pl.BlockSpec((1, Cbp), full2),                        # bottomup b1
            pl.BlockSpec((Cbp, C), full2),                        # bottomup w2
            pl.BlockSpec((1, C), full2),                          # bottomup b2
            pl.BlockSpec((9, C, C), lambda b: (0, 0, 0)),         # 3x3 taps (BN folded)
            pl.BlockSpec((1, C), full2),                          # conv bias (BN folded)
        ],
        out_specs=pl.BlockSpec((None, HW, C), lambda b: (b, 0, 0)),
        compiler_params=pltpu.CompilerParams(dimension_semantics=("parallel",)),
    )(td, xh2, xl2, bw1, bb1, bw2, bb2, w3, b3)

    return out.reshape(N, H, W, C)


def asym_bi_cha_fuse(xh_nchw, xl_nchw, p, compute_dtype=jnp.bfloat16):
    # NCHW boundary glue to match the PyTorch module; in an NHWC-native model
    # call asym_bi_cha_fuse_nhwc directly and skip these two transposes.
    xh = jnp.transpose(xh_nchw, (0, 2, 3, 1))
    xl = jnp.transpose(xl_nchw, (0, 2, 3, 1))
    out = asym_bi_cha_fuse_nhwc(xh, xl, p, compute_dtype)
    return jnp.transpose(out, (0, 3, 1, 2))


# --------------------------------------------------------------------------
# Deterministic parameter construction (eval-mode BN folded into convs)
# --------------------------------------------------------------------------
def _bn(k, n):
    k1, k2, k3, k4 = jax.random.split(k, 4)
    gamma = 1.0 + 0.1 * jax.random.normal(k1, (n,), jnp.float32)
    beta = 0.1 * jax.random.normal(k2, (n,), jnp.float32)
    mean = 0.1 * jax.random.normal(k3, (n,), jnp.float32)
    var = 1.0 + 0.1 * jnp.abs(jax.random.normal(k4, (n,), jnp.float32))
    return gamma, beta, mean, var


def _fold(w, b, bn, eps=1e-5):
    gamma, beta, mean, var = bn
    scale = gamma / jnp.sqrt(var + eps)
    return w * scale, (b - mean) * scale + beta


def init_params(key, channels=64, r=4):
    C, Cb = channels, channels // r
    ks = jax.random.split(key, 16)
    n = lambda k, s, sc: sc * jax.random.normal(k, s, jnp.float32)
    # topdown: 1x1(C->Cb)+BN, 1x1(Cb->C)+BN   (weights stored (Cin, Cout))
    tw1, tb1 = _fold(n(ks[0], (C, Cb), 0.1), n(ks[1], (Cb,), 0.1), _bn(ks[2], Cb))
    tw2, tb2 = _fold(n(ks[3], (Cb, C), 0.1), n(ks[4], (C,), 0.1), _bn(ks[5], C))
    # bottomup: same structure
    bw1, bb1 = _fold(n(ks[6], (C, Cb), 0.1), n(ks[7], (Cb,), 0.1), _bn(ks[8], Cb))
    bw2, bb2 = _fold(n(ks[9], (Cb, C), 0.1), n(ks[10], (C,), 0.1), _bn(ks[11], C))
    # post: 3x3(C->C)+BN   (weight as (ky, kx, Cin, Cout) = HWIO)
    w3, b3 = _fold(n(ks[12], (3, 3, C, C), 0.05), n(ks[13], (C,), 0.1), _bn(ks[14], C))
    return dict(tw1=tw1, tb1=tb1, tw2=tw2, tb2=tb2,
                bw1=bw1, bb1=bb1, bw2=bw2, bb2=bb2, w3=w3, b3=b3)


# --------------------------------------------------------------------------
# Pure-JAX reference (NHWC) mirroring the kernel's compute-dtype casts.
# --------------------------------------------------------------------------
def _reference_nhwc(xh, xl, p, compute_dtype):
    cd = compute_dtype
    pooled = jnp.mean(xh, axis=(1, 2))
    t = jax.nn.relu(pooled @ p['tw1'] + p['tb1'])
    td = jax.nn.sigmoid(t @ p['tw2'] + p['tb2'])[:, None, None, :]
    h1 = jax.nn.relu(jnp.einsum('nhwc,cd->nhwd', xl.astype(cd), p['bw1'].astype(cd),
                                preferred_element_type=jnp.float32) + p['bb1'])
    bu = jax.nn.sigmoid(jnp.einsum('nhwd,dc->nhwc', h1.astype(cd), p['bw2'].astype(cd),
                                   preferred_element_type=jnp.float32) + p['bb2'])
    xs = 2.0 * (xl * td + xh * bu)
    y = jax.lax.conv_general_dilated(xs.astype(cd), p['w3'].astype(cd), (1, 1), 'SAME',
                                     dimension_numbers=('NHWC', 'HWIO', 'NHWC'),
                                     preferred_element_type=jnp.float32)
    return jax.nn.relu(y + p['b3'])


if __name__ == "__main__":
    N, C, H, W = 2, 64, 16, 16          # module defaults: channels=64, r=4
    key = jax.random.PRNGKey(0)
    k1, k2, k3 = jax.random.split(key, 3)
    xh = jax.random.normal(k1, (N, C, H, W), jnp.float32)   # NCHW, like PyTorch
    xl = jax.random.normal(k2, (N, C, H, W), jnp.float32)
    params = init_params(k3, channels=C, r=4)

    xh_nhwc = jnp.transpose(xh, (0, 2, 3, 1))
    xl_nhwc = jnp.transpose(xl, (0, 2, 3, 1))

    # Tight validation path: f32 MXU operands.
    fuse32 = jax.jit(functools.partial(asym_bi_cha_fuse, compute_dtype=jnp.float32))
    out32 = jax.block_until_ready(fuse32(xh, xl, params))
    ref32 = jnp.transpose(_reference_nhwc(xh_nhwc, xl_nhwc, params, jnp.float32),
                          (0, 3, 1, 2))
    np.testing.assert_allclose(np.asarray(out32), np.asarray(ref32),
                               atol=2e-3, rtol=2e-3)

    # Default fast path: bf16 MXU operands, f32 accumulation.
    fuse = jax.jit(asym_bi_cha_fuse)
    out = jax.block_until_ready(fuse(xh, xl, params))
    assert out.shape == (N, C, H, W) and out.dtype == jnp.float32
    ref = jnp.transpose(_reference_nhwc(xh_nhwc, xl_nhwc, params, jnp.bfloat16),
                        (0, 3, 1, 2))
    # Loose tolerance covers bf16 rounding / transcendental impl differences.
    np.testing.assert_allclose(np.asarray(out), np.asarray(ref), atol=2e-2, rtol=2e-2)

    print("KERNEL_OK")
</pallas_src>

<mosaic_0001>
module attributes {stable_mosaic.version = 11 : i64} {
  func.func @_fused_kernel(%arg0: i32, %arg1: memref<1x1x64xf32, #tpu.memory_space<vmem>>, %arg2: memref<1x256x64xf32, #tpu.memory_space<vmem>>, %arg3: memref<1x256x64xf32, #tpu.memory_space<vmem>>, %arg4: memref<64x128xf32, #tpu.memory_space<vmem>>, %arg5: memref<1x128xf32, #tpu.memory_space<vmem>>, %arg6: memref<128x64xf32, #tpu.memory_space<vmem>>, %arg7: memref<1x64xf32, #tpu.memory_space<vmem>>, %arg8: memref<9x64x64xf32, #tpu.memory_space<vmem>>, %arg9: memref<1x64xf32, #tpu.memory_space<vmem>>, %arg10: memref<1x256x64xf32, #tpu.memory_space<vmem>>) attributes {dimension_semantics = [#tpu.dimension_semantics<parallel>], iteration_bounds = array<i64: 2>, scalar_prefetch = 0 : i64, scratch_operands = 0 : i64, tpu.core_type = #tpu.core_type<tc>, window_params = [{transform_indices = @transform_0, window_bounds = array<i64: 1, 1, 64>}, {transform_indices = @transform_1, window_bounds = array<i64: 1, 256, 64>}, {transform_indices = @transform_2, window_bounds = array<i64: 1, 256, 64>}, {pipeline_mode = #tpu.pipeline_mode<synchronous>, transform_indices = @transform_3, window_bounds = array<i64: 64, 128>}, {pipeline_mode = #tpu.pipeline_mode<synchronous>, transform_indices = @transform_4, window_bounds = array<i64: 1, 128>}, {pipeline_mode = #tpu.pipeline_mode<synchronous>, transform_indices = @transform_5, window_bounds = array<i64: 128, 64>}, {pipeline_mode = #tpu.pipeline_mode<synchronous>, transform_indices = @transform_6, window_bounds = array<i64: 1, 64>}, {pipeline_mode = #tpu.pipeline_mode<synchronous>, transform_indices = @transform_7, window_bounds = array<i64: 9, 64, 64>}, {pipeline_mode = #tpu.pipeline_mode<synchronous>, transform_indices = @transform_8, window_bounds = array<i64: 1, 64>}, {transform_indices = @transform_9, window_bounds = array<i64: 1, 256, 64>}]} {
    %c0 = arith.constant 0 : index
    %c0_0 = arith.constant 0 : index
    %c0_1 = arith.constant 0 : index
    %0 = vector.load %arg2[%c0, %c0_0, %c0_1] : memref<1x256x64xf32, #tpu.memory_space<vmem>>, vector<1x256x64xf32>
    %1 = vector.shape_cast %0 : vector<1x256x64xf32> to vector<256x64xf32>
    %c0_2 = arith.constant 0 : index
    %c0_3 = arith.constant 0 : index
    %c0_4 = arith.constant 0 : index
    %2 = vector.load %arg3[%c0_2, %c0_3, %c0_4] : memref<1x256x64xf32, #tpu.memory_space<vmem>>, vector<1x256x64xf32>
    %3 = vector.shape_cast %2 : vector<1x256x64xf32> to vector<256x64xf32>
    %c0_5 = arith.constant 0 : index
    %c0_6 = arith.constant 0 : index
    %c0_7 = arith.constant 0 : index
    %4 = vector.load %arg1[%c0_5, %c0_6, %c0_7] : memref<1x1x64xf32, #tpu.memory_space<vmem>>, vector<1x1x64xf32>
    %5 = vector.shape_cast %4 : vector<1x1x64xf32> to vector<1x64xf32>
    %c0_8 = arith.constant 0 : index
    %c0_9 = arith.constant 0 : index
    %6 = vector.load %arg4[%c0_8, %c0_9] : memref<64x128xf32, #tpu.memory_space<vmem>>, vector<64x128xf32>
    %cst = arith.constant dense<0.000000e+00> : vector<256x128xf32>
    %7 = tpu.matmul %3, %6, %cst {dimension_numbers = #tpu.dot_dimension_numbers<[1], [0], [0], [1], [0, 0, 1, 1], [], []>} : vector<256x64xf32>, vector<64x128xf32>, vector<256x128xf32> -> vector<256x128xf32>
    %c0_10 = arith.constant 0 : index
    %c0_11 = arith.constant 0 : index
    %8 = vector.load %arg5[%c0_10, %c0_11] : memref<1x128xf32, #tpu.memory_space<vmem>>, vector<1x128xf32>
    %9 = vector.broadcast %8 : vector<1x128xf32> to vector<256x128xf32>
    %10 = arith.addf %7, %9 : vector<256x128xf32>
    %cst_12 = arith.constant 0.000000e+00 : f32
    %11 = vector.broadcast %cst_12 : f32 to vector<256x128xf32>
    %12 = arith.maximumf %10, %11 : vector<256x128xf32>
    %c0_13 = arith.constant 0 : index
    %c0_14 = arith.constant 0 : index
    %13 = vector.load %arg6[%c0_13, %c0_14] : memref<128x64xf32, #tpu.memory_space<vmem>>, vector<128x64xf32>
    %cst_15 = arith.constant dense<0.000000e+00> : vector<256x64xf32>
    %14 = tpu.matmul %12, %13, %cst_15 {dimension_numbers = #tpu.dot_dimension_numbers<[1], [0], [0], [1], [0, 0, 1, 1], [], []>} : vector<256x128xf32>, vector<128x64xf32>, vector<256x64xf32> -> vector<256x64xf32>
    %c0_16 = arith.constant 0 : index
    %c0_17 = arith.constant 0 : index
    %15 = vector.load %arg7[%c0_16, %c0_17] : memref<1x64xf32, #tpu.memory_space<vmem>>, vector<1x64xf32>
    %16 = vector.broadcast %15 : vector<1x64xf32> to vector<256x64xf32>
    %17 = arith.addf %14, %16 : vector<256x64xf32>
    %18 = arith.negf %17 : vector<256x64xf32>
    %19 = math.exp %18 : vector<256x64xf32>
    %cst_18 = arith.constant 1.000000e+00 : f32
    %20 = vector.broadcast %cst_18 : f32 to vector<256x64xf32>
    %21 = arith.addf %20, %19 : vector<256x64xf32>
    %22 = arith.divf %20, %21 : vector<256x64xf32>
    %23 = vector.broadcast %5 : vector<1x64xf32> to vector<256x64xf32>
    %24 = arith.mulf %3, %23 : vector<256x64xf32>
    %25 = arith.mulf %1, %22 : vector<256x64xf32>
    %26 = arith.addf %24, %25 : vector<256x64xf32>
    %cst_19 = arith.constant 2.000000e+00 : f32
    %27 = vector.broadcast %cst_19 : f32 to vector<256x64xf32>
    %28 = arith.mulf %27, %26 : vector<256x64xf32>
    %cst_20 = arith.constant 0.000000e+00 : f32
    %29 = vector.broadcast %cst_20 : f32 to vector<24x64xf32>
    %30 = tpu.concatenate %29, %28, %29 in 0 : vector<24x64xf32>, vector<256x64xf32>, vector<24x64xf32> -> vector<304x64xf32>
    %31 = tpu.iota {dimensions = array<i32: 0>} : vector<288x64xi32>
    %c15_i32 = arith.constant 15 : i32
    %32 = vector.broadcast %c15_i32 : i32 to vector<288x64xi32>
    %33 = arith.andi %31, %32 : vector<288x64xi32>
    %34 = vector.extract_strided_slice %30 {offsets = [8, 0], sizes = [288, 64], strides = [1, 1]} : vector<304x64xf32> to vector<288x64xf32>
    %c0_i32 = arith.constant 0 : i32
    %35 = vector.broadcast %c0_i32 : i32 to vector<288x64xi32>
    %36 = arith.cmpi ne, %33, %35 : vector<288x64xi32>
    %37 = vector.extract_strided_slice %30 {offsets = [7, 0], sizes = [288, 64], strides = [1, 1]} : vector<304x64xf32> to vector<288x64xf32>
    %cst_21 = arith.constant 0.000000e+00 : f32
    %38 = vector.broadcast %cst_21 : f32 to vector<288x64xf32>
    %39 = arith.select %36, %37, %38 : vector<288x64xi1>, vector<288x64xf32>
    %c15_i32_22 = arith.constant 15 : i32
    %40 = vector.broadcast %c15_i32_22 : i32 to vector<288x64xi32>
    %41 = arith.cmpi ne, %33, %40 : vector<288x64xi32>
    %42 = vector.extract_strided_slice %30 {offsets = [9, 0], sizes = [288, 64], strides = [1, 1]} : vector<304x64xf32> to vector<288x64xf32>
    %cst_23 = arith.constant 0.000000e+00 : f32
    %43 = vector.broadcast %cst_23 : f32 to vector<288x64xf32>
    %44 = arith.select %41, %42, %43 : vector<288x64xi1>, vector<288x64xf32>
    %c0_24 = arith.constant 0 : index
    %c0_25 = arith.constant 0 : index
    %45 = vector.load %arg9[%c0_24, %c0_25] : memref<1x64xf32, #tpu.memory_space<vmem>>, vector<1x64xf32>
    %cst_26 = arith.constant 0.000000e+00 : f32
    %46 = vector.broadcast %cst_26 : f32 to vector<128x64xf32>
    %47 = vector.extract_strided_slice %39 {offsets = [0, 0], sizes = [128, 64], strides = [1, 1]} : vector<288x64xf32> to vector<128x64xf32>
    %c0_27 = arith.constant 0 : index
    %c0_28 = arith.constant 0 : index
    %c0_29 = arith.constant 0 : index
    %48 = vector.load %arg8[%c0_27, %c0_28, %c0_29] : memref<9x64x64xf32, #tpu.memory_space<vmem>>, vector<1x64x64xf32>
    %49 = vector.shape_cast %48 : vector<1x64x64xf32> to vector<64x64xf32>
    %cst_30 = arith.constant dense<0.000000e+00> : vector<128x64xf32>
    %50 = tpu.matmul %47, %49, %cst_30 {dimension_numbers = #tpu.dot_dimension_numbers<[1], [0], [0], [1], [0, 0, 1, 1], [], []>} : vector<128x64xf32>, vector<64x64xf32>, vector<128x64xf32> -> vector<128x64xf32>
    %51 = arith.addf %46, %50 : vector<128x64xf32>
    %52 = vector.extract_strided_slice %34 {offsets = [0, 0], sizes = [128, 64], strides = [1, 1]} : vector<288x64xf32> to vector<128x64xf32>
    %c1 = arith.constant 1 : index
    %c0_31 = arith.constant 0 : index
    %c0_32 = arith.constant 0 : index
    %53 = vector.load %arg8[%c1, %c0_31, %c0_32] : memref<9x64x64xf32, #tpu.memory_space<vmem>>, vector<1x64x64xf32>
    %54 = vector.shape_cast %53 : vector<1x64x64xf32> to vector<64x64xf32>
    %cst_33 = arith.constant dense<0.000000e+00> : vector<128x64xf32>
    %55 = tpu.matmul %52, %54, %cst_33 {dimension_numbers = #tpu.dot_dimension_numbers<[1], [0], [0], [1], [0, 0, 1, 1], [], []>} : vector<128x64xf32>, vector<64x64xf32>, vector<128x64xf32> -> vector<128x64xf32>
    %56 = arith.addf %51, %55 : vector<128x64xf32>
    %57 = vector.extract_strided_slice %44 {offsets = [0, 0], sizes = [128, 64], strides = [1, 1]} : vector<288x64xf32> to vector<128x64xf32>
    %c2 = arith.constant 2 : index
    %c0_34 = arith.constant 0 : index
    %c0_35 = arith.constant 0 : index
    %58 = vector.load %arg8[%c2, %c0_34, %c0_35] : memref<9x64x64xf32, #tpu.memory_space<vmem>>, vector<1x64x64xf32>
    %59 = vector.shape_cast %58 : vector<1x64x64xf32> to vector<64x64xf32>
    %cst_36 = arith.constant dense<0.000000e+00> : vector<128x64xf32>
    %60 = tpu.matmul %57, %59, %cst_36 {dimension_numbers = #tpu.dot_dimension_numbers<[1], [0], [0], [1], [0, 0, 1, 1], [], []>} : vector<128x64xf32>, vector<64x64xf32>, vector<128x64xf32> -> vector<128x64xf32>
    %61 = arith.addf %56, %60 : vector<128x64xf32>
    %62 = vector.extract_strided_slice %39 {offsets = [16, 0], sizes = [128, 64], strides = [1, 1]} : vector<288x64xf32> to vector<128x64xf32>
    %c3 = arith.constant 3 : index
    %c0_37 = arith.constant 0 : index
    %c0_38 = arith.constant 0 : index
    %63 = vector.load %arg8[%c3, %c0_37, %c0_38] : memref<9x64x64xf32, #tpu.memory_space<vmem>>, vector<1x64x64xf32>
    %64 = vector.shape_cast %63 : vector<1x64x64xf32> to vector<64x64xf32>
    %cst_39 = arith.constant dense<0.000000e+00> : vector<128x64xf32>
    %65 = tpu.matmul %62, %64, %cst_39 {dimension_numbers = #tpu.dot_dimension_numbers<[1], [0], [0], [1], [0, 0, 1, 1], [], []>} : vector<128x64xf32>, vector<64x64xf32>, vector<128x64xf32> -> vector<128x64xf32>
    %66 = arith.addf %61, %65 : vector<128x64xf32>
    %67 = vector.extract_strided_slice %34 {offsets = [16, 0], sizes = [128, 64], strides = [1, 1]} : vector<288x64xf32> to vector<128x64xf32>
    %c4 = arith.constant 4 : index
    %c0_40 = arith.constant 0 : index
    %c0_41 = arith.constant 0 : index
    %68 = vector.load %arg8[%c4, %c0_40, %c0_41] : memref<9x64x64xf32, #tpu.memory_space<vmem>>, vector<1x64x64xf32>
    %69 = vector.shape_cast %68 : vector<1x64x64xf32> to vector<64x64xf32>
    %cst_42 = arith.constant dense<0.000000e+00> : vector<128x64xf32>
    %70 = tpu.matmul %67, %69, %cst_42 {dimension_numbers = #tpu.dot_dimension_numbers<[1], [0], [0], [1], [0, 0, 1, 1], [], []>} : vector<128x64xf32>, vector<64x64xf32>, vector<128x64xf32> -> vector<128x64xf32>
    %71 = arith.addf %66, %70 : vector<128x64xf32>
    %72 = vector.extract_strided_slice %44 {offsets = [16, 0], sizes = [128, 64], strides = [1, 1]} : vector<288x64xf32> to vector<128x64xf32>
    %c5 = arith.constant 5 : index
    %c0_43 = arith.constant 0 : index
    %c0_44 = arith.constant 0 : index
    %73 = vector.load %arg8[%c5, %c0_43, %c0_44] : memref<9x64x64xf32, #tpu.memory_space<vmem>>, vector<1x64x64xf32>
    %74 = vector.shape_cast %73 : vector<1x64x64xf32> to vector<64x64xf32>
    %cst_45 = arith.constant dense<0.000000e+00> : vector<128x64xf32>
    %75 = tpu.matmul %72, %74, %cst_45 {dimension_numbers = #tpu.dot_dimension_numbers<[1], [0], [0], [1], [0, 0, 1, 1], [], []>} : vector<128x64xf32>, vector<64x64xf32>, vector<128x64xf32> -> vector<128x64xf32>
    %76 = arith.addf %71, %75 : vector<128x64xf32>
    %77 = vector.extract_strided_slice %39 {offsets = [32, 0], sizes = [128, 64], strides = [1, 1]} : vector<288x64xf32> to vector<128x64xf32>
    %c6 = arith.constant 6 : index
    %c0_46 = arith.constant 0 : index
    %c0_47 = arith.constant 0 : index
    %78 = vector.load %arg8[%c6, %c0_46, %c0_47] : memref<9x64x64xf32, #tpu.memory_space<vmem>>, vector<1x64x64xf32>
    %79 = vector.shape_cast %78 : vector<1x64x64xf32> to vector<64x64xf32>
    %cst_48 = arith.constant dense<0.000000e+00> : vector<128x64xf32>
    %80 = tpu.matmul %77, %79, %cst_48 {dimension_numbers = #tpu.dot_dimension_numbers<[1], [0], [0], [1], [0, 0, 1, 1], [], []>} : vector<128x64xf32>, vector<64x64xf32>, vector<128x64xf32> -> vector<128x64xf32>
    %81 = arith.addf %76, %80 : vector<128x64xf32>
    %82 = vector.extract_strided_slice %34 {offsets = [32, 0], sizes = [128, 64], strides = [1, 1]} : vector<288x64xf32> to vector<128x64xf32>
    %c7 = arith.constant 7 : index
    %c0_49 = arith.constant 0 : index
    %c0_50 = arith.constant 0 : index
    %83 = vector.load %arg8[%c7, %c0_49, %c0_50] : memref<9x64x64xf32, #tpu.memory_space<vmem>>, vector<1x64x64xf32>
    %84 = vector.shape_cast %83 : vector<1x64x64xf32> to vector<64x64xf32>
    %cst_51 = arith.constant dense<0.000000e+00> : vector<128x64xf32>
    %85 = tpu.matmul %82, %84, %cst_51 {dimension_numbers = #tpu.dot_dimension_numbers<[1], [0], [0], [1], [0, 0, 1, 1], [], []>} : vector<128x64xf32>, vector<64x64xf32>, vector<128x64xf32> -> vector<128x64xf32>
    %86 = arith.addf %81, %85 : vector<128x64xf32>
    %87 = vector.extract_strided_slice %44 {offsets = [32, 0], sizes = [128, 64], strides = [1, 1]} : vector<288x64xf32> to vector<128x64xf32>
    %c8 = arith.constant 8 : index
    %c0_52 = arith.constant 0 : index
    %c0_53 = arith.constant 0 : index
    %88 = vector.load %arg8[%c8, %c0_52, %c0_53] : memref<9x64x64xf32, #tpu.memory_space<vmem>>, vector<1x64x64xf32>
    %89 = vector.shape_cast %88 : vector<1x64x64xf32> to vector<64x64xf32>
    %cst_54 = arith.constant dense<0.000000e+00> : vector<128x64xf32>
    %90 = tpu.matmul %87, %89, %cst_54 {dimension_numbers = #tpu.dot_dimension_numbers<[1], [0], [0], [1], [0, 0, 1, 1], [], []>} : vector<128x64xf32>, vector<64x64xf32>, vector<128x64xf32> -> vector<128x64xf32>
    %91 = arith.addf %86, %90 : vector<128x64xf32>
    %92 = vector.broadcast %45 : vector<1x64xf32> to vector<128x64xf32>
    %93 = arith.addf %91, %92 : vector<128x64xf32>
    %cst_55 = arith.constant 0.000000e+00 : f32
    %94 = vector.broadcast %cst_55 : f32 to vector<128x64xf32>
    %95 = arith.maximumf %93, %94 : vector<128x64xf32>
    %c0_56 = arith.constant 0 : index
    %c0_57 = arith.constant 0 : index
    %c0_58 = arith.constant 0 : index
    %96 = vector.load %arg10[%c0_56, %c0_57, %c0_58] : memref<1x256x64xf32, #tpu.memory_space<vmem>>, vector<1x128x64xf32>
    %97 = vector.shape_cast %96 : vector<1x128x64xf32> to vector<128x64xf32>
    %98 = vector.shape_cast %95 : vector<128x64xf32> to vector<1x128x64xf32>
    tpu.vector_store %arg10[%c0_56, %c0_57, %c0_58], %98 {strides = array<i32>} : memref<1x256x64xf32, #tpu.memory_space<vmem>>, vector<1x128x64xf32>,
    %cst_59 = arith.constant 0.000000e+00 : f32
    %99 = vector.broadcast %cst_59 : f32 to vector<128x64xf32>
    %100 = vector.extract_strided_slice %39 {offsets = [128, 0], sizes = [128, 64], strides = [1, 1]} : vector<288x64xf32> to vector<128x64xf32>
    %c0_60 = arith.constant 0 : index
    %c0_61 = arith.constant 0 : index
    %c0_62 = arith.constant 0 : index
    %101 = vector.load %arg8[%c0_60, %c0_61, %c0_62] : memref<9x64x64xf32, #tpu.memory_space<vmem>>, vector<1x64x64xf32>
    %102 = vector.shape_cast %101 : vector<1x64x64xf32> to vector<64x64xf32>
    %cst_63 = arith.constant dense<0.000000e+00> : vector<128x64xf32>
    %103 = tpu.matmul %100, %102, %cst_63 {dimension_numbers = #tpu.dot_dimension_numbers<[1], [0], [0], [1], [0, 0, 1, 1], [], []>} : vector<128x64xf32>, vector<64x64xf32>, vector<128x64xf32> -> vector<128x64xf32>
    %104 = arith.addf %99, %103 : vector<128x64xf32>
    %105 = vector.extract_strided_slice %34 {offsets = [128, 0], sizes = [128, 64], strides = [1, 1]} : vector<288x64xf32> to vector<128x64xf32>
    %c1_64 = arith.constant 1 : index
    %c0_65 = arith.constant 0 : index
    %c0_66 = arith.constant 0 : index
    %106 = vector.load %arg8[%c1_64, %c0_65, %c0_66] : memref<9x64x64xf32, #tpu.memory_space<vmem>>, vector<1x64x64xf32>
    %107 = vector.shape_cast %106 : vector<1x64x64xf32> to vector<64x64xf32>
    %cst_67 = arith.constant dense<0.000000e+00> : vector<128x64xf32>
    %108 = tpu.matmul %105, %107, %cst_67 {dimension_numbers = #tpu.dot_dimension_numbers<[1], [0], [0], [1], [0, 0, 1, 1], [], []>} : vector<128x64xf32>, vector<64x64xf32>, vector<128x64xf32> -> vector<128x64xf32>
    %109 = arith.addf %104, %108 : vector<128x64xf32>
    %110 = vector.extract_strided_slice %44 {offsets = [128, 0], sizes = [128, 64], strides = [1, 1]} : vector<288x64xf32> to vector<128x64xf32>
    %c2_68 = arith.constant 2 : index
    %c0_69 = arith.constant 0 : index
    %c0_70 = arith.constant 0 : index
    %111 = vector.load %arg8[%c2_68, %c0_69, %c0_70] : memref<9x64x64xf32, #tpu.memory_space<vmem>>, vector<1x64x64xf32>
    %112 = vector.shape_cast %111 : vector<1x64x64xf32> to vector<64x64xf32>
    %cst_71 = arith.constant dense<0.000000e+00> : vector<128x64xf32>
    %113 = tpu.matmul %110, %112, %cst_71 {dimension_numbers = #tpu.dot_dimension_numbers<[1], [0], [0], [1], [0, 0, 1, 1], [], []>} : vector<128x64xf32>, vector<64x64xf32>, vector<128x64xf32> -> vector<128x64xf32>
    %114 = arith.addf %109, %113 : vector<128x64xf32>
    %115 = vector.extract_strided_slice %39 {offsets = [144, 0], sizes = [128, 64], strides = [1, 1]} : vector<288x64xf32> to vector<128x64xf32>
    %c3_72 = arith.constant 3 : index
    %c0_73 = arith.constant 0 : index
    %c0_74 = arith.constant 0 : index
    %116 = vector.load %arg8[%c3_72, %c0_73, %c0_74] : memref<9x64x64xf32, #tpu.memory_space<vmem>>, vector<1x64x64xf32>
    %117 = vector.shape_cast %116 : vector<1x64x64xf32> to vector<64x64xf32>
    %cst_75 = arith.constant dense<0.000000e+00> : vector<128x64xf32>
    %118 = tpu.matmul %115, %117, %cst_75 {dimension_numbers = #tpu.dot_dimension_numbers<[1], [0], [0], [1], [0, 0, 1, 1], [], []>} : vector<128x64xf32>, vector<64x64xf32>, vector<128x64xf32> -> vector<128x64xf32>
    %119 = arith.addf %114, %118 : vector<128x64xf32>
    %120 = vector.extract_strided_slice %34 {offsets = [144, 0], sizes = [128, 64], strides = [1, 1]} : vector<288x64xf32> to vector<128x64xf32>
    %c4_76 = arith.constant 4 : index
    %c0_77 = arith.constant 0 : index
    %c0_78 = arith.constant 0 : index
    %121 = vector.load %arg8[%c4_76, %c0_77, %c0_78] : memref<9x64x64xf32, #tpu.memory_space<vmem>>, vector<1x64x64xf32>
    %122 = vector.shape_cast %121 : vector<1x64x64xf32> to vector<64x64xf32>
    %cst_79 = arith.constant dense<0.000000e+00> : vector<128x64xf32>
    %123 = tpu.matmul %120, %122, %cst_79 {dimension_numbers = #tpu.dot_dimension_numbers<[1], [0], [0], [1], [0, 0, 1, 1], [], []>} : vector<128x64xf32>, vector<64x64xf32>, vector<128x64xf32> -> vector<128x64xf32>
    %124 = arith.addf %119, %123 : vector<128x64xf32>
    %125 = vector.extract_strided_slice %44 {offsets = [144, 0], sizes = [128, 64], strides = [1, 1]} : vector<288x64xf32> to vector<128x64xf32>
    %c5_80 = arith.constant 5 : index
    %c0_81 = arith.constant 0 : index
    %c0_82 = arith.constant 0 : index
    %126 = vector.load %arg8[%c5_80, %c0_81, %c0_82] : memref<9x64x64xf32, #tpu.memory_space<vmem>>, vector<1x64x64xf32>
    %127 = vector.shape_cast %126 : vector<1x64x64xf32> to vector<64x64xf32>
    %cst_83 = arith.constant dense<0.000000e+00> : vector<128x64xf32>
    %128 = tpu.matmul %125, %127, %cst_83 {dimension_numbers = #tpu.dot_dimension_numbers<[1], [0], [0], [1], [0, 0, 1, 1], [], []>} : vector<128x64xf32>, vector<64x64xf32>, vector<128x64xf32> -> vector<128x64xf32>
    %129 = arith.addf %124, %128 : vector<128x64xf32>
    %130 = vector.extract_strided_slice %39 {offsets = [160, 0], sizes = [128, 64], strides = [1, 1]} : vector<288x64xf32> to vector<128x64xf32>
    %c6_84 = arith.constant 6 : index
    %c0_85 = arith.constant 0 : index
    %c0_86 = arith.constant 0 : index
    %131 = vector.load %arg8[%c6_84, %c0_85, %c0_86] : memref<9x64x64xf32, #tpu.memory_space<vmem>>, vector<1x64x64xf32>
    %132 = vector.shape_cast %131 : vector<1x64x64xf32> to vector<64x64xf32>
    %cst_87 = arith.constant dense<0.000000e+00> : vector<128x64xf32>
    %133 = tpu.matmul %130, %132, %cst_87 {dimension_numbers = #tpu.dot_dimension_numbers<[1], [0], [0], [1], [0, 0, 1, 1], [], []>} : vector<128x64xf32>, vector<64x64xf32>, vector<128x64xf32> -> vector<128x64xf32>
    %134 = arith.addf %129, %133 : vector<128x64xf32>
    %135 = vector.extract_strided_slice %34 {offsets = [160, 0], sizes = [128, 64], strides = [1, 1]} : vector<288x64xf32> to vector<128x64xf32>
    %c7_88 = arith.constant 7 : index
    %c0_89 = arith.constant 0 : index
    %c0_90 = arith.constant 0 : index
    %136 = vector.load %arg8[%c7_88, %c0_89, %c0_90] : memref<9x64x64xf32, #tpu.memory_space<vmem>>, vector<1x64x64xf32>
    %137 = vector.shape_cast %136 : vector<1x64x64xf32> to vector<64x64xf32>
    %cst_91 = arith.constant dense<0.000000e+00> : vector<128x64xf32>
    %138 = tpu.matmul %135, %137, %cst_91 {dimension_numbers = #tpu.dot_dimension_numbers<[1], [0], [0], [1], [0, 0, 1, 1], [], []>} : vector<128x64xf32>, vector<64x64xf32>, vector<128x64xf32> -> vector<128x64xf32>
    %139 = arith.addf %134, %138 : vector<128x64xf32>
    %140 = vector.extract_strided_slice %44 {offsets = [160, 0], sizes = [128, 64], strides = [1, 1]} : vector<288x64xf32> to vector<128x64xf32>
    %c8_92 = arith.constant 8 : index
    %c0_93 = arith.constant 0 : index
    %c0_94 = arith.constant 0 : index
    %141 = vector.load %arg8[%c8_92, %c0_93, %c0_94] : memref<9x64x64xf32, #tpu.memory_space<vmem>>, vector<1x64x64xf32>
    %142 = vector.shape_cast %141 : vector<1x64x64xf32> to vector<64x64xf32>
    %cst_95 = arith.constant dense<0.000000e+00> : vector<128x64xf32>
    %143 = tpu.matmul %140, %142, %cst_95 {dimension_numbers = #tpu.dot_dimension_numbers<[1], [0], [0], [1], [0, 0, 1, 1], [], []>} : vector<128x64xf32>, vector<64x64xf32>, vector<128x64xf32> -> vector<128x64xf32>
    %144 = arith.addf %139, %143 : vector<128x64xf32>
    %145 = vector.broadcast %45 : vector<1x64xf32> to vector<128x64xf32>
    %146 = arith.addf %144, %145 : vector<128x64xf32>
    %cst_96 = arith.constant 0.000000e+00 : f32
    %147 = vector.broadcast %cst_96 : f32 to vector<128x64xf32>
    %148 = arith.maximumf %146, %147 : vector<128x64xf32>
    %c0_97 = arith.constant 0 : index
    %c128 = arith.constant 128 : index
    %c0_98 = arith.constant 0 : index
    %149 = vector.load %arg10[%c0_97, %c128, %c0_98] : memref<1x256x64xf32, #tpu.memory_space<vmem>>, vector<1x128x64xf32>
    %150 = vector.shape_cast %149 : vector<1x128x64xf32> to vector<128x64xf32>
    %151 = vector.shape_cast %148 : vector<128x64xf32> to vector<1x128x64xf32>
    tpu.vector_store %arg10[%c0_97, %c128, %c0_98], %151 {strides = array<i32>} : memref<1x256x64xf32, #tpu.memory_space<vmem>>, vector<1x128x64xf32>,
    return
  }
  func.func @transform_0(%arg0: i32) -> (i32, i32, i32) {
    %c0_i32 = arith.constant 0 : i32
    %c0_i32_0 = arith.constant 0 : i32
    %c0_i32_1 = arith.constant 0 : i32
    return %arg0, %c0_i32, %c0_i32_0 : i32, i32, i32
  }
  func.func @transform_1(%arg0: i32) -> (i32, i32, i32) {
    %c0_i32 = arith.constant 0 : i32
    %c0_i32_0 = arith.constant 0 : i32
    %c0_i32_1 = arith.constant 0 : i32
    return %arg0, %c0_i32, %c0_i32_0 : i32, i32, i32
  }
  func.func @transform_2(%arg0: i32) -> (i32, i32, i32) {
    %c0_i32 = arith.constant 0 : i32
    %c0_i32_0 = arith.constant 0 : i32
    %c0_i32_1 = arith.constant 0 : i32
    return %arg0, %c0_i32, %c0_i32_0 : i32, i32, i32
  }
  func.func @transform_3(%arg0: i32) -> (i32, i32) {
    %c0_i32 = arith.constant 0 : i32
    %c0_i32_0 = arith.constant 0 : i32
    %c0_i32_1 = arith.constant 0 : i32
    return %c0_i32, %c0_i32_0 : i32, i32
  }
  func.func @transform_4(%arg0: i32) -> (i32, i32) {
    %c0_i32 = arith.constant 0 : i32
    %c0_i32_0 = arith.constant 0 : i32
    %c0_i32_1 = arith.constant 0 : i32
    return %c0_i32, %c0_i32_0 : i32, i32
  }
  func.func @transform_5(%arg0: i32) -> (i32, i32) {
    %c0_i32 = arith.constant 0 : i32
    %c0_i32_0 = arith.constant 0 : i32
    %c0_i32_1 = arith.constant 0 : i32
    return %c0_i32, %c0_i32_0 : i32, i32
  }
  func.func @transform_6(%arg0: i32) -> (i32, i32) {
    %c0_i32 = arith.constant 0 : i32
    %c0_i32_0 = arith.constant 0 : i32
    %c0_i32_1 = arith.constant 0 : i32
    return %c0_i32, %c0_i32_0 : i32, i32
  }
  func.func @transform_7(%arg0: i32) -> (i32, i32, i32) {
    %c0_i32 = arith.constant 0 : i32
    %c0_i32_0 = arith.constant 0 : i32
    %c0_i32_1 = arith.constant 0 : i32
    %c0_i32_2 = arith.constant 0 : i32
    return %c0_i32, %c0_i32_0, %c0_i32_1 : i32, i32, i32
  }
  func.func @transform_8(%arg0: i32) -> (i32, i32) {
    %c0_i32 = arith.constant 0 : i32
    %c0_i32_0 = arith.constant 0 : i32
    %c0_i32_1 = arith.constant 0 : i32
    return %c0_i32, %c0_i32_0 : i32, i32
  }
  func.func @transform_9(%arg0: i32) -> (i32, i32, i32) {
    %c0_i32 = arith.constant 0 : i32
    %c0_i32_0 = arith.constant 0 : i32
    %c0_i32_1 = arith.constant 0 : i32
    return %arg0, %c0_i32, %c0_i32_0 : i32, i32, i32
  }
}

</mosaic_0001>

<llo_original>
// kernel: asym_bi_cha_fuse.1
$region0: #{asym_bi_cha_fuse.1}
  #allocation0 [shape = 'u32[]', space=smem, size = 0x4, offset = 0x4, fixed_abs, tag = 'smem constant byte address 0x4 - core index']
  #allocation1 [shape = 'u32[144,128]{1,0:T(1,128)}', space=vmem, size = 0x12000, scoped, tag = 'internal scratch']
  %s0 = inlined_call_operand.vmem [shape: f32[2,1,64], index: 0, kind: input, shape index: {}]
  %s1 = inlined_call_operand.vmem [shape: f32[2,256,64], index: 1, kind: input, shape index: {}]
  %s2 = inlined_call_operand.hbm [shape: f32[2,256,64], index: 2, kind: input, shape index: {}]
  %s3 = inlined_call_operand.vmem [shape: f32[64,128], index: 3, kind: input, shape index: {}]
  %s4 = inlined_call_operand.vmem [shape: f32[1,128], index: 4, kind: input, shape index: {}]
  %s5 = inlined_call_operand.vmem [shape: f32[128,64], index: 5, kind: input, shape index: {}]
  %s6 = inlined_call_operand.vmem [shape: f32[1,64], index: 6, kind: input, shape index: {}]
  %s7 = inlined_call_operand.vmem [shape: f32[9,64,64], index: 7, kind: input, shape index: {}]
  %s8 = inlined_call_operand.vmem [shape: f32[1,64], index: 8, kind: input, shape index: {}]
  %s9 = inlined_call_operand.hbm [shape: f32[2,256,64], index: 9, kind: output, shape index: {}]
  %s10 = sld [smem:[#allocation0]]
  $region73: #{asym_bi_cha_fuse.1} parent=0
    _
  %s12 = ssub.s32 1, %s10
  %s13 = scalar_select 0, %s12, %s10
  $region1: #{asym_bi_cha_fuse.1} parent=0
    #allocation2 [shape = 'u8[262144]{0}', space=vmem, size = 0x40000, scoped, tag = 'input window, operand 2']
    #allocation3 [shape = 's32[2]{0}', space=sflag, size = 0x8, scoped, tag = 'scoped memory for asym_bi_cha_fuse.1']
    #allocation4 [shape = 's32[2]{0}', space=sflag, size = 0x8, scoped, tag = 'scoped memory for asym_bi_cha_fuse.1']
    #allocation5 [shape = 'u8[262144]{0}', space=vmem, size = 0x40000, scoped, tag = 'output window, operand 0']
    %14 = vsyncpa [#allocation3], 0
    %s15 = scalar_lea.sflag [#allocation3], 1
    %16 = vsyncpa %s15, 0
    %17 = vsyncpa [#allocation4], 0
    %s18 = scalar_lea.sflag [#allocation4], 1
    %19 = vsyncpa %s18, 0
    loop: start=0, step=1, limit=4
    $region2: #{asym_bi_cha_fuse.1} parent=1 // loop_pre_header
      _
    $region3: #{asym_bi_cha_fuse.1} parent=1 // loop_header
      %s21 = sphi 0, %s25
      %p22 = scmp.ge.s32.totalorder %s21, 4
      %s31 = sphi 0, %s33
      %s34 = sphi 0, %s31
      %s35 = sphi 0, %s34
      %s51 = sphi 0, %s35
      %s57 = sphi 0, %s59
      %s60 = sphi 0, %s57
      %s61 = sphi 0, %s60
      %s77 = sphi 0, %s61
      %s83 = sphi 0, %s85
      %s86 = sphi 0, %s83
      %s87 = sphi 0, %s86
      %s103 = sphi 0, %s87
      %s107 = sphi 0, %s107
      %s109 = sphi 0, %s107
      %s110 = sphi 0, %s109
      %s124 = sphi 0, %s110
      %s128 = sphi 0, %s128
      %s130 = sphi 0, %s128
      %s131 = sphi 0, %s130
      %s145 = sphi 0, %s131
      %s149 = sphi 0, %s149
      %s151 = sphi 0, %s149
      %s152 = sphi 0, %s151
      %s166 = sphi 0, %s152
      %s170 = sphi 0, %s170
      %s172 = sphi 0, %s170
      %s173 = sphi 0, %s172
      %s187 = sphi 0, %s173
      %s191 = sphi 0, %s191
      %s193 = sphi 0, %s191
      %s194 = sphi 0, %s193
      %s208 = sphi 0, %s194
      %s212 = sphi 0, %s212
      %s214 = sphi 0, %s212
      %s215 = sphi 0, %s214
      %s229 = sphi 0, %s215
      %s235 = sphi 0, %s237
      %s238 = sphi 0, %s235
      %s239 = sphi 0, %s238
      %s255 = sphi 0, %s239
    $region4: #{asym_bi_cha_fuse.1} parent=1 // loop_header_branch
      %24 = sbr.rel (%p22) target = $region8
    $region5: #{asym_bi_cha_fuse.1} parent=1 // loop_body
      %s26 = ssub.s32 %s21, 1
      %s27 = ssub.s32 %s21, 2
      %s28 = sadd.s32 %s21, 1
      %s29 = ssub.s32 %s21, %s28
      %p30 = scmp.eq.s32.totalorder %s29, 0
      %s32 = sadd.s32 %s31, 1
      %s33 = scalar_select %p30, %s31, %s32
      %p36 = pneg %p30
      %p37 = scmp.eq.s32.totalorder %s21, 1
      %p38 = por %p36, %p37
      %p39 = scmp.ne.s32.totalorder %s31, %s34
      %p40 = scmp.eq.s32.totalorder %s21, 0
      %p41 = por %p39, %p40
      %p42 = scmp.ne.s32.totalorder %s31, %s34
      %p43 = scmp.eq.s32.totalorder %s26, 1
      %p44 = por %p42, %p43
      %p45 = scmp.ne.s32.totalorder %s34, %s35
      %p46 = scmp.eq.s32.totalorder %s26, 0
      %p47 = por %p45, %p46
      %p48 = scmp.ne.s32.totalorder %s34, %s35
      %p49 = scmp.eq.s32.totalorder %s27, 1
      %p50 = por %p48, %p49
      %p52 = scmp.ne.s32.totalorder %s35, %s51
      %p53 = scmp.eq.s32.totalorder %s27, 0
      %p54 = por %p52, %p53
      %s55 = ssub.s32 %s21, %s28
      %p56 = scmp.eq.s32.totalorder %s55, 0
      %s58 = sadd.s32 %s57, 1
      %s59 = scalar_select %p56, %s57, %s58
      %p62 = pneg %p56
      %p63 = scmp.eq.s32.totalorder %s21, 1
      %p64 = por %p62, %p63
      %p65 = scmp.ne.s32.totalorder %s57, %s60
      %p66 = scmp.eq.s32.totalorder %s21, 0
      %p67 = por %p65, %p66
      %p68 = scmp.ne.s32.totalorder %s57, %s60
      %p69 = scmp.eq.s32.totalorder %s26, 1
      %p70 = por %p68, %p69
      %p71 = scmp.ne.s32.totalorder %s60, %s61
      %p72 = scmp.eq.s32.totalorder %s26, 0
      %p73 = por %p71, %p72
      %p74 = scmp.ne.s32.totalorder %s60, %s61
      %p75 = scmp.eq.s32.totalorder %s27, 1
      %p76 = por %p74, %p75
      %p78 = scmp.ne.s32.totalorder %s61, %s77
      %p79 = scmp.eq.s32.totalorder %s27, 0
      %p80 = por %p78, %p79
      %s81 = ssub.s32 %s21, %s28
      %p82 = scmp.eq.s32.totalorder %s81, 0
      %s84 = sadd.s32 %s83, 1
      %s85 = scalar_select %p82, %s83, %s84
      %p88 = pneg %p82
      %p89 = scmp.eq.s32.totalorder %s21, 1
      %p90 = por %p88, %p89
      %p91 = scmp.ne.s32.totalorder %s83, %s86
      %p92 = scmp.eq.s32.totalorder %s21, 0
      %p93 = por %p91, %p92
      %p94 = scmp.ne.s32.totalorder %s83, %s86
      %p95 = scmp.eq.s32.totalorder %s26, 1
      %p96 = por %p94, %p95
      %p97 = scmp.ne.s32.totalorder %s86, %s87
      %p98 = scmp.eq.s32.totalorder %s26, 0
      %p99 = por %p97, %p98
      %p100 = scmp.ne.s32.totalorder %s86, %s87
      %p101 = scmp.eq.s32.totalorder %s27, 1
      %p102 = por %p100, %p101
      %p104 = scmp.ne.s32.totalorder %s87, %s103
      %p105 = scmp.eq.s32.totalorder %s27, 0
      %p106 = por %p104, %p105
      %s108 = sadd.s32 %s107, 1
      %p111 = scmp.eq.s32.totalorder %s21, 1
      %p112 = scmp.ne.s32.totalorder %s107, %s109
      %p113 = scmp.eq.s32.totalorder %s21, 0
      %p114 = por %p112, %p113
      %p115 = scmp.ne.s32.totalorder %s107, %s109
      %p116 = scmp.eq.s32.totalorder %s26, 1
      %p117 = por %p115, %p116
      %p118 = scmp.ne.s32.totalorder %s109, %s110
      %p119 = scmp.eq.s32.totalorder %s26, 0
      %p120 = por %p118, %p119
      %p121 = scmp.ne.s32.totalorder %s109, %s110
      %p122 = scmp.eq.s32.totalorder %s27, 1
      %p123 = por %p121, %p122
      %p125 = scmp.ne.s32.totalorder %s110, %s124
      %p126 = scmp.eq.s32.totalorder %s27, 0
      %p127 = por %p125, %p126
      %s129 = sadd.s32 %s128, 1
      %p132 = scmp.eq.s32.totalorder %s21, 1
      %p133 = scmp.ne.s32.totalorder %s128, %s130
      %p134 = scmp.eq.s32.totalorder %s21, 0
      %p135 = por %p133, %p134
      %p136 = scmp.ne.s32.totalorder %s128, %s130
      %p137 = scmp.eq.s32.totalorder %s26, 1
      %p138 = por %p136, %p137
      %p139 = scmp.ne.s32.totalorder %s130, %s131
      %p140 = scmp.eq.s32.totalorder %s26, 0
      %p141 = por %p139, %p140
      %p142 = scmp.ne.s32.totalorder %s130, %s131
      %p143 = scmp.eq.s32.totalorder %s27, 1
      %p144 = por %p142, %p143
      %p146 = scmp.ne.s32.totalorder %s131, %s145
      %p147 = scmp.eq.s32.totalorder %s27, 0
      %p148 = por %p146, %p147
      %s150 = sadd.s32 %s149, 1
      %p153 = scmp.eq.s32.totalorder %s21, 1
      %p154 = scmp.ne.s32.totalorder %s149, %s151
      %p155 = scmp.eq.s32.totalorder %s21, 0
      %p156 = por %p154, %p155
      %p157 = scmp.ne.s32.totalorder %s149, %s151
      %p158 = scmp.eq.s32.totalorder %s26, 1
      %p159 = por %p157, %p158
      %p160 = scmp.ne.s32.totalorder %s151, %s152
      %p161 = scmp.eq.s32.totalorder %s26, 0
      %p162 = por %p160, %p161
      %p163 = scmp.ne.s32.totalorder %s151, %s152
      %p164 = scmp.eq.s32.totalorder %s27, 1
      %p165 = por %p163, %p164
      %p167 = scmp.ne.s32.totalorder %s152, %s166
      %p168 = scmp.eq.s32.totalorder %s27, 0
      %p169 = por %p167, %p168
      %s171 = sadd.s32 %s170, 1
      %p174 = scmp.eq.s32.totalorder %s21, 1
      %p175 = scmp.ne.s32.totalorder %s170, %s172
      %p176 = scmp.eq.s32.totalorder %s21, 0
      %p177 = por %p175, %p176
      %p178 = scmp.ne.s32.totalorder %s170, %s172
      %p179 = scmp.eq.s32.totalorder %s26, 1
      %p180 = por %p178, %p179
      %p181 = scmp.ne.s32.totalorder %s172, %s173
      %p182 = scmp.eq.s32.totalorder %s26, 0
      %p183 = por %p181, %p182
      %p184 = scmp.ne.s32.totalorder %s172, %s173
      %p185 = scmp.eq.s32.totalorder %s27, 1
      %p186 = por %p184, %p185
      %p188 = scmp.ne.s32.totalorder %s173, %s187
      %p189 = scmp.eq.s32.totalorder %s27, 0
      %p190 = por %p188, %p189
      %s192 = sadd.s32 %s191, 1
      %p195 = scmp.eq.s32.totalorder %s21, 1
      %p196 = scmp.ne.s32.totalorder %s191, %s193
      %p197 = scmp.eq.s32.totalorder %s21, 0
      %p198 = por %p196, %p197
      %p199 = scmp.ne.s32.totalorder %s191, %s193
      %p200 = scmp.eq.s32.totalorder %s26, 1
      %p201 = por %p199, %p200
      %p202 = scmp.ne.s32.totalorder %s193, %s194
      %p203 = scmp.eq.s32.totalorder %s26, 0
      %p204 = por %p202, %p203
      %p205 = scmp.ne.s32.totalorder %s193, %s194
      %p206 = scmp.eq.s32.totalorder %s27, 1
      %p207 = por %p205, %p206
      %p209 = scmp.ne.s32.totalorder %s194, %s208
      %p210 = scmp.eq.s32.totalorder %s27, 0
      %p211 = por %p209, %p210
      %s213 = sadd.s32 %s212, 1
      %p216 = scmp.eq.s32.totalorder %s21, 1
      %p217 = scmp.ne.s32.totalorder %s212, %s214
      %p218 = scmp.eq.s32.totalorder %s21, 0
      %p219 = por %p217, %p218
      %p220 = scmp.ne.s32.totalorder %s212, %s214
      %p221 = scmp.eq.s32.totalorder %s26, 1
      %p222 = por %p220, %p221
      %p223 = scmp.ne.s32.totalorder %s214, %s215
      %p224 = scmp.eq.s32.totalorder %s26, 0
      %p225 = por %p223, %p224
      %p226 = scmp.ne.s32.totalorder %s214, %s215
      %p227 = scmp.eq.s32.totalorder %s27, 1
      %p228 = por %p226, %p227
      %p230 = scmp.ne.s32.totalorder %s215, %s229
      %p231 = scmp.eq.s32.totalorder %s27, 0
      %p232 = por %p230, %p231
      %s233 = ssub.s32 %s21, %s28
      %p234 = scmp.eq.s32.totalorder %s233, 0
      %s236 = sadd.s32 %s235, 1
      %s237 = scalar_select %p234, %s235, %s236
      %p240 = pneg %p234
      %p241 = scmp.eq.s32.totalorder %s21, 1
      %p242 = por %p240, %p241
      %p243 = scmp.ne.s32.totalorder %s235, %s238
      %p244 = scmp.eq.s32.totalorder %s21, 0
      %p245 = por %p243, %p244
      %p246 = scmp.ne.s32.totalorder %s235, %s238
      %p247 = scmp.eq.s32.totalorder %s26, 1
      %p248 = por %p246, %p247
      %p249 = scmp.ne.s32.totalorder %s238, %s239
      %p250 = scmp.eq.s32.totalorder %s26, 0
      %p251 = por %p249, %p250
      %p252 = scmp.ne.s32.totalorder %s238, %s239
      %p253 = scmp.eq.s32.totalorder %s27, 1
      %p254 = por %p252, %p253
      %p256 = scmp.ne.s32.totalorder %s239, %s255
      %p257 = scmp.eq.s32.totalorder %s27, 0
      %p258 = por %p256, %p257
      %p259 = scmp.le.s32.totalorder 1, %s21
      %p260 = scmp.lt.s32.totalorder %s21, 3
      %p261 = pnand %p259, %p260
      %p262 = pneg %p261
      // Predicated region
      $region9: #{asym_bi_cha_fuse.1} parent=5 // pred_check
        _
      $region10: #{asym_bi_cha_fuse.1} parent=5 // pred_check_branch
        %264 = sbr.rel (%p261) target = $region12
      $region11: #{asym_bi_cha_fuse.1} parent=5 // pred_region
        %s265 = ssub.s32 %s21, 1
        // Predicated region
        $region13: #{asym_bi_cha_fuse.1} parent=11 // pred_check
          %p266 = pneg %p120
        $region14: #{asym_bi_cha_fuse.1} parent=11 // pred_check_branch
          %268 = sbr.rel (%p266) target = $region16
        $region15: #{asym_bi_cha_fuse.1} parent=11 // pred_region
          _
        $region16: #{asym_bi_cha_fuse.1} parent=11 // pred_fallthru
          _
        // Predicated region
        $region17: #{asym_bi_cha_fuse.1} parent=11 // pred_check
          %p269 = pneg %p141
        $region18: #{asym_bi_cha_fuse.1} parent=11 // pred_check_branch
          %271 = sbr.rel (%p269) target = $region20
        $region19: #{asym_bi_cha_fuse.1} parent=11 // pred_region
          _
        $region20: #{asym_bi_cha_fuse.1} parent=11 // pred_fallthru
          _
        // Predicated region
        $region21: #{asym_bi_cha_fuse.1} parent=11 // pred_check
          %p272 = pneg %p162
        $region22: #{asym_bi_cha_fuse.1} parent=11 // pred_check_branch
          %274 = sbr.rel (%p272) target = $region24
        $region23: #{asym_bi_cha_fuse.1} parent=11 // pred_region
          _
        $region24: #{asym_bi_cha_fuse.1} parent=11 // pred_fallthru
          _
        // Predicated region
        $region25: #{asym_bi_cha_fuse.1} parent=11 // pred_check
          %p275 = pneg %p183
        $region26: #{asym_bi_cha_fuse.1} parent=11 // pred_check_branch
          %277 = sbr.rel (%p275) target = $region28
        $region27: #{asym_bi_cha_fuse.1} parent=11 // pred_region
          _
        $region28: #{asym_bi_cha_fuse.1} parent=11 // pred_fallthru
          _
        // Predicated region
        $region29: #{asym_bi_cha_fuse.1} parent=11 // pred_check
          %p278 = pneg %p204
        $region30: #{asym_bi_cha_fuse.1} parent=11 // pred_check_branch
          %280 = sbr.rel (%p278) target = $region32
        $region31: #{asym_bi_cha_fuse.1} parent=11 // pred_region
          _
        $region32: #{asym_bi_cha_fuse.1} parent=11 // pred_fallthru
          _
        // Predicated region
        $region33: #{asym_bi_cha_fuse.1} parent=11 // pred_check
          %p281 = pneg %p225
        $region34: #{asym_bi_cha_fuse.1} parent=11 // pred_check_branch
          %283 = sbr.rel (%p281) target = $region36
        $region35: #{asym_bi_cha_fuse.1} parent=11 // pred_region
          _
        $region36: #{asym_bi_cha_fuse.1} parent=11 // pred_fallthru
          _
      $region12: #{asym_bi_cha_fuse.1} parent=5 // pred_fallthru
        _
      %p284 = scmp.lt.s32.totalorder %s21, 2
      // Predicated region
      $region37: #{asym_bi_cha_fuse.1} parent=5 // pred_check
        %p285 = pneg %p284
      $region38: #{asym_bi_cha_fuse.1} parent=5 // pred_check_branch
        %287 = sbr.rel (%p285) target = $region40
      $region39: #{asym_bi_cha_fuse.1} parent=5 // pred_region
        // Predicated region
        $region41: #{asym_bi_cha_fuse.1} parent=39 // pred_check
          %p288 = pneg %p41
        $region42: #{asym_bi_cha_fuse.1} parent=39 // pred_check_branch
          %290 = sbr.rel (%p288) target = $region44
        $region43: #{asym_bi_cha_fuse.1} parent=39 // pred_region
          %p291 = scmp.lt.s32.totalorder %s21, 1
          %s292 = scalar_select %p291, %s21, 1
          %s293 = scalar_lea.vmem %s0, %s292
        $region44: #{asym_bi_cha_fuse.1} parent=39 // pred_fallthru
          _
        // Predicated region
        $region45: #{asym_bi_cha_fuse.1} parent=39 // pred_check
          %p294 = pneg %p67
        $region46: #{asym_bi_cha_fuse.1} parent=39 // pred_check_branch
          %296 = sbr.rel (%p294) target = $region48
        $region47: #{asym_bi_cha_fuse.1} parent=39 // pred_region
          %p297 = scmp.lt.s32.totalorder %s21, 1
          %s298 = scalar_select %p297, %s21, 1
          %s299 = smul.addr %s298, 32
          %s300 = smul.addr %s299, 8
          %s301 = scalar_lea.vmem %s1, %s300
        $region48: #{asym_bi_cha_fuse.1} parent=39 // pred_fallthru
          _
        // Predicated region
        $region49: #{asym_bi_cha_fuse.1} parent=39 // pred_check
          %p302 = pneg %p93
        $region50: #{asym_bi_cha_fuse.1} parent=39 // pred_check_branch
          %304 = sbr.rel (%p302) target = $region52
        $region51: #{asym_bi_cha_fuse.1} parent=39 // pred_region
          %s305 = sand.u32 %s83, 1
          %s306 = scalar_lea.sflag [#allocation3], %s305
          %s307 = sand.u32 %s83, 1
          %s308 = smul.addr %s307, 256
          %s309 = scalar_lea.vmem [#allocation2], %s308
          %s311 = ssub.s32 4096, 4096
          %312 = vsyncadd %s306, %s311
          %s313 = smul.addr %s21, 32
          %s314 = smul.addr %s313, 128
          %s315 = scalar_lea.hbm %s2, %s314
          %s316 = sshll.u32 %s309, 4
          %s317 = int_to_ptr.vmem [resolvable:$true] %s316
          %322 = dma.hbm_to_vmem [thread:$0]  %s315, 4096, %s317, %s306, 128, 128, 8
        $region52: #{asym_bi_cha_fuse.1} parent=39 // pred_fallthru
          _
      $region40: #{asym_bi_cha_fuse.1} parent=5 // pred_fallthru
        _
      %p323 = scmp.le.s32.totalorder 1, %s21
      %p324 = scmp.lt.s32.totalorder %s21, 3
      %p325 = pnand %p323, %p324
      %p326 = pneg %p325
      // Predicated region
      $region53: #{asym_bi_cha_fuse.1} parent=5 // pred_check
        _
      $region54: #{asym_bi_cha_fuse.1} parent=5 // pred_check_branch
        %328 = sbr.rel (%p325) target = $region56
      $region55: #{asym_bi_cha_fuse.1} parent=5 // pred_region
        %s329 = ssub.s32 %s21, 1
        %s330 = sand.u32 %s86, 1
        %s331 = scalar_lea.sflag [#allocation3], %s330
        %s332 = sand.u32 %s86, 1
        %s333 = smul.addr %s332, 256
        %s334 = scalar_lea.vmem [#allocation2], %s333
        // Predicated region
        $region57: #{asym_bi_cha_fuse.1} parent=55 // pred_check
          %p335 = pneg %p99
        $region58: #{asym_bi_cha_fuse.1} parent=55 // pred_check_branch
          %337 = sbr.rel (%p335) target = $region60
        $region59: #{asym_bi_cha_fuse.1} parent=55 // pred_region
          %338 = dma.done %s331, 4096
        $region60: #{asym_bi_cha_fuse.1} parent=55 // pred_fallthru
          _
        %p339 = scmp.lt.s32.totalorder %s26, 1
        %s340 = scalar_select %p339, %s26, 1
        %s341 = scalar_lea.vmem %s0, %s340
        %p342 = pneg %p47
        %p343 = pneg %p44
        %p344 = scmp.lt.s32.totalorder %s26, 1
        %s345 = scalar_select %p344, %s26, 1
        %s346 = smul.addr %s345, 32
        %s347 = smul.addr %s346, 8
        %s348 = scalar_lea.vmem %s1, %s347
        %p349 = pneg %p73
        %p350 = pneg %p70
        %s351 = sand.u32 %s86, 1
        %s352 = scalar_lea.sflag [#allocation3], %s351
        %s353 = sand.u32 %s86, 1
        %s354 = smul.addr %s353, 256
        %s355 = scalar_lea.vmem [#allocation2], %s354
        %p356 = pneg %p99
        %p357 = pneg %p96
        %p358 = pneg %p120
        %p359 = pneg %p117
        %p360 = pneg %p141
        %p361 = pneg %p138
        %p362 = pneg %p162
        %p363 = pneg %p159
        %p364 = pneg %p183
        %p365 = pneg %p180
        %p366 = pneg %p204
        %p367 = pneg %p201
        %p368 = pneg %p225
        %p369 = pneg %p222
        %p370 = pneg %p251
        %p371 = pneg %p248
        %s372 = sand.u32 %s238, 1
        %s373 = scalar_lea.sflag [#allocation4], %s372
        %s374 = sand.u32 %s238, 1
        %s375 = smul.addr %s374, 256
        %s376 = scalar_lea.vmem [#allocation5], %s375
        %p377 = scmp.lt.s32.totalorder %s26, 1
        %s378 = scalar_select %p377, %s26, 1
        %s379 = scalar_lea.vmem %s0, %s378
        %p380 = scmp.lt.s32.totalorder %s26, 1
        %s381 = scalar_select %p380, %s26, 1
        %s382 = smul.addr %s381, 32
        %s383 = smul.addr %s382, 8
        %s384 = scalar_lea.vmem %s1, %s383
        %v385 = vld [vmem:[%s384] sm:$0xff]
        %v386 = vld [vmem:[%s384 + $0x8] sm:$0xff]
        %v387 = vld [vmem:[%s384 + $0x10] sm:$0xff]
        %v388 = vld [vmem:[%s384 + $0x18] sm:$0xff]
        %v389 = vld [vmem:[%s384 + $0x20] sm:$0xff]
        %v390 = vld [vmem:[%s384 + $0x28] sm:$0xff]
        %v391 = vld [vmem:[%s384 + $0x30] sm:$0xff]
        %v392 = vld [vmem:[%s384 + $0x38] sm:$0xff]
        %v393 = vld [vmem:[%s384 + $0x40] sm:$0xff]
        %v394 = vld [vmem:[%s384 + $0x48] sm:$0xff]
        %v395 = vld [vmem:[%s384 + $0x50] sm:$0xff]
        %v396 = vld [vmem:[%s384 + $0x58] sm:$0xff]
        %v397 = vld [vmem:[%s384 + $0x60] sm:$0xff]
        %v398 = vld [vmem:[%s384 + $0x68] sm:$0xff]
        %v399 = vld [vmem:[%s384 + $0x70] sm:$0xff]
        %v400 = vld [vmem:[%s384 + $0x78] sm:$0xff]
        %v401 = vld [vmem:[%s384 + $0x80] sm:$0xff]
        %v402 = vld [vmem:[%s384 + $0x88] sm:$0xff]
        %v403 = vld [vmem:[%s384 + $0x90] sm:$0xff]
        %v404 = vld [vmem:[%s384 + $0x98] sm:$0xff]
        %v405 = vld [vmem:[%s384 + $0xa0] sm:$0xff]
        %v406 = vld [vmem:[%s384 + $0xa8] sm:$0xff]
        %v407 = vld [vmem:[%s384 + $0xb0] sm:$0xff]
        %v408 = vld [vmem:[%s384 + $0xb8] sm:$0xff]
        %v409 = vld [vmem:[%s384 + $0xc0] sm:$0xff]
        %v410 = vld [vmem:[%s384 + $0xc8] sm:$0xff]
        %v411 = vld [vmem:[%s384 + $0xd0] sm:$0xff]
        %v412 = vld [vmem:[%s384 + $0xd8] sm:$0xff]
        %v413 = vld [vmem:[%s384 + $0xe0] sm:$0xff]
        %v414 = vld [vmem:[%s384 + $0xe8] sm:$0xff]
        %v415 = vld [vmem:[%s384 + $0xf0] sm:$0xff]
        %v416 = vld [vmem:[%s384 + $0xf8] sm:$0xff]
        %v417 = vld [vmem:[%s334] sm:$0xff]
        %v418 = vld [vmem:[%s334 + $0x8] sm:$0xff]
        %v419 = vld [vmem:[%s334 + $0x10] sm:$0xff]
        %v420 = vld [vmem:[%s334 + $0x18] sm:$0xff]
        %v421 = vld [vmem:[%s334 + $0x20] sm:$0xff]
        %v422 = vld [vmem:[%s334 + $0x28] sm:$0xff]
        %v423 = vld [vmem:[%s334 + $0x30] sm:$0xff]
        %v424 = vld [vmem:[%s334 + $0x38] sm:$0xff]
        %v425 = vld [vmem:[%s334 + $0x40] sm:$0xff]
        %v426 = vld [vmem:[%s334 + $0x48] sm:$0xff]
        %v427 = vld [vmem:[%s334 + $0x50] sm:$0xff]
        %v428 = vld [vmem:[%s334 + $0x58] sm:$0xff]
        %v429 = vld [vmem:[%s334 + $0x60] sm:$0xff]
        %v430 = vld [vmem:[%s334 + $0x68] sm:$0xff]
        %v431 = vld [vmem:[%s334 + $0x70] sm:$0xff]
        %v432 = vld [vmem:[%s334 + $0x78] sm:$0xff]
        %v433 = vld [vmem:[%s334 + $0x80] sm:$0xff]
        %v434 = vld [vmem:[%s334 + $0x88] sm:$0xff]
        %v435 = vld [vmem:[%s334 + $0x90] sm:$0xff]
        %v436 = vld [vmem:[%s334 + $0x98] sm:$0xff]
        %v437 = vld [vmem:[%s334 + $0xa0] sm:$0xff]
        %v438 = vld [vmem:[%s334 + $0xa8] sm:$0xff]
        %v439 = vld [vmem:[%s334 + $0xb0] sm:$0xff]
        %v440 = vld [vmem:[%s334 + $0xb8] sm:$0xff]
        %v441 = vld [vmem:[%s334 + $0xc0] sm:$0xff]
        %v442 = vld [vmem:[%s334 + $0xc8] sm:$0xff]
        %v443 = vld [vmem:[%s334 + $0xd0] sm:$0xff]
        %v444 = vld [vmem:[%s334 + $0xd8] sm:$0xff]
        %v445 = vld [vmem:[%s334 + $0xe0] sm:$0xff]
        %v446 = vld [vmem:[%s334 + $0xe8] sm:$0xff]
        %v447 = vld [vmem:[%s334 + $0xf0] sm:$0xff]
        %v448 = vld [vmem:[%s334 + $0xf8] sm:$0xff]
        %v449 = vld [vmem:[%s379] sm:$0x1]
        %v450 = vld [vmem:[%s3] sm:$0xff]
        %v451 = vld [vmem:[%s3 + $0x8] sm:$0xff]
        %v452 = vld [vmem:[%s3 + $0x10] sm:$0xff]
        %v453 = vld [vmem:[%s3 + $0x18] sm:$0xff]
        %v454 = vld [vmem:[%s3 + $0x20] sm:$0xff]
        %v455 = vld [vmem:[%s3 + $0x28] sm:$0xff]
        %v456 = vld [vmem:[%s3 + $0x30] sm:$0xff]
        %v457 = vld [vmem:[%s3 + $0x38] sm:$0xff]
        %v458 = vld [vmem:[%s4] sm:$0x1]
        %v460 = vlaneseq
        %v461 = vshrl.u32 %v460, 7
        %v462 = vsub.s32 0, %v461
        %v463 = vrot.slane %v458, %v462
        %vm465 = vcmask 523264
        %v467 = vsel %vm465, %v417, 0
        %v470 = vsel %vm465, %v418, 0
        %v473 = vsel %vm465, %v419, 0
        %v476 = vsel %vm465, %v420, 0
        %v479 = vsel %vm465, %v421, 0
        %v482 = vsel %vm465, %v422, 0
        %v485 = vsel %vm465, %v423, 0
        %v488 = vsel %vm465, %v424, 0
        %v491 = vsel %vm465, %v425, 0
        %v494 = vsel %vm465, %v426, 0
        %v497 = vsel %vm465, %v427, 0
        %v500 = vsel %vm465, %v428, 0
        %v503 = vsel %vm465, %v429, 0
        %v506 = vsel %vm465, %v430, 0
        %v509 = vsel %vm465, %v431, 0
        %v512 = vsel %vm465, %v432, 0
        %v515 = vsel %vm465, %v433, 0
        %v518 = vsel %vm465, %v434, 0
        %v521 = vsel %vm465, %v435, 0
        %v524 = vsel %vm465, %v436, 0
        %v527 = vsel %vm465, %v437, 0
        %v530 = vsel %vm465, %v438, 0
        %v533 = vsel %vm465, %v439, 0
        %v536 = vsel %vm465, %v440, 0
        %v539 = vsel %vm465, %v441, 0
        %v542 = vsel %vm465, %v442, 0
        %v545 = vsel %vm465, %v443, 0
        %v548 = vsel %vm465, %v444, 0
        %v551 = vsel %vm465, %v445, 0
        %v554 = vsel %vm465, %v446, 0
        %v557 = vsel %vm465, %v447, 0
        %v560 = vsel %vm465, %v448, 0
        %562 = vmatprep.subr.mxu0 0.0
        %563 = vmatpush1.msra.mxu0 %v450
        %564 = vmatprep.subr.mxu0 0.0
        %565 = vmatpush1.msra.mxu0 %v451
        %566 = vmatprep.subr.mxu0 0.0
        %567 = vmatpush1.msra.mxu0 %v452
        %568 = vmatprep.subr.mxu0 0.0
        %569 = vmatpush1.msra.mxu0 %v453
        %570 = vmatprep.subr.mxu0 0.0
        %571 = vmatpush1.msra.mxu0 %v454
        %572 = vmatprep.subr.mxu0 0.0
        %573 = vmatpush1.msra.mxu0 %v455
        %574 = vmatprep.subr.mxu0 0.0
        %575 = vmatpush1.msra.mxu0 %v456
        %576 = vmatprep.subr.mxu0 0.0
        %577 = vmatpush1.msra.mxu0 %v457
        %578 = vmatprep.subr.mxu0 0.0
        %579 = vmatpush1.msra.mxu0 0.0
        %580 = vmatprep.subr.mxu0 0.0
        %581 = vmatpush1.msra.mxu0 0.0
        %582 = vmatprep.subr.mxu0 0.0
        %583 = vmatpush1.msra.mxu0 0.0
        %584 = vmatprep.subr.mxu0 0.0
        %585 = vmatpush1.msra.mxu0 0.0
        %586 = vmatprep.subr.mxu0 0.0
        %587 = vmatpush1.msra.mxu0 0.0
        %588 = vmatprep.subr.mxu0 0.0
        %589 = vmatpush1.msra.mxu0 0.0
        %590 = vmatprep.subr.mxu0 0.0
        %591 = vmatpush1.msra.mxu0 0.0
        %592 = vmatprep.subr.mxu0 0.0
        %593 = vmatpush1.msra.mxu0 0.0
        %594 = vmatprep.subr.mxu0 0.0
        %595 = vmatpush1.msra.mxu0 0.0
        %596 = vmatprep.subr.mxu0 0.0
        %597 = vmatpush1.msra.mxu0 0.0
        %598 = vmatprep.subr.mxu0 0.0
        %599 = vmatpush1.msra.mxu0 0.0
        %600 = vmatprep.subr.mxu0 0.0
        %601 = vmatpush1.msra.mxu0 0.0
        %602 = vmatprep.subr.mxu0 0.0
        %603 = vmatpush1.msra.mxu0 0.0
        %604 = vmatprep.subr.mxu0 0.0
        %605 = vmatpush1.msra.mxu0 0.0
        %606 = vmatprep.subr.mxu0 0.0
        %607 = vmatpush1.msra.mxu0 0.0
        %608 = vmatprep.subr.mxu0 0.0
        %609 = vmatpush1.msra.mxu0 0.0
        %610 = vmatprep.subr.mxu0 0.0
        %611 = vmatpush1.msra.mxu0 0.0
        %612 = vmatprep.subr.mxu0 0.0
        %613 = vmatpush1.msra.mxu0 0.0
        %614 = vmatprep.subr.mxu0 0.0
        %615 = vmatpush1.msra.mxu0 0.0
        %616 = vmatprep.subr.mxu0 0.0
        %617 = vmatpush1.msra.mxu0 0.0
        %618 = vmatprep.subr.mxu0 0.0
        %619 = vmatpush1.msra.mxu0 0.0
        %620 = vmatprep.subr.mxu0 0.0
        %621 = vmatpush1.msra.mxu0 0.0
        %622 = vmatprep.subr.mxu0 0.0
        %623 = vmatpush1.msra.mxu0 0.0
        %624 = vmatprep.subr.mxu0 0.0
        %625 = vmatpush1.msra.mxu0 0.0
        %626 = vmatprep.mubr.f32.mxu0 0.0
        %627 = vmatmul.mubr.f32.gmra.mrb[0].mxu0 %v467
        %v628 = vpop.f32.mrb[0].mxu0
        %v629 = vadd.f32 %v463, %v628
        %v630 = vpop.f32.mrb[0].mxu0
        %631 = vmatprep.mubr.f32.mxu0 0.0
        %632 = vmatmul.mubr.f32.gmra.mrb[0].mxu0 %v470
        %v633 = vpop.f32.mrb[0].mxu0
        %v634 = vadd.f32 %v463, %v633
        %v635 = vpop.f32.mrb[0].mxu0
        %636 = vmatprep.mubr.f32.mxu0 0.0
        %637 = vmatmul.mubr.f32.gmra.mrb[0].mxu0 %v473
        %v638 = vpop.f32.mrb[0].mxu0
        %v639 = vadd.f32 %v463, %v638
        %v640 = vpop.f32.mrb[0].mxu0
        %641 = vmatprep.mubr.f32.mxu0 0.0
        %642 = vmatmul.mubr.f32.gmra.mrb[0].mxu0 %v476
        %v643 = vpop.f32.mrb[0].mxu0
        %v644 = vadd.f32 %v463, %v643
        %v645 = vpop.f32.mrb[0].mxu0
        %646 = vmatprep.mubr.f32.mxu0 0.0
        %647 = vmatmul.mubr.f32.gmra.mrb[0].mxu0 %v479
        %v648 = vpop.f32.mrb[0].mxu0
        %v649 = vadd.f32 %v463, %v648
        %v650 = vpop.f32.mrb[0].mxu0
        %651 = vmatprep.mubr.f32.mxu0 0.0
        %652 = vmatmul.mubr.f32.gmra.mrb[0].mxu0 %v482
        %v653 = vpop.f32.mrb[0].mxu0
        %v654 = vadd.f32 %v463, %v653
        %v655 = vpop.f32.mrb[0].mxu0
        %656 = vmatprep.mubr.f32.mxu0 0.0
        %657 = vmatmul.mubr.f32.gmra.mrb[0].mxu0 %v485
        %v658 = vpop.f32.mrb[0].mxu0
        %v659 = vadd.f32 %v463, %v658
        %v660 = vpop.f32.mrb[0].mxu0
        %661 = vmatprep.mubr.f32.mxu0 0.0
        %662 = vmatmul.mubr.f32.gmra.mrb[0].mxu0 %v488
        %v663 = vpop.f32.mrb[0].mxu0
        %v664 = vadd.f32 %v463, %v663
        %v665 = vpop.f32.mrb[0].mxu0
        %666 = vmatprep.mubr.f32.mxu0 0.0
        %667 = vmatmul.mubr.f32.gmra.mrb[0].mxu0 %v491
        %v668 = vpop.f32.mrb[0].mxu0
        %v669 = vadd.f32 %v463, %v668
        %v670 = vpop.f32.mrb[0].mxu0
        %671 = vmatprep.mubr.f32.mxu0 0.0
        %672 = vmatmul.mubr.f32.gmra.mrb[0].mxu0 %v494
        %v673 = vpop.f32.mrb[0].mxu0
        %v674 = vadd.f32 %v463, %v673
        %v675 = vpop.f32.mrb[0].mxu0
        %676 = vmatprep.mubr.f32.mxu0 0.0
        %677 = vmatmul.mubr.f32.gmra.mrb[0].mxu0 %v497
        %v678 = vpop.f32.mrb[0].mxu0
        %v679 = vadd.f32 %v463, %v678
        %v680 = vpop.f32.mrb[0].mxu0
        %681 = vmatprep.mubr.f32.mxu0 0.0
        %682 = vmatmul.mubr.f32.gmra.mrb[0].mxu0 %v500
        %v683 = vpop.f32.mrb[0].mxu0
        %v684 = vadd.f32 %v463, %v683
        %v685 = vpop.f32.mrb[0].mxu0
        %686 = vmatprep.mubr.f32.mxu0 0.0
        %687 = vmatmul.mubr.f32.gmra.mrb[0].mxu0 %v503
        %v688 = vpop.f32.mrb[0].mxu0
        %v689 = vadd.f32 %v463, %v688
        %v690 = vpop.f32.mrb[0].mxu0
        %691 = vmatprep.mubr.f32.mxu0 0.0
        %692 = vmatmul.mubr.f32.gmra.mrb[0].mxu0 %v506
        %v693 = vpop.f32.mrb[0].mxu0
        %v694 = vadd.f32 %v463, %v693
        %v695 = vpop.f32.mrb[0].mxu0
        %696 = vmatprep.mubr.f32.mxu0 0.0
        %697 = vmatmul.mubr.f32.gmra.mrb[0].mxu0 %v509
        %v698 = vpop.f32.mrb[0].mxu0
        %v699 = vadd.f32 %v463, %v698
        %v700 = vpop.f32.mrb[0].mxu0
        %701 = vmatprep.mubr.f32.mxu0 0.0
        %702 = vmatmul.mubr.f32.gmra.mrb[0].mxu0 %v512
        %v703 = vpop.f32.mrb[0].mxu0
        %v704 = vadd.f32 %v463, %v703
        %v705 = vpop.f32.mrb[0].mxu0
        %706 = vmatprep.mubr.f32.mxu0 0.0
        %707 = vmatmul.mubr.f32.gmra.mrb[0].mxu0 %v515
        %v708 = vpop.f32.mrb[0].mxu0
        %v709 = vadd.f32 %v463, %v708
        %v710 = vpop.f32.mrb[0].mxu0
        %711 = vmatprep.mubr.f32.mxu0 0.0
        %712 = vmatmul.mubr.f32.gmra.mrb[0].mxu0 %v518
        %v713 = vpop.f32.mrb[0].mxu0
        %v714 = vadd.f32 %v463, %v713
        %v715 = vpop.f32.mrb[0].mxu0
        %716 = vmatprep.mubr.f32.mxu0 0.0
        %717 = vmatmul.mubr.f32.gmra.mrb[0].mxu0 %v521
        %v718 = vpop.f32.mrb[0].mxu0
        %v719 = vadd.f32 %v463, %v718
        %v720 = vpop.f32.mrb[0].mxu0
        %721 = vmatprep.mubr.f32.mxu0 0.0
        %722 = vmatmul.mubr.f32.gmra.mrb[0].mxu0 %v524
        %v723 = vpop.f32.mrb[0].mxu0
        %v724 = vadd.f32 %v463, %v723
        %v725 = vpop.f32.mrb[0].mxu0
        %726 = vmatprep.mubr.f32.mxu0 0.0
        %727 = vmatmul.mubr.f32.gmra.mrb[0].mxu0 %v527
        %v728 = vpop.f32.mrb[0].mxu0
        %v729 = vadd.f32 %v463, %v728
        %v730 = vpop.f32.mrb[0].mxu0
        %731 = vmatprep.mubr.f32.mxu0 0.0
        %732 = vmatmul.mubr.f32.gmra.mrb[0].mxu0 %v530
        %v733 = vpop.f32.mrb[0].mxu0
        %v734 = vadd.f32 %v463, %v733
        %v735 = vpop.f32.mrb[0].mxu0
        %736 = vmatprep.mubr.f32.mxu0 0.0
        %737 = vmatmul.mubr.f32.gmra.mrb[0].mxu0 %v533
        %v738 = vpop.f32.mrb[0].mxu0
        %v739 = vadd.f32 %v463, %v738
        %v740 = vpop.f32.mrb[0].mxu0
        %741 = vmatprep.mubr.f32.mxu0 0.0
        %742 = vmatmul.mubr.f32.gmra.mrb[0].mxu0 %v536
        %v743 = vpop.f32.mrb[0].mxu0
        %v744 = vadd.f32 %v463, %v743
        %v745 = vpop.f32.mrb[0].mxu0
        %746 = vmatprep.mubr.f32.mxu0 0.0
        %747 = vmatmul.mubr.f32.gmra.mrb[0].mxu0 %v539
        %v748 = vpop.f32.mrb[0].mxu0
        %v749 = vadd.f32 %v463, %v748
        %v750 = vpop.f32.mrb[0].mxu0
        %751 = vmatprep.mubr.f32.mxu0 0.0
        %752 = vmatmul.mubr.f32.gmra.mrb[0].mxu0 %v542
        %v753 = vpop.f32.mrb[0].mxu0
        %v754 = vadd.f32 %v463, %v753
        %v755 = vpop.f32.mrb[0].mxu0
        %756 = vmatprep.mubr.f32.mxu0 0.0
        %757 = vmatmul.mubr.f32.gmra.mrb[0].mxu0 %v545
        %v758 = vpop.f32.mrb[0].mxu0
        %v759 = vadd.f32 %v463, %v758
        %v760 = vpop.f32.mrb[0].mxu0
        %761 = vmatprep.mubr.f32.mxu0 0.0
        %762 = vmatmul.mubr.f32.gmra.mrb[0].mxu0 %v548
        %v763 = vpop.f32.mrb[0].mxu0
        %v764 = vadd.f32 %v463, %v763
        %v765 = vpop.f32.mrb[0].mxu0
        %766 = vmatprep.mubr.f32.mxu0 0.0
        %767 = vmatmul.mubr.f32.gmra.mrb[0].mxu0 %v551
        %v768 = vpop.f32.mrb[0].mxu0
        %v769 = vadd.f32 %v463, %v768
        %v770 = vpop.f32.mrb[0].mxu0
        %771 = vmatprep.mubr.f32.mxu0 0.0
        %772 = vmatmul.mubr.f32.gmra.mrb[0].mxu0 %v554
        %v773 = vpop.f32.mrb[0].mxu0
        %v774 = vadd.f32 %v463, %v773
        %v775 = vpop.f32.mrb[0].mxu0
        %776 = vmatprep.mubr.f32.mxu0 0.0
        %777 = vmatmul.mubr.f32.gmra.mrb[0].mxu0 %v557
        %v778 = vpop.f32.mrb[0].mxu0
        %v779 = vadd.f32 %v463, %v778
        %v780 = vpop.f32.mrb[0].mxu0
        %781 = vmatprep.mubr.f32.mxu0 0.0
        %782 = vmatmul.mubr.f32.gmra.mrb[0].mxu0 %v560
        %v783 = vpop.f32.mrb[0].mxu0
        %v784 = vadd.f32 %v463, %v783
        %v785 = vpop.f32.mrb[0].mxu0
        %786 = vdwg.mxu0
        %v787 = vmax.f32 %v629, 0.0
        %v788 = vmax.f32 %v634, 0.0
        %v789 = vmax.f32 %v639, 0.0
        %v790 = vmax.f32 %v644, 0.0
        %v791 = vmax.f32 %v649, 0.0
        %v792 = vmax.f32 %v654, 0.0
        %v793 = vmax.f32 %v659, 0.0
        %v794 = vmax.f32 %v664, 0.0
        %v795 = vmax.f32 %v669, 0.0
        %v796 = vmax.f32 %v674, 0.0
        %v797 = vmax.f32 %v679, 0.0
        %v798 = vmax.f32 %v684, 0.0
        %v799 = vmax.f32 %v689, 0.0
        %v800 = vmax.f32 %v694, 0.0
        %v801 = vmax.f32 %v699, 0.0
        %v802 = vmax.f32 %v704, 0.0
        %v803 = vmax.f32 %v709, 0.0
        %v804 = vmax.f32 %v714, 0.0
        %v805 = vmax.f32 %v719, 0.0
        %v806 = vmax.f32 %v724, 0.0
        %v807 = vmax.f32 %v729, 0.0
        %v808 = vmax.f32 %v734, 0.0
        %v809 = vmax.f32 %v739, 0.0
        %v810 = vmax.f32 %v744, 0.0
        %v811 = vmax.f32 %v749, 0.0
        %v812 = vmax.f32 %v754, 0.0
        %v813 = vmax.f32 %v759, 0.0
        %v814 = vmax.f32 %v764, 0.0
        %v815 = vmax.f32 %v769, 0.0
        %v816 = vmax.f32 %v774, 0.0
        %v817 = vmax.f32 %v779, 0.0
        %v818 = vmax.f32 %v784, 0.0
        %v819 = vld [vmem:[%s5] sm:$0xff]
        %v820 = vld [vmem:[%s5 + $0x8] sm:$0xff]
        %v821 = vld [vmem:[%s5 + $0x10] sm:$0xff]
        %v822 = vld [vmem:[%s5 + $0x18] sm:$0xff]
        %v823 = vld [vmem:[%s5 + $0x20] sm:$0xff]
        %v824 = vld [vmem:[%s5 + $0x28] sm:$0xff]
        %v825 = vld [vmem:[%s5 + $0x30] sm:$0xff]
        %v826 = vld [vmem:[%s5 + $0x38] sm:$0xff]
        %v827 = vld [vmem:[%s5 + $0x40] sm:$0xff]
        %v828 = vld [vmem:[%s5 + $0x48] sm:$0xff]
        %v829 = vld [vmem:[%s5 + $0x50] sm:$0xff]
        %v830 = vld [vmem:[%s5 + $0x58] sm:$0xff]
        %v831 = vld [vmem:[%s5 + $0x60] sm:$0xff]
        %v832 = vld [vmem:[%s5 + $0x68] sm:$0xff]
        %v833 = vld [vmem:[%s5 + $0x70] sm:$0xff]
        %v834 = vld [vmem:[%s5 + $0x78] sm:$0xff]
        %v835 = vld [vmem:[%s6] sm:$0x1]
        %v837 = vlaneseq
        %v838 = vshrl.u32 %v837, 7
        %v839 = vsub.s32 0, %v838
        %v840 = vrot.slane %v835, %v839
        %842 = vmatprep.subr.mxu0 0.0
        %843 = vmatpush1.msra.mxu0 %v819
        %844 = vmatprep.subr.mxu0 0.0
        %845 = vmatpush1.msra.mxu0 %v820
        %846 = vmatprep.subr.mxu0 0.0
        %847 = vmatpush1.msra.mxu0 %v821
        %848 = vmatprep.subr.mxu0 0.0
        %849 = vmatpush1.msra.mxu0 %v822
        %850 = vmatprep.subr.mxu0 0.0
        %851 = vmatpush1.msra.mxu0 %v823
        %852 = vmatprep.subr.mxu0 0.0
        %853 = vmatpush1.msra.mxu0 %v824
        %854 = vmatprep.subr.mxu0 0.0
        %855 = vmatpush1.msra.mxu0 %v825
        %856 = vmatprep.subr.mxu0 0.0
        %857 = vmatpush1.msra.mxu0 %v826
        %858 = vmatprep.subr.mxu0 0.0
        %859 = vmatpush1.msra.mxu0 %v827
        %860 = vmatprep.subr.mxu0 0.0
        %861 = vmatpush1.msra.mxu0 %v828
        %862 = vmatprep.subr.mxu0 0.0
        %863 = vmatpush1.msra.mxu0 %v829
        %864 = vmatprep.subr.mxu0 0.0
        %865 = vmatpush1.msra.mxu0 %v830
        %866 = vmatprep.subr.mxu0 0.0
        %867 = vmatpush1.msra.mxu0 %v831
        %868 = vmatprep.subr.mxu0 0.0
        %869 = vmatpush1.msra.mxu0 %v832
        %870 = vmatprep.subr.mxu0 0.0
        %871 = vmatpush1.msra.mxu0 %v833
        %872 = vmatprep.subr.mxu0 0.0
        %873 = vmatpush1.msra.mxu0 %v834
        %874 = vmatprep.subr.mxu0 0.0
        %875 = vmatpush1.msra.mxu0 0.0
        %876 = vmatprep.subr.mxu0 0.0
        %877 = vmatpush1.msra.mxu0 0.0
        %878 = vmatprep.subr.mxu0 0.0
        %879 = vmatpush1.msra.mxu0 0.0
        %880 = vmatprep.subr.mxu0 0.0
        %881 = vmatpush1.msra.mxu0 0.0
        %882 = vmatprep.subr.mxu0 0.0
        %883 = vmatpush1.msra.mxu0 0.0
        %884 = vmatprep.subr.mxu0 0.0
        %885 = vmatpush1.msra.mxu0 0.0
        %886 = vmatprep.subr.mxu0 0.0
        %887 = vmatpush1.msra.mxu0 0.0
        %888 = vmatprep.subr.mxu0 0.0
        %889 = vmatpush1.msra.mxu0 0.0
        %890 = vmatprep.subr.mxu0 0.0
        %891 = vmatpush1.msra.mxu0 0.0
        %892 = vmatprep.subr.mxu0 0.0
        %893 = vmatpush1.msra.mxu0 0.0
        %894 = vmatprep.subr.mxu0 0.0
        %895 = vmatpush1.msra.mxu0 0.0
        %896 = vmatprep.subr.mxu0 0.0
        %897 = vmatpush1.msra.mxu0 0.0
        %898 = vmatprep.subr.mxu0 0.0
        %899 = vmatpush1.msra.mxu0 0.0
        %900 = vmatprep.subr.mxu0 0.0
        %901 = vmatpush1.msra.mxu0 0.0
        %902 = vmatprep.subr.mxu0 0.0
        %903 = vmatpush1.msra.mxu0 0.0
        %904 = vmatprep.subr.mxu0 0.0
        %905 = vmatpush1.msra.mxu0 0.0
        %906 = vmatprep.mubr.f32.mxu0 0.0
        %907 = vmatmul.mubr.f32.gmra.mrb[0].mxu0 %v787
        %v908 = vpop.f32.mrb[0].mxu0
        %v909 = vadd.f32 %v840, %v908
        %v910 = vpop.f32.mrb[0].mxu0
        %911 = vmatprep.mubr.f32.mxu0 0.0
        %912 = vmatmul.mubr.f32.gmra.mrb[0].mxu0 %v788
        %v913 = vpop.f32.mrb[0].mxu0
        %v914 = vadd.f32 %v840, %v913
        %v915 = vpop.f32.mrb[0].mxu0
        %916 = vmatprep.mubr.f32.mxu0 0.0
        %917 = vmatmul.mubr.f32.gmra.mrb[0].mxu0 %v789
        %v918 = vpop.f32.mrb[0].mxu0
        %v919 = vadd.f32 %v840, %v918
        %v920 = vpop.f32.mrb[0].mxu0
        %921 = vmatprep.mubr.f32.mxu0 0.0
        %922 = vmatmul.mubr.f32.gmra.mrb[0].mxu0 %v790
        %v923 = vpop.f32.mrb[0].mxu0
        %v924 = vadd.f32 %v840, %v923
        %v925 = vpop.f32.mrb[0].mxu0
        %926 = vmatprep.mubr.f32.mxu0 0.0
        %927 = vmatmul.mubr.f32.gmra.mrb[0].mxu0 %v791
        %v928 = vpop.f32.mrb[0].mxu0
        %v929 = vadd.f32 %v840, %v928
        %v930 = vpop.f32.mrb[0].mxu0
        %931 = vmatprep.mubr.f32.mxu0 0.0
        %932 = vmatmul.mubr.f32.gmra.mrb[0].mxu0 %v792
        %v933 = vpop.f32.mrb[0].mxu0
        %v934 = vadd.f32 %v840, %v933
        %v935 = vpop.f32.mrb[0].mxu0
        %936 = vmatprep.mubr.f32.mxu0 0.0
        %937 = vmatmul.mubr.f32.gmra.mrb[0].mxu0 %v793
        %v938 = vpop.f32.mrb[0].mxu0
        %v939 = vadd.f32 %v840, %v938
        %v940 = vpop.f32.mrb[0].mxu0
        %941 = vmatprep.mubr.f32.mxu0 0.0
        %942 = vmatmul.mubr.f32.gmra.mrb[0].mxu0 %v794
        %v943 = vpop.f32.mrb[0].mxu0
        %v944 = vadd.f32 %v840, %v943
        %v945 = vpop.f32.mrb[0].mxu0
        %946 = vmatprep.mubr.f32.mxu0 0.0
        %947 = vmatmul.mubr.f32.gmra.mrb[0].mxu0 %v795
        %v948 = vpop.f32.mrb[0].mxu0
        %v949 = vadd.f32 %v840, %v948
        %v950 = vpop.f32.mrb[0].mxu0
        %951 = vmatprep.mubr.f32.mxu0 0.0
        %952 = vmatmul.mubr.f32.gmra.mrb[0].mxu0 %v796
        %v953 = vpop.f32.mrb[0].mxu0
        %v954 = vadd.f32 %v840, %v953
        %v955 = vpop.f32.mrb[0].mxu0
        %956 = vmatprep.mubr.f32.mxu0 0.0
        %957 = vmatmul.mubr.f32.gmra.mrb[0].mxu0 %v797
        %v958 = vpop.f32.mrb[0].mxu0
        %v959 = vadd.f32 %v840, %v958
        %v960 = vpop.f32.mrb[0].mxu0
        %961 = vmatprep.mubr.f32.mxu0 0.0
        %962 = vmatmul.mubr.f32.gmra.mrb[0].mxu0 %v798
        %v963 = vpop.f32.mrb[0].mxu0
        %v964 = vadd.f32 %v840, %v963
        %v965 = vpop.f32.mrb[0].mxu0
        %966 = vmatprep.mubr.f32.mxu0 0.0
        %967 = vmatmul.mubr.f32.gmra.mrb[0].mxu0 %v799
        %v968 = vpop.f32.mrb[0].mxu0
        %v969 = vadd.f32 %v840, %v968
        %v970 = vpop.f32.mrb[0].mxu0
        %971 = vmatprep.mubr.f32.mxu0 0.0
        %972 = vmatmul.mubr.f32.gmra.mrb[0].mxu0 %v800
        %v973 = vpop.f32.mrb[0].mxu0
        %v974 = vadd.f32 %v840, %v973
        %v975 = vpop.f32.mrb[0].mxu0
        %976 = vmatprep.mubr.f32.mxu0 0.0
        %977 = vmatmul.mubr.f32.gmra.mrb[0].mxu0 %v801
        %v978 = vpop.f32.mrb[0].mxu0
        %v979 = vadd.f32 %v840, %v978
        %v980 = vpop.f32.mrb[0].mxu0
        %981 = vmatprep.mubr.f32.mxu0 0.0
        %982 = vmatmul.mubr.f32.gmra.mrb[0].mxu0 %v802
        %v983 = vpop.f32.mrb[0].mxu0
        %v984 = vadd.f32 %v840, %v983
        %v985 = vpop.f32.mrb[0].mxu0
        %986 = vmatprep.mubr.f32.mxu0 0.0
        %987 = vmatmul.mubr.f32.gmra.mrb[0].mxu0 %v803
        %v988 = vpop.f32.mrb[0].mxu0
        %v989 = vadd.f32 %v840, %v988
        %v990 = vpop.f32.mrb[0].mxu0
        %991 = vmatprep.mubr.f32.mxu0 0.0
        %992 = vmatmul.mubr.f32.gmra.mrb[0].mxu0 %v804
        %v993 = vpop.f32.mrb[0].mxu0
        %v994 = vadd.f32 %v840, %v993
        %v995 = vpop.f32.mrb[0].mxu0
        %996 = vmatprep.mubr.f32.mxu0 0.0
        %997 = vmatmul.mubr.f32.gmra.mrb[0].mxu0 %v805
        %v998 = vpop.f32.mrb[0].mxu0
        %v999 = vadd.f32 %v840, %v998
        %v1000 = vpop.f32.mrb[0].mxu0
        %1001 = vmatprep.mubr.f32.mxu0 0.0
        %1002 = vmatmul.mubr.f32.gmra.mrb[0].mxu0 %v806
        %v1003 = vpop.f32.mrb[0].mxu0
        %v1004 = vadd.f32 %v840, %v1003
        %v1005 = vpop.f32.mrb[0].mxu0
        %1006 = vmatprep.mubr.f32.mxu0 0.0
        %1007 = vmatmul.mubr.f32.gmra.mrb[0].mxu0 %v807
        %v1008 = vpop.f32.mrb[0].mxu0
        %v1009 = vadd.f32 %v840, %v1008
        %v1010 = vpop.f32.mrb[0].mxu0
        %1011 = vmatprep.mubr.f32.mxu0 0.0
        %1012 = vmatmul.mubr.f32.gmra.mrb[0].mxu0 %v808
        %v1013 = vpop.f32.mrb[0].mxu0
        %v1014 = vadd.f32 %v840, %v1013
        %v1015 = vpop.f32.mrb[0].mxu0
        %1016 = vmatprep.mubr.f32.mxu0 0.0
        %1017 = vmatmul.mubr.f32.gmra.mrb[0].mxu0 %v809
        %v1018 = vpop.f32.mrb[0].mxu0
        %v1019 = vadd.f32 %v840, %v1018
        %v1020 = vpop.f32.mrb[0].mxu0
        %1021 = vmatprep.mubr.f32.mxu0 0.0
        %1022 = vmatmul.mubr.f32.gmra.mrb[0].mxu0 %v810
        %v1023 = vpop.f32.mrb[0].mxu0
        %v1024 = vadd.f32 %v840, %v1023
        %v1025 = vpop.f32.mrb[0].mxu0
        %1026 = vmatprep.mubr.f32.mxu0 0.0
        %1027 = vmatmul.mubr.f32.gmra.mrb[0].mxu0 %v811
        %v1028 = vpop.f32.mrb[0].mxu0
        %v1029 = vadd.f32 %v840, %v1028
        %v1030 = vpop.f32.mrb[0].mxu0
        %1031 = vmatprep.mubr.f32.mxu0 0.0
        %1032 = vmatmul.mubr.f32.gmra.mrb[0].mxu0 %v812
        %v1033 = vpop.f32.mrb[0].mxu0
        %v1034 = vadd.f32 %v840, %v1033
        %v1035 = vpop.f32.mrb[0].mxu0
        %1036 = vmatprep.mubr.f32.mxu0 0.0
        %1037 = vmatmul.mubr.f32.gmra.mrb[0].mxu0 %v813
        %v1038 = vpop.f32.mrb[0].mxu0
        %v1039 = vadd.f32 %v840, %v1038
        %v1040 = vpop.f32.mrb[0].mxu0
        %1041 = vmatprep.mubr.f32.mxu0 0.0
        %1042 = vmatmul.mubr.f32.gmra.mrb[0].mxu0 %v814
        %v1043 = vpop.f32.mrb[0].mxu0
        %v1044 = vadd.f32 %v840, %v1043
        %v1045 = vpop.f32.mrb[0].mxu0
        %1046 = vmatprep.mubr.f32.mxu0 0.0
        %1047 = vmatmul.mubr.f32.gmra.mrb[0].mxu0 %v815
        %v1048 = vpop.f32.mrb[0].mxu0
        %v1049 = vadd.f32 %v840, %v1048
        %v1050 = vpop.f32.mrb[0].mxu0
        %1051 = vmatprep.mubr.f32.mxu0 0.0
        %1052 = vmatmul.mubr.f32.gmra.mrb[0].mxu0 %v816
        %v1053 = vpop.f32.mrb[0].mxu0
        %v1054 = vadd.f32 %v840, %v1053
        %v1055 = vpop.f32.mrb[0].mxu0
        %1056 = vmatprep.mubr.f32.mxu0 0.0
        %1057 = vmatmul.mubr.f32.gmra.mrb[0].mxu0 %v817
        %v1058 = vpop.f32.mrb[0].mxu0
        %v1059 = vadd.f32 %v840, %v1058
        %v1060 = vpop.f32.mrb[0].mxu0
        %1061 = vmatprep.mubr.f32.mxu0 0.0
        %1062 = vmatmul.mubr.f32.gmra.mrb[0].mxu0 %v818
        %v1063 = vpop.f32.mrb[0].mxu0
        %v1064 = vadd.f32 %v840, %v1063
        %v1065 = vpop.f32.mrb[0].mxu0
        %1066 = vdwg.mxu0
        %v1067 = vxor.u32 %v909, 2147483648
        %v1068 = vxor.u32 %v914, 2147483648
        %v1069 = vxor.u32 %v919, 2147483648
        %v1070 = vxor.u32 %v924, 2147483648
        %v1071 = vxor.u32 %v929, 2147483648
        %v1072 = vxor.u32 %v934, 2147483648
        %v1073 = vxor.u32 %v939, 2147483648
        %v1074 = vxor.u32 %v944, 2147483648
        %v1075 = vxor.u32 %v949, 2147483648
        %v1076 = vxor.u32 %v954, 2147483648
        %v1077 = vxor.u32 %v959, 2147483648
        %v1078 = vxor.u32 %v964, 2147483648
        %v1079 = vxor.u32 %v969, 2147483648
        %v1080 = vxor.u32 %v974, 2147483648
        %v1081 = vxor.u32 %v979, 2147483648
        %v1082 = vxor.u32 %v984, 2147483648
        %v1083 = vxor.u32 %v989, 2147483648
        %v1084 = vxor.u32 %v994, 2147483648
        %v1085 = vxor.u32 %v999, 2147483648
        %v1086 = vxor.u32 %v1004, 2147483648
        %v1087 = vxor.u32 %v1009, 2147483648
        %v1088 = vxor.u32 %v1014, 2147483648
        %v1089 = vxor.u32 %v1019, 2147483648
        %v1090 = vxor.u32 %v1024, 2147483648
        %v1091 = vxor.u32 %v1029, 2147483648
        %v1092 = vxor.u32 %v1034, 2147483648
        %v1093 = vxor.u32 %v1039, 2147483648
        %v1094 = vxor.u32 %v1044, 2147483648
        %v1095 = vxor.u32 %v1049, 2147483648
        %v1096 = vxor.u32 %v1054, 2147483648
        %v1097 = vxor.u32 %v1059, 2147483648
        %v1098 = vxor.u32 %v1064, 2147483648
        %v1099 = vmul.f32 %v1067, 1.442695
        %v1100 = vpow.pop %v1099
        %v1101 = vmul.f32 %v1068, 1.442695
        %v1102 = vpow.pop %v1101
        %v1103 = vmul.f32 %v1069, 1.442695
        %v1104 = vpow.pop %v1103
        %v1105 = vmul.f32 %v1070, 1.442695
        %v1106 = vpow.pop %v1105
        %v1107 = vmul.f32 %v1071, 1.442695
        %v1108 = vpow.pop %v1107
        %v1109 = vmul.f32 %v1072, 1.442695
        %v1110 = vpow.pop %v1109
        %v1111 = vmul.f32 %v1073, 1.442695
        %v1112 = vpow.pop %v1111
        %v1113 = vmul.f32 %v1074, 1.442695
        %v1114 = vpow.pop %v1113
        %v1115 = vmul.f32 %v1075, 1.442695
        %v1116 = vpow.pop %v1115
        %v1117 = vmul.f32 %v1076, 1.442695
        %v1118 = vpow.pop %v1117
        %v1119 = vmul.f32 %v1077, 1.442695
        %v1120 = vpow.pop %v1119
        %v1121 = vmul.f32 %v1078, 1.442695
        %v1122 = vpow.pop %v1121
        %v1123 = vmul.f32 %v1079, 1.442695
        %v1124 = vpow.pop %v1123
        %v1125 = vmul.f32 %v1080, 1.442695
        %v1126 = vpow.pop %v1125
        %v1127 = vmul.f32 %v1081, 1.442695
        %v1128 = vpow.pop %v1127
        %v1129 = vmul.f32 %v1082, 1.442695
        %v1130 = vpow.pop %v1129
        %v1131 = vmul.f32 %v1083, 1.442695
        %v1132 = vpow.pop %v1131
        %v1133 = vmul.f32 %v1084, 1.442695
        %v1134 = vpow.pop %v1133
        %v1135 = vmul.f32 %v1085, 1.442695
        %v1136 = vpow.pop %v1135
        %v1137 = vmul.f32 %v1086, 1.442695
        %v1138 = vpow.pop %v1137
        %v1139 = vmul.f32 %v1087, 1.442695
        %v1140 = vpow.pop %v1139
        %v1141 = vmul.f32 %v1088, 1.442695
        %v1142 = vpow.pop %v1141
        %v1143 = vmul.f32 %v1089, 1.442695
        %v1144 = vpow.pop %v1143
        %v1145 = vmul.f32 %v1090, 1.442695
        %v1146 = vpow.pop %v1145
        %v1147 = vmul.f32 %v1091, 1.442695
        %v1148 = vpow.pop %v1147
        %v1149 = vmul.f32 %v1092, 1.442695
        %v1150 = vpow.pop %v1149
        %v1151 = vmul.f32 %v1093, 1.442695
        %v1152 = vpow.pop %v1151
        %v1153 = vmul.f32 %v1094, 1.442695
        %v1154 = vpow.pop %v1153
        %v1155 = vmul.f32 %v1095, 1.442695
        %v1156 = vpow.pop %v1155
        %v1157 = vmul.f32 %v1096, 1.442695
        %v1158 = vpow.pop %v1157
        %v1159 = vmul.f32 %v1097, 1.442695
        %v1160 = vpow.pop %v1159
        %v1161 = vmul.f32 %v1098, 1.442695
        %v1162 = vpow.pop %v1161
        %v1163 = vadd.f32 %v1100, 1.0
        %v1164 = vadd.f32 %v1102, 1.0
        %v1165 = vadd.f32 %v1104, 1.0
        %v1166 = vadd.f32 %v1106, 1.0
        %v1167 = vadd.f32 %v1108, 1.0
        %v1168 = vadd.f32 %v1110, 1.0
        %v1169 = vadd.f32 %v1112, 1.0
        %v1170 = vadd.f32 %v1114, 1.0
        %v1171 = vadd.f32 %v1116, 1.0
        %v1172 = vadd.f32 %v1118, 1.0
        %v1173 = vadd.f32 %v1120, 1.0
        %v1174 = vadd.f32 %v1122, 1.0
        %v1175 = vadd.f32 %v1124, 1.0
        %v1176 = vadd.f32 %v1126, 1.0
        %v1177 = vadd.f32 %v1128, 1.0
        %v1178 = vadd.f32 %v1130, 1.0
        %v1179 = vadd.f32 %v1132, 1.0
        %v1180 = vadd.f32 %v1134, 1.0
        %v1181 = vadd.f32 %v1136, 1.0
        %v1182 = vadd.f32 %v1138, 1.0
        %v1183 = vadd.f32 %v1140, 1.0
        %v1184 = vadd.f32 %v1142, 1.0
        %v1185 = vadd.f32 %v1144, 1.0
        %v1186 = vadd.f32 %v1146, 1.0
        %v1187 = vadd.f32 %v1148, 1.0
        %v1188 = vadd.f32 %v1150, 1.0
        %v1189 = vadd.f32 %v1152, 1.0
        %v1190 = vadd.f32 %v1154, 1.0
        %v1191 = vadd.f32 %v1156, 1.0
        %v1192 = vadd.f32 %v1158, 1.0
        %v1193 = vadd.f32 %v1160, 1.0
        %v1194 = vadd.f32 %v1162, 1.0
        %v1195 = vrcp.pop %v1163
        %v1196 = vmul.f32 1.0, %v1195
        %v1197 = vrcp.pop %v1164
        %v1198 = vmul.f32 1.0, %v1197
        %v1199 = vrcp.pop %v1165
        %v1200 = vmul.f32 1.0, %v1199
        %v1201 = vrcp.pop %v1166
        %v1202 = vmul.f32 1.0, %v1201
        %v1203 = vrcp.pop %v1167
        %v1204 = vmul.f32 1.0, %v1203
        %v1205 = vrcp.pop %v1168
        %v1206 = vmul.f32 1.0, %v1205
        %v1207 = vrcp.pop %v1169
        %v1208 = vmul.f32 1.0, %v1207
        %v1209 = vrcp.pop %v1170
        %v1210 = vmul.f32 1.0, %v1209
        %v1211 = vrcp.pop %v1171
        %v1212 = vmul.f32 1.0, %v1211
        %v1213 = vrcp.pop %v1172
        %v1214 = vmul.f32 1.0, %v1213
        %v1215 = vrcp.pop %v1173
        %v1216 = vmul.f32 1.0, %v1215
        %v1217 = vrcp.pop %v1174
        %v1218 = vmul.f32 1.0, %v1217
        %v1219 = vrcp.pop %v1175
        %v1220 = vmul.f32 1.0, %v1219
        %v1221 = vrcp.pop %v1176
        %v1222 = vmul.f32 1.0, %v1221
        %v1223 = vrcp.pop %v1177
        %v1224 = vmul.f32 1.0, %v1223
        %v1225 = vrcp.pop %v1178
        %v1226 = vmul.f32 1.0, %v1225
        %v1227 = vrcp.pop %v1179
        %v1228 = vmul.f32 1.0, %v1227
        %v1229 = vrcp.pop %v1180
        %v1230 = vmul.f32 1.0, %v1229
        %v1231 = vrcp.pop %v1181
        %v1232 = vmul.f32 1.0, %v1231
        %v1233 = vrcp.pop %v1182
        %v1234 = vmul.f32 1.0, %v1233
        %v1235 = vrcp.pop %v1183
        %v1236 = vmul.f32 1.0, %v1235
        %v1237 = vrcp.pop %v1184
        %v1238 = vmul.f32 1.0, %v1237
        %v1239 = vrcp.pop %v1185
        %v1240 = vmul.f32 1.0, %v1239
        %v1241 = vrcp.pop %v1186
        %v1242 = vmul.f32 1.0, %v1241
        %v1243 = vrcp.pop %v1187
        %v1244 = vmul.f32 1.0, %v1243
        %v1245 = vrcp.pop %v1188
        %v1246 = vmul.f32 1.0, %v1245
        %v1247 = vrcp.pop %v1189
        %v1248 = vmul.f32 1.0, %v1247
        %v1249 = vrcp.pop %v1190
        %v1250 = vmul.f32 1.0, %v1249
        %v1251 = vrcp.pop %v1191
        %v1252 = vmul.f32 1.0, %v1251
        %v1253 = vrcp.pop %v1192
        %v1254 = vmul.f32 1.0, %v1253
        %v1255 = vrcp.pop %v1193
        %v1256 = vmul.f32 1.0, %v1255
        %v1257 = vrcp.pop %v1194
        %v1258 = vmul.f32 1.0, %v1257
        %v1260 = vlaneseq
        %v1261 = vshrl.u32 %v1260, 7
        %v1262 = vsub.s32 0, %v1261
        %v1263 = vrot.slane %v449, %v1262
        %v1265 = vmul.f32 %v417, %v1263
        %v1266 = vmul.f32 %v418, %v1263
        %v1267 = vmul.f32 %v419, %v1263
        %v1268 = vmul.f32 %v420, %v1263
        %v1269 = vmul.f32 %v421, %v1263
        %v1270 = vmul.f32 %v422, %v1263
        %v1271 = vmul.f32 %v423, %v1263
        %v1272 = vmul.f32 %v424, %v1263
        %v1273 = vmul.f32 %v425, %v1263
        %v1274 = vmul.f32 %v426, %v1263
        %v1275 = vmul.f32 %v427, %v1263
        %v1276 = vmul.f32 %v428, %v1263
        %v1277 = vmul.f32 %v429, %v1263
        %v1278 = vmul.f32 %v430, %v1263
        %v1279 = vmul.f32 %v431, %v1263
        %v1280 = vmul.f32 %v432, %v1263
        %v1281 = vmul.f32 %v433, %v1263
        %v1282 = vmul.f32 %v434, %v1263
        %v1283 = vmul.f32 %v435, %v1263
        %v1284 = vmul.f32 %v436, %v1263
        %v1285 = vmul.f32 %v437, %v1263
        %v1286 = vmul.f32 %v438, %v1263
        %v1287 = vmul.f32 %v439, %v1263
        %v1288 = vmul.f32 %v440, %v1263
        %v1289 = vmul.f32 %v441, %v1263
        %v1290 = vmul.f32 %v442, %v1263
        %v1291 = vmul.f32 %v443, %v1263
        %v1292 = vmul.f32 %v444, %v1263
        %v1293 = vmul.f32 %v445, %v1263
        %v1294 = vmul.f32 %v446, %v1263
        %v1295 = vmul.f32 %v447, %v1263
        %v1296 = vmul.f32 %v448, %v1263
        %v1297 = vmul.f32 %v385, %v1196
        %v1298 = vmul.f32 %v386, %v1198
        %v1299 = vmul.f32 %v387, %v1200
        %v1300 = vmul.f32 %v388, %v1202
        %v1301 = vmul.f32 %v389, %v1204
        %v1302 = vmul.f32 %v390, %v1206
        %v1303 = vmul.f32 %v391, %v1208
        %v1304 = vmul.f32 %v392, %v1210
        %v1305 = vmul.f32 %v393, %v1212
        %v1306 = vmul.f32 %v394, %v1214
        %v1307 = vmul.f32 %v395, %v1216
        %v1308 = vmul.f32 %v396, %v1218
        %v1309 = vmul.f32 %v397, %v1220
        %v1310 = vmul.f32 %v398, %v1222
        %v1311 = vmul.f32 %v399, %v1224
        %v1312 = vmul.f32 %v400, %v1226
        %v1313 = vmul.f32 %v401, %v1228
        %v1314 = vmul.f32 %v402, %v1230
        %v1315 = vmul.f32 %v403, %v1232
        %v1316 = vmul.f32 %v404, %v1234
        %v1317 = vmul.f32 %v405, %v1236
        %v1318 = vmul.f32 %v406, %v1238
        %v1319 = vmul.f32 %v407, %v1240
        %v1320 = vmul.f32 %v408, %v1242
        %v1321 = vmul.f32 %v409, %v1244
        %v1322 = vmul.f32 %v410, %v1246
        %v1323 = vmul.f32 %v411, %v1248
        %v1324 = vmul.f32 %v412, %v1250
        %v1325 = vmul.f32 %v413, %v1252
        %v1326 = vmul.f32 %v414, %v1254
        %v1327 = vmul.f32 %v415, %v1256
        %v1328 = vmul.f32 %v416, %v1258
        %v1329 = vadd.f32 %v1265, %v1297
        %v1330 = vadd.f32 %v1266, %v1298
        %v1331 = vadd.f32 %v1267, %v1299
        %v1332 = vadd.f32 %v1268, %v1300
        %v1333 = vadd.f32 %v1269, %v1301
        %v1334 = vadd.f32 %v1270, %v1302
        %v1335 = vadd.f32 %v1271, %v1303
        %v1336 = vadd.f32 %v1272, %v1304
        %v1337 = vadd.f32 %v1273, %v1305
        %v1338 = vadd.f32 %v1274, %v1306
        %v1339 = vadd.f32 %v1275, %v1307
        %v1340 = vadd.f32 %v1276, %v1308
        %v1341 = vadd.f32 %v1277, %v1309
        %v1342 = vadd.f32 %v1278, %v1310
        %v1343 = vadd.f32 %v1279, %v1311
        %v1344 = vadd.f32 %v1280, %v1312
        %v1345 = vadd.f32 %v1281, %v1313
        %v1346 = vadd.f32 %v1282, %v1314
        %v1347 = vadd.f32 %v1283, %v1315
        %v1348 = vadd.f32 %v1284, %v1316
        %v1349 = vadd.f32 %v1285, %v1317
        %v1350 = vadd.f32 %v1286, %v1318
        %v1351 = vadd.f32 %v1287, %v1319
        %v1352 = vadd.f32 %v1288, %v1320
        %v1353 = vadd.f32 %v1289, %v1321
        %v1354 = vadd.f32 %v1290, %v1322
        %v1355 = vadd.f32 %v1291, %v1323
        %v1356 = vadd.f32 %v1292, %v1324
        %v1357 = vadd.f32 %v1293, %v1325
        %v1358 = vadd.f32 %v1294, %v1326
        %v1359 = vadd.f32 %v1295, %v1327
        %v1360 = vadd.f32 %v1296, %v1328
        %v1361 = vmul.f32 %v1329, 2.0
        %v1362 = vmul.f32 %v1330, 2.0
        %v1363 = vmul.f32 %v1331, 2.0
        %v1364 = vmul.f32 %v1332, 2.0
        %v1365 = vmul.f32 %v1333, 2.0
        %v1366 = vmul.f32 %v1334, 2.0
        %v1367 = vmul.f32 %v1335, 2.0
        %v1368 = vmul.f32 %v1336, 2.0
        %v1369 = vmul.f32 %v1337, 2.0
        %v1370 = vmul.f32 %v1338, 2.0
        %v1371 = vmul.f32 %v1339, 2.0
        %v1372 = vmul.f32 %v1340, 2.0
        %v1373 = vmul.f32 %v1341, 2.0
        %v1374 = vmul.f32 %v1342, 2.0
        %v1375 = vmul.f32 %v1343, 2.0
        %v1376 = vmul.f32 %v1344, 2.0
        %v1377 = vmul.f32 %v1345, 2.0
        %v1378 = vmul.f32 %v1346, 2.0
        %v1379 = vmul.f32 %v1347, 2.0
        %v1380 = vmul.f32 %v1348, 2.0
        %v1381 = vmul.f32 %v1349, 2.0
        %v1382 = vmul.f32 %v1350, 2.0
        %v1383 = vmul.f32 %v1351, 2.0
        %v1384 = vmul.f32 %v1352, 2.0
        %v1385 = vmul.f32 %v1353, 2.0
        %v1386 = vmul.f32 %v1354, 2.0
        %v1387 = vmul.f32 %v1355, 2.0
        %v1388 = vmul.f32 %v1356, 2.0
        %v1389 = vmul.f32 %v1357, 2.0
        %v1390 = vmul.f32 %v1358, 2.0
        %v1391 = vmul.f32 %v1359, 2.0
        %v1392 = vmul.f32 %v1360, 2.0
        %v1393 = vlaneseq
        %v1394 = vshrl.u32 %v1393, 7
        %v1395 = vadd.s32 %v1394, 8
        %v1396 = vadd.s32 %v1394, 16
        %v1397 = vadd.s32 %v1394, 24
        %v1398 = vadd.s32 %v1394, 32
        %v1399 = vadd.s32 %v1394, 40
        %v1400 = vadd.s32 %v1394, 48
        %v1401 = vadd.s32 %v1394, 56
        %v1402 = vadd.s32 %v1394, 64
        %v1403 = vadd.s32 %v1394, 72
        %v1404 = vadd.s32 %v1394, 80
        %v1405 = vadd.s32 %v1394, 88
        %v1406 = vadd.s32 %v1394, 96
        %v1407 = vadd.s32 %v1394, 104
        %v1408 = vadd.s32 %v1394, 112
        %v1409 = vadd.s32 %v1394, 120
        %v1410 = vadd.s32 %v1394, 128
        %v1411 = vadd.s32 %v1394, 136
        %v1412 = vadd.s32 %v1394, 144
        %v1413 = vadd.s32 %v1394, 152
        %v1414 = vadd.s32 %v1394, 160
        %v1415 = vadd.s32 %v1394, 168
        %v1416 = vadd.s32 %v1394, 176
        %v1417 = vadd.s32 %v1394, 184
        %v1418 = vadd.s32 %v1394, 192
        %v1419 = vadd.s32 %v1394, 200
        %v1420 = vadd.s32 %v1394, 208
        %v1421 = vadd.s32 %v1394, 216
        %v1422 = vadd.s32 %v1394, 224
        %v1423 = vadd.s32 %v1394, 232
        %v1424 = vadd.s32 %v1394, 240
        %v1425 = vadd.s32 %v1394, 248
        %v1426 = vadd.s32 %v1394, 256
        %v1427 = vadd.s32 %v1394, 264
        %v1428 = vadd.s32 %v1394, 272
        %v1429 = vadd.s32 %v1394, 280
        %v1430 = vand.u32 %v1394, 15
        %v1431 = vand.u32 %v1395, 15
        %v1432 = vand.u32 %v1396, 15
        %v1433 = vand.u32 %v1397, 15
        %v1434 = vand.u32 %v1398, 15
        %v1435 = vand.u32 %v1399, 15
        %v1436 = vand.u32 %v1400, 15
        %v1437 = vand.u32 %v1401, 15
        %v1438 = vand.u32 %v1402, 15
        %v1439 = vand.u32 %v1403, 15
        %v1440 = vand.u32 %v1404, 15
        %v1441 = vand.u32 %v1405, 15
        %v1442 = vand.u32 %v1406, 15
        %v1443 = vand.u32 %v1407, 15
        %v1444 = vand.u32 %v1408, 15
        %v1445 = vand.u32 %v1409, 15
        %v1446 = vand.u32 %v1410, 15
        %v1447 = vand.u32 %v1411, 15
        %v1448 = vand.u32 %v1412, 15
        %v1449 = vand.u32 %v1413, 15
        %v1450 = vand.u32 %v1414, 15
        %v1451 = vand.u32 %v1415, 15
        %v1452 = vand.u32 %v1416, 15
        %v1453 = vand.u32 %v1417, 15
        %v1454 = vand.u32 %v1418, 15
        %v1455 = vand.u32 %v1419, 15
        %v1456 = vand.u32 %v1420, 15
        %v1457 = vand.u32 %v1421, 15
        %v1458 = vand.u32 %v1422, 15
        %v1459 = vand.u32 %v1423, 15
        %v1460 = vand.u32 %v1424, 15
        %v1461 = vand.u32 %v1425, 15
        %v1462 = vand.u32 %v1426, 15
        %v1463 = vand.u32 %v1427, 15
        %v1464 = vand.u32 %v1428, 15
        %v1465 = vand.u32 %v1429, 15
        %vm1466 = vcmp.ne.s32.totalorder %v1430, 0
        %vm1467 = vcmp.ne.s32.totalorder %v1431, 0
        %vm1468 = vcmp.ne.s32.totalorder %v1432, 0
        %vm1469 = vcmp.ne.s32.totalorder %v1433, 0
        %vm1470 = vcmp.ne.s32.totalorder %v1434, 0
        %vm1471 = vcmp.ne.s32.totalorder %v1435, 0
        %vm1472 = vcmp.ne.s32.totalorder %v1436, 0
        %vm1473 = vcmp.ne.s32.totalorder %v1437, 0
        %vm1474 = vcmp.ne.s32.totalorder %v1438, 0
        %vm1475 = vcmp.ne.s32.totalorder %v1439, 0
        %vm1476 = vcmp.ne.s32.totalorder %v1440, 0
        %vm1477 = vcmp.ne.s32.totalorder %v1441, 0
        %vm1478 = vcmp.ne.s32.totalorder %v1442, 0
        %vm1479 = vcmp.ne.s32.totalorder %v1443, 0
        %vm1480 = vcmp.ne.s32.totalorder %v1444, 0
        %vm1481 = vcmp.ne.s32.totalorder %v1445, 0
        %vm1482 = vcmp.ne.s32.totalorder %v1446, 0
        %vm1483 = vcmp.ne.s32.totalorder %v1447, 0
        %vm1484 = vcmp.ne.s32.totalorder %v1448, 0
        %vm1485 = vcmp.ne.s32.totalorder %v1449, 0
        %vm1486 = vcmp.ne.s32.totalorder %v1450, 0
        %vm1487 = vcmp.ne.s32.totalorder %v1451, 0
        %vm1488 = vcmp.ne.s32.totalorder %v1452, 0
        %vm1489 = vcmp.ne.s32.totalorder %v1453, 0
        %vm1490 = vcmp.ne.s32.totalorder %v1454, 0
        %vm1491 = vcmp.ne.s32.totalorder %v1455, 0
        %vm1492 = vcmp.ne.s32.totalorder %v1456, 0
        %vm1493 = vcmp.ne.s32.totalorder %v1457, 0
        %vm1494 = vcmp.ne.s32.totalorder %v1458, 0
        %vm1495 = vcmp.ne.s32.totalorder %v1459, 0
        %vm1496 = vcmp.ne.s32.totalorder %v1460, 0
        %vm1497 = vcmp.ne.s32.totalorder %v1461, 0
        %vm1498 = vcmp.ne.s32.totalorder %v1462, 0
        %vm1499 = vcmp.ne.s32.totalorder %v1463, 0
        %vm1500 = vcmp.ne.s32.totalorder %v1464, 0
        %vm1501 = vcmp.ne.s32.totalorder %v1465, 0
        %vm1535 = vcmask 1040384
        %v1536 = vrot.slane 0.0, 7
        %v1537 = vsel %vm1535, %v1536, %v1536
        %v1538 = vrot.slane %v1361, 7
        %v1539 = vsel %vm1535, %v1536, %v1538
        %v1540 = vrot.slane %v1362, 7
        %v1541 = vsel %vm1535, %v1538, %v1540
        %v1542 = vrot.slane %v1363, 7
        %v1543 = vsel %vm1535, %v1540, %v1542
        %v1544 = vrot.slane %v1364, 7
        %v1545 = vsel %vm1535, %v1542, %v1544
        %v1546 = vrot.slane %v1365, 7
        %v1547 = vsel %vm1535, %v1544, %v1546
        %v1548 = vrot.slane %v1366, 7
        %v1549 = vsel %vm1535, %v1546, %v1548
        %v1550 = vrot.slane %v1367, 7
        %v1551 = vsel %vm1535, %v1548, %v1550
        %v1552 = vrot.slane %v1368, 7
        %v1553 = vsel %vm1535, %v1550, %v1552
        %v1554 = vrot.slane %v1369, 7
        %v1555 = vsel %vm1535, %v1552, %v1554
        %v1556 = vrot.slane %v1370, 7
        %v1557 = vsel %vm1535, %v1554, %v1556
        %v1558 = vrot.slane %v1371, 7
        %v1559 = vsel %vm1535, %v1556, %v1558
        %v1560 = vrot.slane %v1372, 7
        %v1561 = vsel %vm1535, %v1558, %v1560
        %v1562 = vrot.slane %v1373, 7
        %v1563 = vsel %vm1535, %v1560, %v1562
        %v1564 = vrot.slane %v1374, 7
        %v1565 = vsel %vm1535, %v1562, %v1564
        %v1566 = vrot.slane %v1375, 7
        %v1567 = vsel %vm1535, %v1564, %v1566
        %v1568 = vrot.slane %v1376, 7
        %v1569 = vsel %vm1535, %v1566, %v1568
        %v1570 = vrot.slane %v1377, 7
        %v1571 = vsel %vm1535, %v1568, %v1570
        %v1572 = vrot.slane %v1378, 7
        %v1573 = vsel %vm1535, %v1570, %v1572
        %v1574 = vrot.slane %v1379, 7
        %v1575 = vsel %vm1535, %v1572, %v1574
        %v1576 = vrot.slane %v1380, 7
        %v1577 = vsel %vm1535, %v1574, %v1576
        %v1578 = vrot.slane %v1381, 7
        %v1579 = vsel %vm1535, %v1576, %v1578
        %v1580 = vrot.slane %v1382, 7
        %v1581 = vsel %vm1535, %v1578, %v1580
        %v1582 = vrot.slane %v1383, 7
        %v1583 = vsel %vm1535, %v1580, %v1582
        %v1584 = vrot.slane %v1384, 7
        %v1585 = vsel %vm1535, %v1582, %v1584
        %v1586 = vrot.slane %v1385, 7
        %v1587 = vsel %vm1535, %v1584, %v1586
        %v1588 = vrot.slane %v1386, 7
        %v1589 = vsel %vm1535, %v1586, %v1588
        %v1590 = vrot.slane %v1387, 7
        %v1591 = vsel %vm1535, %v1588, %v1590
        %v1592 = vrot.slane %v1388, 7
        %v1593 = vsel %vm1535, %v1590, %v1592
        %v1594 = vrot.slane %v1389, 7
        %v1595 = vsel %vm1535, %v1592, %v1594
        %v1596 = vrot.slane %v1390, 7
        %v1597 = vsel %vm1535, %v1594, %v1596
        %v1598 = vrot.slane %v1391, 7
        %v1599 = vsel %vm1535, %v1596, %v1598
        %v1600 = vrot.slane %v1392, 7
        %v1601 = vsel %vm1535, %v1598, %v1600
        %v1602 = vsel %vm1535, %v1600, %v1536
        %v1637 = vsel %vm1466, %v1537, 0.0
        %v1638 = vsel %vm1467, %v1537, 0.0
        %v1639 = vsel %vm1468, %v1539, 0.0
        %v1640 = vsel %vm1469, %v1541, 0.0
        %v1641 = vsel %vm1470, %v1543, 0.0
        %v1642 = vsel %vm1471, %v1545, 0.0
        %v1643 = vsel %vm1472, %v1547, 0.0
        %v1644 = vsel %vm1473, %v1549, 0.0
        %v1645 = vsel %vm1474, %v1551, 0.0
        %v1646 = vsel %vm1475, %v1553, 0.0
        %v1647 = vsel %vm1476, %v1555, 0.0
        %v1648 = vsel %vm1477, %v1557, 0.0
        %v1649 = vsel %vm1478, %v1559, 0.0
        %v1650 = vsel %vm1479, %v1561, 0.0
        %v1651 = vsel %vm1480, %v1563, 0.0
        %v1652 = vsel %vm1481, %v1565, 0.0
        %v1653 = vsel %vm1482, %v1567, 0.0
        %v1654 = vsel %vm1483, %v1569, 0.0
        %v1655 = vsel %vm1484, %v1571, 0.0
        %v1656 = vsel %vm1485, %v1573, 0.0
        %v1657 = vsel %vm1486, %v1575, 0.0
        %v1658 = vsel %vm1487, %v1577, 0.0
        %v1659 = vsel %vm1488, %v1579, 0.0
        %v1660 = vsel %vm1489, %v1581, 0.0
        %v1661 = vsel %vm1490, %v1583, 0.0
        %v1662 = vsel %vm1491, %v1585, 0.0
        %v1663 = vsel %vm1492, %v1587, 0.0
        %v1664 = vsel %vm1493, %v1589, 0.0
        %v1665 = vsel %vm1494, %v1591, 0.0
        %v1666 = vsel %vm1495, %v1593, 0.0
        %v1667 = vsel %vm1496, %v1595, 0.0
        %v1668 = vsel %vm1497, %v1597, 0.0
        %v1669 = vsel %vm1498, %v1599, 0.0
        %v1670 = vsel %vm1499, %v1601, 0.0
        %v1671 = vsel %vm1500, %v1602, 0.0
        %v1672 = vsel %vm1501, %v1537, 0.0
        %vm1673 = vcmp.ne.s32.totalorder %v1430, 15
        %vm1674 = vcmp.ne.s32.totalorder %v1431, 15
        %vm1675 = vcmp.ne.s32.totalorder %v1432, 15
        %vm1676 = vcmp.ne.s32.totalorder %v1433, 15
        %vm1677 = vcmp.ne.s32.totalorder %v1434, 15
        %vm1678 = vcmp.ne.s32.totalorder %v1435, 15
        %vm1679 = vcmp.ne.s32.totalorder %v1436, 15
        %vm1680 = vcmp.ne.s32.totalorder %v1437, 15
        %vm1681 = vcmp.ne.s32.totalorder %v1438, 15
        %vm1682 = vcmp.ne.s32.totalorder %v1439, 15
        %vm1683 = vcmp.ne.s32.totalorder %v1440, 15
        %vm1684 = vcmp.ne.s32.totalorder %v1441, 15
        %vm1685 = vcmp.ne.s32.totalorder %v1442, 15
        %vm1686 = vcmp.ne.s32.totalorder %v1443, 15
        %vm1687 = vcmp.ne.s32.totalorder %v1444, 15
        %vm1688 = vcmp.ne.s32.totalorder %v1445, 15
        %vm1689 = vcmp.ne.s32.totalorder %v1446, 15
        %vm1690 = vcmp.ne.s32.totalorder %v1447, 15
        %vm1691 = vcmp.ne.s32.totalorder %v1448, 15
        %vm1692 = vcmp.ne.s32.totalorder %v1449, 15
        %vm1693 = vcmp.ne.s32.totalorder %v1450, 15
        %vm1694 = vcmp.ne.s32.totalorder %v1451, 15
        %vm1695 = vcmp.ne.s32.totalorder %v1452, 15
        %vm1696 = vcmp.ne.s32.totalorder %v1453, 15
        %vm1697 = vcmp.ne.s32.totalorder %v1454, 15
        %vm1698 = vcmp.ne.s32.totalorder %v1455, 15
        %vm1699 = vcmp.ne.s32.totalorder %v1456, 15
        %vm1700 = vcmp.ne.s32.totalorder %v1457, 15
        %vm1701 = vcmp.ne.s32.totalorder %v1458, 15
        %vm1702 = vcmp.ne.s32.totalorder %v1459, 15
        %vm1703 = vcmp.ne.s32.totalorder %v1460, 15
        %vm1704 = vcmp.ne.s32.totalorder %v1461, 15
        %vm1705 = vcmp.ne.s32.totalorder %v1462, 15
        %vm1706 = vcmp.ne.s32.totalorder %v1463, 15
        %vm1707 = vcmp.ne.s32.totalorder %v1464, 15
        %vm1708 = vcmp.ne.s32.totalorder %v1465, 15
        %vm1709 = vcmask 1046528
        %v1710 = vrot.slane 0.0, 1
        %v1711 = vsel %vm1709, %v1710, %v1710
        %v1712 = vrot.slane %v1361, 1
        %v1713 = vsel %vm1709, %v1710, %v1712
        %v1714 = vrot.slane %v1362, 1
        %v1715 = vsel %vm1709, %v1712, %v1714
        %v1716 = vrot.slane %v1363, 1
        %v1717 = vsel %vm1709, %v1714, %v1716
        %v1718 = vrot.slane %v1364, 1
        %v1719 = vsel %vm1709, %v1716, %v1718
        %v1720 = vrot.slane %v1365, 1
        %v1721 = vsel %vm1709, %v1718, %v1720
        %v1722 = vrot.slane %v1366, 1
        %v1723 = vsel %vm1709, %v1720, %v1722
        %v1724 = vrot.slane %v1367, 1
        %v1725 = vsel %vm1709, %v1722, %v1724
        %v1726 = vrot.slane %v1368, 1
        %v1727 = vsel %vm1709, %v1724, %v1726
        %v1728 = vrot.slane %v1369, 1
        %v1729 = vsel %vm1709, %v1726, %v1728
        %v1730 = vrot.slane %v1370, 1
        %v1731 = vsel %vm1709, %v1728, %v1730
        %v1732 = vrot.slane %v1371, 1
        %v1733 = vsel %vm1709, %v1730, %v1732
        %v1734 = vrot.slane %v1372, 1
        %v1735 = vsel %vm1709, %v1732, %v1734
        %v1736 = vrot.slane %v1373, 1
        %v1737 = vsel %vm1709, %v1734, %v1736
        %v1738 = vrot.slane %v1374, 1
        %v1739 = vsel %vm1709, %v1736, %v1738
        %v1740 = vrot.slane %v1375, 1
        %v1741 = vsel %vm1709, %v1738, %v1740
        %v1742 = vrot.slane %v1376, 1
        %v1743 = vsel %vm1709, %v1740, %v1742
        %v1744 = vrot.slane %v1377, 1
        %v1745 = vsel %vm1709, %v1742, %v1744
        %v1746 = vrot.slane %v1378, 1
        %v1747 = vsel %vm1709, %v1744, %v1746
        %v1748 = vrot.slane %v1379, 1
        %v1749 = vsel %vm1709, %v1746, %v1748
        %v1750 = vrot.slane %v1380, 1
        %v1751 = vsel %vm1709, %v1748, %v1750
        %v1752 = vrot.slane %v1381, 1
        %v1753 = vsel %vm1709, %v1750, %v1752
        %v1754 = vrot.slane %v1382, 1
        %v1755 = vsel %vm1709, %v1752, %v1754
        %v1756 = vrot.slane %v1383, 1
        %v1757 = vsel %vm1709, %v1754, %v1756
        %v1758 = vrot.slane %v1384, 1
        %v1759 = vsel %vm1709, %v1756, %v1758
        %v1760 = vrot.slane %v1385, 1
        %v1761 = vsel %vm1709, %v1758, %v1760
        %v1762 = vrot.slane %v1386, 1
        %v1763 = vsel %vm1709, %v1760, %v1762
        %v1764 = vrot.slane %v1387, 1
        %v1765 = vsel %vm1709, %v1762, %v1764
        %v1766 = vrot.slane %v1388, 1
        %v1767 = vsel %vm1709, %v1764, %v1766
        %v1768 = vrot.slane %v1389, 1
        %v1769 = vsel %vm1709, %v1766, %v1768
        %v1770 = vrot.slane %v1390, 1
        %v1771 = vsel %vm1709, %v1768, %v1770
        %v1772 = vrot.slane %v1391, 1
        %v1773 = vsel %vm1709, %v1770, %v1772
        %v1774 = vrot.slane %v1392, 1
        %v1775 = vsel %vm1709, %v1772, %v1774
        %v1776 = vsel %vm1709, %v1774, %v1710
        %v1811 = vsel %vm1673, %v1711, 0.0
        %v1812 = vsel %vm1674, %v1713, 0.0
        %v1813 = vsel %vm1675, %v1715, 0.0
        %v1814 = vsel %vm1676, %v1717, 0.0
        %v1815 = vsel %vm1677, %v1719, 0.0
        %v1816 = vsel %vm1678, %v1721, 0.0
        %v1817 = vsel %vm1679, %v1723, 0.0
        %v1818 = vsel %vm1680, %v1725, 0.0
        %v1819 = vsel %vm1681, %v1727, 0.0
        %v1820 = vsel %vm1682, %v1729, 0.0
        %v1821 = vsel %vm1683, %v1731, 0.0
        %v1822 = vsel %vm1684, %v1733, 0.0
        %v1823 = vsel %vm1685, %v1735, 0.0
        %v1824 = vsel %vm1686, %v1737, 0.0
        %v1825 = vsel %vm1687, %v1739, 0.0
        %v1826 = vsel %vm1688, %v1741, 0.0
        %v1827 = vsel %vm1689, %v1743, 0.0
        %v1828 = vsel %vm1690, %v1745, 0.0
        %v1829 = vsel %vm1691, %v1747, 0.0
        %v1830 = vsel %vm1692, %v1749, 0.0
        %v1831 = vsel %vm1693, %v1751, 0.0
        %v1832 = vsel %vm1694, %v1753, 0.0
        %v1833 = vsel %vm1695, %v1755, 0.0
        %v1834 = vsel %vm1696, %v1757, 0.0
        %v1835 = vsel %vm1697, %v1759, 0.0
        %v1836 = vsel %vm1698, %v1761, 0.0
        %v1837 = vsel %vm1699, %v1763, 0.0
        %v1838 = vsel %vm1700, %v1765, 0.0
        %v1839 = vsel %vm1701, %v1767, 0.0
        %v1840 = vsel %vm1702, %v1769, 0.0
        %v1841 = vsel %vm1703, %v1771, 0.0
        %v1842 = vsel %vm1704, %v1773, 0.0
        %v1843 = vsel %vm1705, %v1775, 0.0
        %v1844 = vsel %vm1706, %v1776, 0.0
        %v1845 = vsel %vm1707, %v1711, 0.0
        %v1846 = vsel %vm1708, %v1711, 0.0
        %v1847 = vld [vmem:[%s8] sm:$0x1]
        %v1848 = vld [vmem:[%s7] sm:$0xff]
        %v1849 = vld [vmem:[%s7 + $0x8] sm:$0xff]
        %v1850 = vld [vmem:[%s7 + $0x10] sm:$0xff]
        %v1851 = vld [vmem:[%s7 + $0x18] sm:$0xff]
        %v1852 = vld [vmem:[%s7 + $0x20] sm:$0xff]
        %v1853 = vld [vmem:[%s7 + $0x28] sm:$0xff]
        %v1854 = vld [vmem:[%s7 + $0x30] sm:$0xff]
        %v1855 = vld [vmem:[%s7 + $0x38] sm:$0xff]
        %s1856 = scalar_lea.vmem %s7, 64
        %v1857 = vld [vmem:[%s1856] sm:$0xff]
        %v1858 = vld [vmem:[%s1856 + $0x8] sm:$0xff]
        %v1859 = vld [vmem:[%s1856 + $0x10] sm:$0xff]
        %v1860 = vld [vmem:[%s1856 + $0x18] sm:$0xff]
        %v1861 = vld [vmem:[%s1856 + $0x20] sm:$0xff]
        %v1862 = vld [vmem:[%s1856 + $0x28] sm:$0xff]
        %v1863 = vld [vmem:[%s1856 + $0x30] sm:$0xff]
        %v1864 = vld [vmem:[%s1856 + $0x38] sm:$0xff]
        %v1865 = vsel %vm465, 0.0, 0
        %v1867 = vsel %vm465, %v1361, 0
        %v1869 = vsel %vm465, %v1362, 0
        %v1871 = vsel %vm465, %v1363, 0
        %v1873 = vsel %vm465, %v1364, 0
        %v1875 = vsel %vm465, %v1365, 0
        %v1877 = vsel %vm465, %v1366, 0
        %v1879 = vsel %vm465, %v1367, 0
        %v1881 = vsel %vm465, %v1368, 0
        %v1883 = vsel %vm465, %v1369, 0
        %v1885 = vsel %vm465, %v1370, 0
        %v1887 = vsel %vm465, %v1371, 0
        %v1889 = vsel %vm465, %v1372, 0
        %v1891 = vsel %vm465, %v1373, 0
        %v1893 = vsel %vm465, %v1374, 0
        %1895 = vmatprep.subr.mxu0 0.0
        %1896 = vmatpush1.msra.mxu0 %v1857
        %1897 = vmatprep.subr.mxu0 0.0
        %1898 = vmatpush1.msra.mxu0 %v1858
        %1899 = vmatprep.subr.mxu0 0.0
        %1900 = vmatpush1.msra.mxu0 %v1859
        %1901 = vmatprep.subr.mxu0 0.0
        %1902 = vmatpush1.msra.mxu0 %v1860
        %1903 = vmatprep.subr.mxu0 0.0
        %1904 = vmatpush1.msra.mxu0 %v1861
        %1905 = vmatprep.subr.mxu0 0.0
        %1906 = vmatpush1.msra.mxu0 %v1862
        %1907 = vmatprep.subr.mxu0 0.0
        %1908 = vmatpush1.msra.mxu0 %v1863
        %1909 = vmatprep.subr.mxu0 0.0
        %1910 = vmatpush1.msra.mxu0 %v1864
        %1911 = vmatprep.subr.mxu0 0.0
        %1912 = vmatpush1.msra.mxu0 0.0
        %1913 = vmatprep.subr.mxu0 0.0
        %1914 = vmatpush1.msra.mxu0 0.0
        %1915 = vmatprep.subr.mxu0 0.0
        %1916 = vmatpush1.msra.mxu0 0.0
        %1917 = vmatprep.subr.mxu0 0.0
        %1918 = vmatpush1.msra.mxu0 0.0
        %1919 = vmatprep.subr.mxu0 0.0
        %1920 = vmatpush1.msra.mxu0 0.0
        %1921 = vmatprep.subr.mxu0 0.0
        %1922 = vmatpush1.msra.mxu0 0.0
        %1923 = vmatprep.subr.mxu0 0.0
        %1924 = vmatpush1.msra.mxu0 0.0
        %1925 = vmatprep.subr.mxu0 0.0
        %1926 = vmatpush1.msra.mxu0 0.0
        %1927 = vmatprep.subr.mxu0 0.0
        %1928 = vmatpush1.msra.mxu0 0.0
        %1929 = vmatprep.subr.mxu0 0.0
        %1930 = vmatpush1.msra.mxu0 0.0
        %1931 = vmatprep.subr.mxu0 0.0
        %1932 = vmatpush1.msra.mxu0 0.0
        %1933 = vmatprep.subr.mxu0 0.0
        %1934 = vmatpush1.msra.mxu0 0.0
        %1935 = vmatprep.subr.mxu0 0.0
        %1936 = vmatpush1.msra.mxu0 0.0
        %1937 = vmatprep.subr.mxu0 0.0
        %1938 = vmatpush1.msra.mxu0 0.0
        %1939 = vmatprep.subr.mxu0 0.0
        %1940 = vmatpush1.msra.mxu0 0.0
        %1941 = vmatprep.subr.mxu0 0.0
        %1942 = vmatpush1.msra.mxu0 0.0
        %1943 = vmatprep.subr.mxu0 0.0
        %1944 = vmatpush1.msra.mxu0 0.0
        %1945 = vmatprep.subr.mxu0 0.0
        %1946 = vmatpush1.msra.mxu0 0.0
        %1947 = vmatprep.subr.mxu0 0.0
        %1948 = vmatpush1.msra.mxu0 0.0
        %1949 = vmatprep.subr.mxu0 0.0
        %1950 = vmatpush1.msra.mxu0 0.0
        %1951 = vmatprep.subr.mxu0 0.0
        %1952 = vmatpush1.msra.mxu0 0.0
        %1953 = vmatprep.subr.mxu0 0.0
        %1954 = vmatpush1.msra.mxu0 0.0
        %1955 = vmatprep.subr.mxu0 0.0
        %1956 = vmatpush1.msra.mxu0 0.0
        %1957 = vmatprep.subr.mxu0 0.0
        %1958 = vmatpush1.msra.mxu0 0.0
        %1959 = vmatprep.mubr.f32.mxu0 0.0
        %1960 = vmatmul.mubr.f32.gmra.mrb[0].mxu0 %v1865
        %v1961 = vpop.f32.mrb[0].mxu0
        %v1962 = vadd.f32 0.0, %v1961
        %v1963 = vpop.f32.mrb[0].mxu0
        %1964 = vmatprep.mubr.f32.mxu0 0.0
        %1965 = vmatmul.mubr.f32.gmra.mrb[0].mxu0 %v1865
        %v1966 = vpop.f32.mrb[0].mxu0
        %v1967 = vadd.f32 0.0, %v1966
        %v1968 = vpop.f32.mrb[0].mxu0
        %1969 = vmatprep.mubr.f32.mxu0 0.0
        %1970 = vmatmul.mubr.f32.gmra.mrb[0].mxu0 %v1867
        %v1971 = vpop.f32.mrb[0].mxu0
        %v1972 = vadd.f32 0.0, %v1971
        %v1973 = vpop.f32.mrb[0].mxu0
        %1974 = vmatprep.mubr.f32.mxu0 0.0
        %1975 = vmatmul.mubr.f32.gmra.mrb[0].mxu0 %v1869
        %v1976 = vpop.f32.mrb[0].mxu0
        %v1977 = vadd.f32 0.0, %v1976
        %v1978 = vpop.f32.mrb[0].mxu0
        %1979 = vmatprep.mubr.f32.mxu0 0.0
        %1980 = vmatmul.mubr.f32.gmra.mrb[0].mxu0 %v1871
        %v1981 = vpop.f32.mrb[0].mxu0
        %v1982 = vadd.f32 0.0, %v1981
        %v1983 = vpop.f32.mrb[0].mxu0
        %1984 = vmatprep.mubr.f32.mxu0 0.0
        %1985 = vmatmul.mubr.f32.gmra.mrb[0].mxu0 %v1873
        %v1986 = vpop.f32.mrb[0].mxu0
        %v1987 = vadd.f32 0.0, %v1986
        %v1988 = vpop.f32.mrb[0].mxu0
        %1989 = vmatprep.mubr.f32.mxu0 0.0
        %1990 = vmatmul.mubr.f32.gmra.mrb[0].mxu0 %v1875
        %v1991 = vpop.f32.mrb[0].mxu0
        %v1992 = vadd.f32 0.0, %v1991
        %v1993 = vpop.f32.mrb[0].mxu0
        %1994 = vmatprep.mubr.f32.mxu0 0.0
        %1995 = vmatmul.mubr.f32.gmra.mrb[0].mxu0 %v1877
        %v1996 = vpop.f32.mrb[0].mxu0
        %v1997 = vadd.f32 0.0, %v1996
        %v1998 = vpop.f32.mrb[0].mxu0
        %1999 = vmatprep.mubr.f32.mxu0 0.0
        %2000 = vmatmul.mubr.f32.gmra.mrb[0].mxu0 %v1879
        %v2001 = vpop.f32.mrb[0].mxu0
        %v2002 = vadd.f32 0.0, %v2001
        %v2003 = vpop.f32.mrb[0].mxu0
        %2004 = vmatprep.mubr.f32.mxu0 0.0
        %2005 = vmatmul.mubr.f32.gmra.mrb[0].mxu0 %v1881
        %v2006 = vpop.f32.mrb[0].mxu0
        %v2007 = vadd.f32 0.0, %v2006
        %v2008 = vpop.f32.mrb[0].mxu0
        %2009 = vmatprep.mubr.f32.mxu0 0.0
        %2010 = vmatmul.mubr.f32.gmra.mrb[0].mxu0 %v1883
        %v2011 = vpop.f32.mrb[0].mxu0
        %v2012 = vadd.f32 0.0, %v2011
        %v2013 = vpop.f32.mrb[0].mxu0
        %2014 = vmatprep.mubr.f32.mxu0 0.0
        %2015 = vmatmul.mubr.f32.gmra.mrb[0].mxu0 %v1885
        %v2016 = vpop.f32.mrb[0].mxu0
        %v2017 = vadd.f32 0.0, %v2016
        %v2018 = vpop.f32.mrb[0].mxu0
        %2019 = vmatprep.mubr.f32.mxu0 0.0
        %2020 = vmatmul.mubr.f32.gmra.mrb[0].mxu0 %v1887
        %v2021 = vpop.f32.mrb[0].mxu0
        %v2022 = vadd.f32 0.0, %v2021
        %v2023 = vpop.f32.mrb[0].mxu0
        %2024 = vmatprep.mubr.f32.mxu0 0.0
        %2025 = vmatmul.mubr.f32.gmra.mrb[0].mxu0 %v1889
        %v2026 = vpop.f32.mrb[0].mxu0
        %v2027 = vadd.f32 0.0, %v2026
        %v2028 = vpop.f32.mrb[0].mxu0
        %2029 = vmatprep.mubr.f32.mxu0 0.0
        %2030 = vmatmul.mubr.f32.gmra.mrb[0].mxu0 %v1891
        %v2031 = vpop.f32.mrb[0].mxu0
        %v2032 = vadd.f32 0.0, %v2031
        %v2033 = vpop.f32.mrb[0].mxu0
        %2034 = vmatprep.mubr.f32.mxu0 0.0
        %2035 = vmatmul.mubr.f32.gmra.mrb[0].mxu0 %v1893
        %v2036 = vpop.f32.mrb[0].mxu0
        %v2037 = vadd.f32 0.0, %v2036
        %v2038 = vpop.f32.mrb[0].mxu0
        %2039 = vdwg.mxu0
        %v2041 = vsel %vm465, %v1637, 0
        %v2044 = vsel %vm465, %v1638, 0
        %v2047 = vsel %vm465, %v1639, 0
        %v2050 = vsel %vm465, %v1640, 0
        %v2053 = vsel %vm465, %v1641, 0
        %v2056 = vsel %vm465, %v1642, 0
        %v2059 = vsel %vm465, %v1643, 0
        %v2062 = vsel %vm465, %v1644, 0
        %v2065 = vsel %vm465, %v1645, 0
        %v2068 = vsel %vm465, %v1646, 0
        %v2071 = vsel %vm465, %v1647, 0
        %v2074 = vsel %vm465, %v1648, 0
        %v2077 = vsel %vm465, %v1649, 0
        %v2080 = vsel %vm465, %v1650, 0
        %v2083 = vsel %vm465, %v1651, 0
        %v2086 = vsel %vm465, %v1652, 0
        %2088 = vmatprep.subr.mxu0 0.0
        %2089 = vmatpush1.msra.mxu0 %v1848
        %2090 = vmatprep.subr.mxu0 0.0
        %2091 = vmatpush1.msra.mxu0 %v1849
        %2092 = vmatprep.subr.mxu0 0.0
        %2093 = vmatpush1.msra.mxu0 %v1850
        %2094 = vmatprep.subr.mxu0 0.0
        %2095 = vmatpush1.msra.mxu0 %v1851
        %2096 = vmatprep.subr.mxu0 0.0
        %2097 = vmatpush1.msra.mxu0 %v1852
        %2098 = vmatprep.subr.mxu0 0.0
        %2099 = vmatpush1.msra.mxu0 %v1853
        %2100 = vmatprep.subr.mxu0 0.0
        %2101 = vmatpush1.msra.mxu0 %v1854
        %2102 = vmatprep.subr.mxu0 0.0
        %2103 = vmatpush1.msra.mxu0 %v1855
        %2104 = vmatprep.subr.mxu0 0.0
        %2105 = vmatpush1.msra.mxu0 0.0
        %2106 = vmatprep.subr.mxu0 0.0
        %2107 = vmatpush1.msra.mxu0 0.0
        %2108 = vmatprep.subr.mxu0 0.0
        %2109 = vmatpush1.msra.mxu0 0.0
        %2110 = vmatprep.subr.mxu0 0.0
        %2111 = vmatpush1.msra.mxu0 0.0
        %2112 = vmatprep.subr.mxu0 0.0
        %2113 = vmatpush1.msra.mxu0 0.0
        %2114 = vmatprep.subr.mxu0 0.0
        %2115 = vmatpush1.msra.mxu0 0.0
        %2116 = vmatprep.subr.mxu0 0.0
        %2117 = vmatpush1.msra.mxu0 0.0
        %2118 = vmatprep.subr.mxu0 0.0
        %2119 = vmatpush1.msra.mxu0 0.0
        %2120 = vmatprep.subr.mxu0 0.0
        %2121 = vmatpush1.msra.mxu0 0.0
        %2122 = vmatprep.subr.mxu0 0.0
        %2123 = vmatpush1.msra.mxu0 0.0
        %2124 = vmatprep.subr.mxu0 0.0
        %2125 = vmatpush1.msra.mxu0 0.0
        %2126 = vmatprep.subr.mxu0 0.0
        %2127 = vmatpush1.msra.mxu0 0.0
        %2128 = vmatprep.subr.mxu0 0.0
        %2129 = vmatpush1.msra.mxu0 0.0
        %2130 = vmatprep.subr.mxu0 0.0
        %2131 = vmatpush1.msra.mxu0 0.0
        %2132 = vmatprep.subr.mxu0 0.0
        %2133 = vmatpush1.msra.mxu0 0.0
        %2134 = vmatprep.subr.mxu0 0.0
        %2135 = vmatpush1.msra.mxu0 0.0
        %2136 = vmatprep.subr.mxu0 0.0
        %2137 = vmatpush1.msra.mxu0 0.0
        %2138 = vmatprep.subr.mxu0 0.0
        %2139 = vmatpush1.msra.mxu0 0.0
        %2140 = vmatprep.subr.mxu0 0.0
        %2141 = vmatpush1.msra.mxu0 0.0
        %2142 = vmatprep.subr.mxu0 0.0
        %2143 = vmatpush1.msra.mxu0 0.0
        %2144 = vmatprep.subr.mxu0 0.0
        %2145 = vmatpush1.msra.mxu0 0.0
        %2146 = vmatprep.subr.mxu0 0.0
        %2147 = vmatpush1.msra.mxu0 0.0
        %2148 = vmatprep.subr.mxu0 0.0
        %2149 = vmatpush1.msra.mxu0 0.0
        %2150 = vmatprep.subr.mxu0 0.0
        %2151 = vmatpush1.msra.mxu0 0.0
        %2152 = vmatprep.mubr.f32.mxu0 0.0
        %2153 = vmatmul.mubr.f32.gmra.mrb[0].mxu0 %v2041
        %v2154 = vpop.f32.mrb[0].mxu0
        %v2155 = vadd.f32 %v1962, %v2154
        %v2156 = vpop.f32.mrb[0].mxu0
        %2157 = vmatprep.mubr.f32.mxu0 0.0
        %2158 = vmatmul.mubr.f32.gmra.mrb[0].mxu0 %v2044
        %v2159 = vpop.f32.mrb[0].mxu0
        %v2160 = vadd.f32 %v1967, %v2159
        %v2161 = vpop.f32.mrb[0].mxu0
        %2162 = vmatprep.mubr.f32.mxu0 0.0
        %2163 = vmatmul.mubr.f32.gmra.mrb[0].mxu0 %v2047
        %v2164 = vpop.f32.mrb[0].mxu0
        %v2165 = vadd.f32 %v1972, %v2164
        %v2166 = vpop.f32.mrb[0].mxu0
        %2167 = vmatprep.mubr.f32.mxu0 0.0
        %2168 = vmatmul.mubr.f32.gmra.mrb[0].mxu0 %v2050
        %v2169 = vpop.f32.mrb[0].mxu0
        %v2170 = vadd.f32 %v1977, %v2169
        %v2171 = vpop.f32.mrb[0].mxu0
        %2172 = vmatprep.mubr.f32.mxu0 0.0
        %2173 = vmatmul.mubr.f32.gmra.mrb[0].mxu0 %v2053
        %v2174 = vpop.f32.mrb[0].mxu0
        %v2175 = vadd.f32 %v1982, %v2174
        %v2176 = vpop.f32.mrb[0].mxu0
        %2177 = vmatprep.mubr.f32.mxu0 0.0
        %2178 = vmatmul.mubr.f32.gmra.mrb[0].mxu0 %v2056
        %v2179 = vpop.f32.mrb[0].mxu0
        %v2180 = vadd.f32 %v1987, %v2179
        %v2181 = vpop.f32.mrb[0].mxu0
        %2182 = vmatprep.mubr.f32.mxu0 0.0
        %2183 = vmatmul.mubr.f32.gmra.mrb[0].mxu0 %v2059
        %v2184 = vpop.f32.mrb[0].mxu0
        %v2185 = vadd.f32 %v1992, %v2184
        %v2186 = vpop.f32.mrb[0].mxu0
        %2187 = vmatprep.mubr.f32.mxu0 0.0
        %2188 = vmatmul.mubr.f32.gmra.mrb[0].mxu0 %v2062
        %v2189 = vpop.f32.mrb[0].mxu0
        %v2190 = vadd.f32 %v1997, %v2189
        %v2191 = vpop.f32.mrb[0].mxu0
        %2192 = vmatprep.mubr.f32.mxu0 0.0
        %2193 = vmatmul.mubr.f32.gmra.mrb[0].mxu0 %v2065
        %v2194 = vpop.f32.mrb[0].mxu0
        %v2195 = vadd.f32 %v2002, %v2194
        %v2196 = vpop.f32.mrb[0].mxu0
        %2197 = vmatprep.mubr.f32.mxu0 0.0
        %2198 = vmatmul.mubr.f32.gmra.mrb[0].mxu0 %v2068
        %v2199 = vpop.f32.mrb[0].mxu0
        %v2200 = vadd.f32 %v2007, %v2199
        %v2201 = vpop.f32.mrb[0].mxu0
        %2202 = vmatprep.mubr.f32.mxu0 0.0
        %2203 = vmatmul.mubr.f32.gmra.mrb[0].mxu0 %v2071
        %v2204 = vpop.f32.mrb[0].mxu0
        %v2205 = vadd.f32 %v2012, %v2204
        %v2206 = vpop.f32.mrb[0].mxu0
        %2207 = vmatprep.mubr.f32.mxu0 0.0
        %2208 = vmatmul.mubr.f32.gmra.mrb[0].mxu0 %v2074
        %v2209 = vpop.f32.mrb[0].mxu0
        %v2210 = vadd.f32 %v2017, %v2209
        %v2211 = vpop.f32.mrb[0].mxu0
        %2212 = vmatprep.mubr.f32.mxu0 0.0
        %2213 = vmatmul.mubr.f32.gmra.mrb[0].mxu0 %v2077
        %v2214 = vpop.f32.mrb[0].mxu0
        %v2215 = vadd.f32 %v2022, %v2214
        %v2216 = vpop.f32.mrb[0].mxu0
        %2217 = vmatprep.mubr.f32.mxu0 0.0
        %2218 = vmatmul.mubr.f32.gmra.mrb[0].mxu0 %v2080
        %v2219 = vpop.f32.mrb[0].mxu0
        %v2220 = vadd.f32 %v2027, %v2219
        %v2221 = vpop.f32.mrb[0].mxu0
        %2222 = vmatprep.mubr.f32.mxu0 0.0
        %2223 = vmatmul.mubr.f32.gmra.mrb[0].mxu0 %v2083
        %v2224 = vpop.f32.mrb[0].mxu0
        %v2225 = vadd.f32 %v2032, %v2224
        %v2226 = vpop.f32.mrb[0].mxu0
        %2227 = vmatprep.mubr.f32.mxu0 0.0
        %2228 = vmatmul.mubr.f32.gmra.mrb[0].mxu0 %v2086
        %v2229 = vpop.f32.mrb[0].mxu0
        %v2230 = vadd.f32 %v2037, %v2229
        %v2231 = vpop.f32.mrb[0].mxu0
        %2232 = vdwg.mxu0
        %s2233 = scalar_lea.vmem %s7, 128
        %v2234 = vld [vmem:[%s2233] sm:$0xff]
        %v2235 = vld [vmem:[%s2233 + $0x8] sm:$0xff]
        %v2236 = vld [vmem:[%s2233 + $0x10] sm:$0xff]
        %v2237 = vld [vmem:[%s2233 + $0x18] sm:$0xff]
        %v2238 = vld [vmem:[%s2233 + $0x20] sm:$0xff]
        %v2239 = vld [vmem:[%s2233 + $0x28] sm:$0xff]
        %v2240 = vld [vmem:[%s2233 + $0x30] sm:$0xff]
        %v2241 = vld [vmem:[%s2233 + $0x38] sm:$0xff]
        %v2243 = vsel %vm465, %v1811, 0
        %v2246 = vsel %vm465, %v1812, 0
        %v2249 = vsel %vm465, %v1813, 0
        %v2252 = vsel %vm465, %v1814, 0
        %v2255 = vsel %vm465, %v1815, 0
        %v2258 = vsel %vm465, %v1816, 0
        %v2261 = vsel %vm465, %v1817, 0
        %v2264 = vsel %vm465, %v1818, 0
        %v2267 = vsel %vm465, %v1819, 0
        %v2270 = vsel %vm465, %v1820, 0
        %v2273 = vsel %vm465, %v1821, 0
        %v2276 = vsel %vm465, %v1822, 0
        %v2279 = vsel %vm465, %v1823, 0
        %v2282 = vsel %vm465, %v1824, 0
        %v2285 = vsel %vm465, %v1825, 0
        %v2288 = vsel %vm465, %v1826, 0
        %2290 = vmatprep.subr.mxu0 0.0
        %2291 = vmatpush1.msra.mxu0 %v2234
        %2292 = vmatprep.subr.mxu0 0.0
        %2293 = vmatpush1.msra.mxu0 %v2235
        %2294 = vmatprep.subr.mxu0 0.0
        %2295 = vmatpush1.msra.mxu0 %v2236
        %2296 = vmatprep.subr.mxu0 0.0
        %2297 = vmatpush1.msra.mxu0 %v2237
        %2298 = vmatprep.subr.mxu0 0.0
        %2299 = vmatpush1.msra.mxu0 %v2238
        %2300 = vmatprep.subr.mxu0 0.0
        %2301 = vmatpush1.msra.mxu0 %v2239
        %2302 = vmatprep.subr.mxu0 0.0
        %2303 = vmatpush1.msra.mxu0 %v2240
        %2304 = vmatprep.subr.mxu0 0.0
        %2305 = vmatpush1.msra.mxu0 %v2241
        %2306 = vmatprep.subr.mxu0 0.0
        %2307 = vmatpush1.msra.mxu0 0.0
        %2308 = vmatprep.subr.mxu0 0.0
        %2309 = vmatpush1.msra.mxu0 0.0
        %2310 = vmatprep.subr.mxu0 0.0
        %2311 = vmatpush1.msra.mxu0 0.0
        %2312 = vmatprep.subr.mxu0 0.0
        %2313 = vmatpush1.msra.mxu0 0.0
        %2314 = vmatprep.subr.mxu0 0.0
        %2315 = vmatpush1.msra.mxu0 0.0
        %2316 = vmatprep.subr.mxu0 0.0
        %2317 = vmatpush1.msra.mxu0 0.0
        %2318 = vmatprep.subr.mxu0 0.0
        %2319 = vmatpush1.msra.mxu0 0.0
        %2320 = vmatprep.subr.mxu0 0.0
        %2321 = vmatpush1.msra.mxu0 0.0
        %2322 = vmatprep.subr.mxu0 0.0
        %2323 = vmatpush1.msra.mxu0 0.0
        %2324 = vmatprep.subr.mxu0 0.0
        %2325 = vmatpush1.msra.mxu0 0.0
        %2326 = vmatprep.subr.mxu0 0.0
        %2327 = vmatpush1.msra.mxu0 0.0
        %2328 = vmatprep.subr.mxu0 0.0
        %2329 = vmatpush1.msra.mxu0 0.0
        %2330 = vmatprep.subr.mxu0 0.0
        %2331 = vmatpush1.msra.mxu0 0.0
        %2332 = vmatprep.subr.mxu0 0.0
        %2333 = vmatpush1.msra.mxu0 0.0
        %2334 = vmatprep.subr.mxu0 0.0
        %2335 = vmatpush1.msra.mxu0 0.0
        %2336 = vmatprep.subr.mxu0 0.0
        %2337 = vmatpush1.msra.mxu0 0.0
        %2338 = vmatprep.subr.mxu0 0.0
        %2339 = vmatpush1.msra.mxu0 0.0
        %2340 = vmatprep.subr.mxu0 0.0
        %2341 = vmatpush1.msra.mxu0 0.0
        %2342 = vmatprep.subr.mxu0 0.0
        %2343 = vmatpush1.msra.mxu0 0.0
        %2344 = vmatprep.subr.mxu0 0.0
        %2345 = vmatpush1.msra.mxu0 0.0
        %2346 = vmatprep.subr.mxu0 0.0
        %2347 = vmatpush1.msra.mxu0 0.0
        %2348 = vmatprep.subr.mxu0 0.0
        %2349 = vmatpush1.msra.mxu0 0.0
        %2350 = vmatprep.subr.mxu0 0.0
        %2351 = vmatpush1.msra.mxu0 0.0
        %2352 = vmatprep.subr.mxu0 0.0
        %2353 = vmatpush1.msra.mxu0 0.0
        %2354 = vmatprep.mubr.f32.mxu0 0.0
        %2355 = vmatmul.mubr.f32.gmra.mrb[0].mxu0 %v2243
        %v2356 = vpop.f32.mrb[0].mxu0
        %v2357 = vadd.f32 0.0, %v2356
        %v2358 = vpop.f32.mrb[0].mxu0
        %2359 = vmatprep.mubr.f32.mxu0 0.0
        %2360 = vmatmul.mubr.f32.gmra.mrb[0].mxu0 %v2246
        %v2361 = vpop.f32.mrb[0].mxu0
        %v2362 = vadd.f32 0.0, %v2361
        %v2363 = vpop.f32.mrb[0].mxu0
        %2364 = vmatprep.mubr.f32.mxu0 0.0
        %2365 = vmatmul.mubr.f32.gmra.mrb[0].mxu0 %v2249
        %v2366 = vpop.f32.mrb[0].mxu0
        %v2367 = vadd.f32 0.0, %v2366
        %v2368 = vpop.f32.mrb[0].mxu0
        %2369 = vmatprep.mubr.f32.mxu0 0.0
        %2370 = vmatmul.mubr.f32.gmra.mrb[0].mxu0 %v2252
        %v2371 = vpop.f32.mrb[0].mxu0
        %v2372 = vadd.f32 0.0, %v2371
        %v2373 = vpop.f32.mrb[0].mxu0
        %2374 = vmatprep.mubr.f32.mxu0 0.0
        %2375 = vmatmul.mubr.f32.gmra.mrb[0].mxu0 %v2255
        %v2376 = vpop.f32.mrb[0].mxu0
        %v2377 = vadd.f32 0.0, %v2376
        %v2378 = vpop.f32.mrb[0].mxu0
        %2379 = vmatprep.mubr.f32.mxu0 0.0
        %2380 = vmatmul.mubr.f32.gmra.mrb[0].mxu0 %v2258
        %v2381 = vpop.f32.mrb[0].mxu0
        %v2382 = vadd.f32 0.0, %v2381
        %v2383 = vpop.f32.mrb[0].mxu0
        %2384 = vmatprep.mubr.f32.mxu0 0.0
        %2385 = vmatmul.mubr.f32.gmra.mrb[0].mxu0 %v2261
        %v2386 = vpop.f32.mrb[0].mxu0
        %v2387 = vadd.f32 0.0, %v2386
        %v2388 = vpop.f32.mrb[0].mxu0
        %2389 = vmatprep.mubr.f32.mxu0 0.0
        %2390 = vmatmul.mubr.f32.gmra.mrb[0].mxu0 %v2264
        %v2391 = vpop.f32.mrb[0].mxu0
        %v2392 = vadd.f32 0.0, %v2391
        %v2393 = vpop.f32.mrb[0].mxu0
        %2394 = vmatprep.mubr.f32.mxu0 0.0
        %2395 = vmatmul.mubr.f32.gmra.mrb[0].mxu0 %v2267
        %v2396 = vpop.f32.mrb[0].mxu0
        %v2397 = vadd.f32 0.0, %v2396
        %v2398 = vpop.f32.mrb[0].mxu0
        %2399 = vmatprep.mubr.f32.mxu0 0.0
        %2400 = vmatmul.mubr.f32.gmra.mrb[0].mxu0 %v2270
        %v2401 = vpop.f32.mrb[0].mxu0
        %v2402 = vadd.f32 0.0, %v2401
        %v2403 = vpop.f32.mrb[0].mxu0
        %2404 = vmatprep.mubr.f32.mxu0 0.0
        %2405 = vmatmul.mubr.f32.gmra.mrb[0].mxu0 %v2273
        %v2406 = vpop.f32.mrb[0].mxu0
        %v2407 = vadd.f32 0.0, %v2406
        %v2408 = vpop.f32.mrb[0].mxu0
        %2409 = vmatprep.mubr.f32.mxu0 0.0
        %2410 = vmatmul.mubr.f32.gmra.mrb[0].mxu0 %v2276
        %v2411 = vpop.f32.mrb[0].mxu0
        %v2412 = vadd.f32 0.0, %v2411
        %v2413 = vpop.f32.mrb[0].mxu0
        %2414 = vmatprep.mubr.f32.mxu0 0.0
        %2415 = vmatmul.mubr.f32.gmra.mrb[0].mxu0 %v2279
        %v2416 = vpop.f32.mrb[0].mxu0
        %v2417 = vadd.f32 0.0, %v2416
        %v2418 = vpop.f32.mrb[0].mxu0
        %2419 = vmatprep.mubr.f32.mxu0 0.0
        %2420 = vmatmul.mubr.f32.gmra.mrb[0].mxu0 %v2282
        %v2421 = vpop.f32.mrb[0].mxu0
        %v2422 = vadd.f32 0.0, %v2421
        %v2423 = vpop.f32.mrb[0].mxu0
        %2424 = vmatprep.mubr.f32.mxu0 0.0
        %2425 = vmatmul.mubr.f32.gmra.mrb[0].mxu0 %v2285
        %v2426 = vpop.f32.mrb[0].mxu0
        %v2427 = vadd.f32 0.0, %v2426
        %v2428 = vpop.f32.mrb[0].mxu0
        %2429 = vmatprep.mubr.f32.mxu0 0.0
        %2430 = vmatmul.mubr.f32.gmra.mrb[0].mxu0 %v2288
        %v2431 = vpop.f32.mrb[0].mxu0
        %v2432 = vadd.f32 0.0, %v2431
        %v2433 = vpop.f32.mrb[0].mxu0
        %2434 = vdwg.mxu0
        %v2435 = vadd.f32 %v2155, %v2357
        %v2436 = vadd.f32 %v2160, %v2362
        %v2437 = vadd.f32 %v2165, %v2367
        %v2438 = vadd.f32 %v2170, %v2372
        %v2439 = vadd.f32 %v2175, %v2377
        %v2440 = vadd.f32 %v2180, %v2382
        %v2441 = vadd.f32 %v2185, %v2387
        %v2442 = vadd.f32 %v2190, %v2392
        %v2443 = vadd.f32 %v2195, %v2397
        %v2444 = vadd.f32 %v2200, %v2402
        %v2445 = vadd.f32 %v2205, %v2407
        %v2446 = vadd.f32 %v2210, %v2412
        %v2447 = vadd.f32 %v2215, %v2417
        %v2448 = vadd.f32 %v2220, %v2422
        %v2449 = vadd.f32 %v2225, %v2427
        %v2450 = vadd.f32 %v2230, %v2432
        %s2451 = scalar_lea.vmem %s7, 192
        %v2452 = vld [vmem:[%s2451] sm:$0xff]
        %v2453 = vld [vmem:[%s2451 + $0x8] sm:$0xff]
        %v2454 = vld [vmem:[%s2451 + $0x10] sm:$0xff]
        %v2455 = vld [vmem:[%s2451 + $0x18] sm:$0xff]
        %v2456 = vld [vmem:[%s2451 + $0x20] sm:$0xff]
        %v2457 = vld [vmem:[%s2451 + $0x28] sm:$0xff]
        %v2458 = vld [vmem:[%s2451 + $0x30] sm:$0xff]
        %v2459 = vld [vmem:[%s2451 + $0x38] sm:$0xff]
        %v2461 = vsel %vm465, %v1653, 0
        %v2464 = vsel %vm465, %v1654, 0
        %2466 = vmatprep.subr.mxu0 0.0
        %2467 = vmatpush1.msra.mxu0 %v2452
        %2468 = vmatprep.subr.mxu0 0.0
        %2469 = vmatpush1.msra.mxu0 %v2453
        %2470 = vmatprep.subr.mxu0 0.0
        %2471 = vmatpush1.msra.mxu0 %v2454
        %2472 = vmatprep.subr.mxu0 0.0
        %2473 = vmatpush1.msra.mxu0 %v2455
        %2474 = vmatprep.subr.mxu0 0.0
        %2475 = vmatpush1.msra.mxu0 %v2456
        %2476 = vmatprep.subr.mxu0 0.0
        %2477 = vmatpush1.msra.mxu0 %v2457
        %2478 = vmatprep.subr.mxu0 0.0
        %2479 = vmatpush1.msra.mxu0 %v2458
        %2480 = vmatprep.subr.mxu0 0.0
        %2481 = vmatpush1.msra.mxu0 %v2459
        %2482 = vmatprep.subr.mxu0 0.0
        %2483 = vmatpush1.msra.mxu0 0.0
        %2484 = vmatprep.subr.mxu0 0.0
        %2485 = vmatpush1.msra.mxu0 0.0
        %2486 = vmatprep.subr.mxu0 0.0
        %2487 = vmatpush1.msra.mxu0 0.0
        %2488 = vmatprep.subr.mxu0 0.0
        %2489 = vmatpush1.msra.mxu0 0.0
        %2490 = vmatprep.subr.mxu0 0.0
        %2491 = vmatpush1.msra.mxu0 0.0
        %2492 = vmatprep.subr.mxu0 0.0
        %2493 = vmatpush1.msra.mxu0 0.0
        %2494 = vmatprep.subr.mxu0 0.0
        %2495 = vmatpush1.msra.mxu0 0.0
        %2496 = vmatprep.subr.mxu0 0.0
        %2497 = vmatpush1.msra.mxu0 0.0
        %2498 = vmatprep.subr.mxu0 0.0
        %2499 = vmatpush1.msra.mxu0 0.0
        %2500 = vmatprep.subr.mxu0 0.0
        %2501 = vmatpush1.msra.mxu0 0.0
        %2502 = vmatprep.subr.mxu0 0.0
        %2503 = vmatpush1.msra.mxu0 0.0
        %2504 = vmatprep.subr.mxu0 0.0
        %2505 = vmatpush1.msra.mxu0 0.0
        %2506 = vmatprep.subr.mxu0 0.0
        %2507 = vmatpush1.msra.mxu0 0.0
        %2508 = vmatprep.subr.mxu0 0.0
        %2509 = vmatpush1.msra.mxu0 0.0
        %2510 = vmatprep.subr.mxu0 0.0
        %2511 = vmatpush1.msra.mxu0 0.0
        %2512 = vmatprep.subr.mxu0 0.0
        %2513 = vmatpush1.msra.mxu0 0.0
        %2514 = vmatprep.subr.mxu0 0.0
        %2515 = vmatpush1.msra.mxu0 0.0
        %2516 = vmatprep.subr.mxu0 0.0
        %2517 = vmatpush1.msra.mxu0 0.0
        %2518 = vmatprep.subr.mxu0 0.0
        %2519 = vmatpush1.msra.mxu0 0.0
        %2520 = vmatprep.subr.mxu0 0.0
        %2521 = vmatpush1.msra.mxu0 0.0
        %2522 = vmatprep.subr.mxu0 0.0
        %2523 = vmatpush1.msra.mxu0 0.0
        %2524 = vmatprep.subr.mxu0 0.0
        %2525 = vmatpush1.msra.mxu0 0.0
        %2526 = vmatprep.subr.mxu0 0.0
        %2527 = vmatpush1.msra.mxu0 0.0
        %2528 = vmatprep.subr.mxu0 0.0
        %2529 = vmatpush1.msra.mxu0 0.0
        %2530 = vmatprep.mubr.f32.mxu0 0.0
        %2531 = vmatmul.mubr.f32.gmra.mrb[0].mxu0 %v2047
        %v2532 = vpop.f32.mrb[0].mxu0
        %v2533 = vadd.f32 0.0, %v2532
        %v2534 = vpop.f32.mrb[0].mxu0
        %2535 = vmatprep.mubr.f32.mxu0 0.0
        %2536 = vmatmul.mubr.f32.gmra.mrb[0].mxu0 %v2050
        %v2537 = vpop.f32.mrb[0].mxu0
        %v2538 = vadd.f32 0.0, %v2537
        %v2539 = vpop.f32.mrb[0].mxu0
        %2540 = vmatprep.mubr.f32.mxu0 0.0
        %2541 = vmatmul.mubr.f32.gmra.mrb[0].mxu0 %v2053
        %v2542 = vpop.f32.mrb[0].mxu0
        %v2543 = vadd.f32 0.0, %v2542
        %v2544 = vpop.f32.mrb[0].mxu0
        %2545 = vmatprep.mubr.f32.mxu0 0.0
        %2546 = vmatmul.mubr.f32.gmra.mrb[0].mxu0 %v2056
        %v2547 = vpop.f32.mrb[0].mxu0
        %v2548 = vadd.f32 0.0, %v2547
        %v2549 = vpop.f32.mrb[0].mxu0
        %2550 = vmatprep.mubr.f32.mxu0 0.0
        %2551 = vmatmul.mubr.f32.gmra.mrb[0].mxu0 %v2059
        %v2552 = vpop.f32.mrb[0].mxu0
        %v2553 = vadd.f32 0.0, %v2552
        %v2554 = vpop.f32.mrb[0].mxu0
        %2555 = vmatprep.mubr.f32.mxu0 0.0
        %2556 = vmatmul.mubr.f32.gmra.mrb[0].mxu0 %v2062
        %v2557 = vpop.f32.mrb[0].mxu0
        %v2558 = vadd.f32 0.0, %v2557
        %v2559 = vpop.f32.mrb[0].mxu0
        %2560 = vmatprep.mubr.f32.mxu0 0.0
        %2561 = vmatmul.mubr.f32.gmra.mrb[0].mxu0 %v2065
        %v2562 = vpop.f32.mrb[0].mxu0
        %v2563 = vadd.f32 0.0, %v2562
        %v2564 = vpop.f32.mrb[0].mxu0
        %2565 = vmatprep.mubr.f32.mxu0 0.0
        %2566 = vmatmul.mubr.f32.gmra.mrb[0].mxu0 %v2068
        %v2567 = vpop.f32.mrb[0].mxu0
        %v2568 = vadd.f32 0.0, %v2567
        %v2569 = vpop.f32.mrb[0].mxu0
        %2570 = vmatprep.mubr.f32.mxu0 0.0
        %2571 = vmatmul.mubr.f32.gmra.mrb[0].mxu0 %v2071
        %v2572 = vpop.f32.mrb[0].mxu0
        %v2573 = vadd.f32 0.0, %v2572
        %v2574 = vpop.f32.mrb[0].mxu0
        %2575 = vmatprep.mubr.f32.mxu0 0.0
        %2576 = vmatmul.mubr.f32.gmra.mrb[0].mxu0 %v2074
        %v2577 = vpop.f32.mrb[0].mxu0
        %v2578 = vadd.f32 0.0, %v2577
        %v2579 = vpop.f32.mrb[0].mxu0
        %2580 = vmatprep.mubr.f32.mxu0 0.0
        %2581 = vmatmul.mubr.f32.gmra.mrb[0].mxu0 %v2077
        %v2582 = vpop.f32.mrb[0].mxu0
        %v2583 = vadd.f32 0.0, %v2582
        %v2584 = vpop.f32.mrb[0].mxu0
        %2585 = vmatprep.mubr.f32.mxu0 0.0
        %2586 = vmatmul.mubr.f32.gmra.mrb[0].mxu0 %v2080
        %v2587 = vpop.f32.mrb[0].mxu0
        %v2588 = vadd.f32 0.0, %v2587
        %v2589 = vpop.f32.mrb[0].mxu0
        %2590 = vmatprep.mubr.f32.mxu0 0.0
        %2591 = vmatmul.mubr.f32.gmra.mrb[0].mxu0 %v2083
        %v2592 = vpop.f32.mrb[0].mxu0
        %v2593 = vadd.f32 0.0, %v2592
        %v2594 = vpop.f32.mrb[0].mxu0
        %2595 = vmatprep.mubr.f32.mxu0 0.0
        %2596 = vmatmul.mubr.f32.gmra.mrb[0].mxu0 %v2086
        %v2597 = vpop.f32.mrb[0].mxu0
        %v2598 = vadd.f32 0.0, %v2597
        %v2599 = vpop.f32.mrb[0].mxu0
        %2600 = vmatprep.mubr.f32.mxu0 0.0
        %2601 = vmatmul.mubr.f32.gmra.mrb[0].mxu0 %v2461
        %v2602 = vpop.f32.mrb[0].mxu0
        %v2603 = vadd.f32 0.0, %v2602
        %v2604 = vpop.f32.mrb[0].mxu0
        %2605 = vmatprep.mubr.f32.mxu0 0.0
        %2606 = vmatmul.mubr.f32.gmra.mrb[0].mxu0 %v2464
        %v2607 = vpop.f32.mrb[0].mxu0
        %v2608 = vadd.f32 0.0, %v2607
        %v2609 = vpop.f32.mrb[0].mxu0
        %2610 = vdwg.mxu0
        %v2611 = vadd.f32 %v2435, %v2533
        %v2612 = vadd.f32 %v2436, %v2538
        %v2613 = vadd.f32 %v2437, %v2543
        %v2614 = vadd.f32 %v2438, %v2548
        %v2615 = vadd.f32 %v2439, %v2553
        %v2616 = vadd.f32 %v2440, %v2558
        %v2617 = vadd.f32 %v2441, %v2563
        %v2618 = vadd.f32 %v2442, %v2568
        %v2619 = vadd.f32 %v2443, %v2573
        %v2620 = vadd.f32 %v2444, %v2578
        %v2621 = vadd.f32 %v2445, %v2583
        %v2622 = vadd.f32 %v2446, %v2588
        %v2623 = vadd.f32 %v2447, %v2593
        %v2624 = vadd.f32 %v2448, %v2598
        %v2625 = vadd.f32 %v2449, %v2603
        %v2626 = vadd.f32 %v2450, %v2608
        %s2627 = scalar_lea.vmem %s7, 256
        %v2628 = vld [vmem:[%s2627] sm:$0xff]
        %v2629 = vld [vmem:[%s2627 + $0x8] sm:$0xff]
        %v2630 = vld [vmem:[%s2627 + $0x10] sm:$0xff]
        %v2631 = vld [vmem:[%s2627 + $0x18] sm:$0xff]
        %v2632 = vld [vmem:[%s2627 + $0x20] sm:$0xff]
        %v2633 = vld [vmem:[%s2627 + $0x28] sm:$0xff]
        %v2634 = vld [vmem:[%s2627 + $0x30] sm:$0xff]
        %v2635 = vld [vmem:[%s2627 + $0x38] sm:$0xff]
        %v2636 = vsel %vm465, %v1375, 0
        %v2638 = vsel %vm465, %v1376, 0
        %2640 = vmatprep.subr.mxu0 0.0
        %2641 = vmatpush1.msra.mxu0 %v2628
        %2642 = vmatprep.subr.mxu0 0.0
        %2643 = vmatpush1.msra.mxu0 %v2629
        %2644 = vmatprep.subr.mxu0 0.0
        %2645 = vmatpush1.msra.mxu0 %v2630
        %2646 = vmatprep.subr.mxu0 0.0
        %2647 = vmatpush1.msra.mxu0 %v2631
        %2648 = vmatprep.subr.mxu0 0.0
        %2649 = vmatpush1.msra.mxu0 %v2632
        %2650 = vmatprep.subr.mxu0 0.0
        %2651 = vmatpush1.msra.mxu0 %v2633
        %2652 = vmatprep.subr.mxu0 0.0
        %2653 = vmatpush1.msra.mxu0 %v2634
        %2654 = vmatprep.subr.mxu0 0.0
        %2655 = vmatpush1.msra.mxu0 %v2635
        %2656 = vmatprep.subr.mxu0 0.0
        %2657 = vmatpush1.msra.mxu0 0.0
        %2658 = vmatprep.subr.mxu0 0.0
        %2659 = vmatpush1.msra.mxu0 0.0
        %2660 = vmatprep.subr.mxu0 0.0
        %2661 = vmatpush1.msra.mxu0 0.0
        %2662 = vmatprep.subr.mxu0 0.0
        %2663 = vmatpush1.msra.mxu0 0.0
        %2664 = vmatprep.subr.mxu0 0.0
        %2665 = vmatpush1.msra.mxu0 0.0
        %2666 = vmatprep.subr.mxu0 0.0
        %2667 = vmatpush1.msra.mxu0 0.0
        %2668 = vmatprep.subr.mxu0 0.0
        %2669 = vmatpush1.msra.mxu0 0.0
        %2670 = vmatprep.subr.mxu0 0.0
        %2671 = vmatpush1.msra.mxu0 0.0
        %2672 = vmatprep.subr.mxu0 0.0
        %2673 = vmatpush1.msra.mxu0 0.0
        %2674 = vmatprep.subr.mxu0 0.0
        %2675 = vmatpush1.msra.mxu0 0.0
        %2676 = vmatprep.subr.mxu0 0.0
        %2677 = vmatpush1.msra.mxu0 0.0
        %2678 = vmatprep.subr.mxu0 0.0
        %2679 = vmatpush1.msra.mxu0 0.0
        %2680 = vmatprep.subr.mxu0 0.0
        %2681 = vmatpush1.msra.mxu0 0.0
        %2682 = vmatprep.subr.mxu0 0.0
        %2683 = vmatpush1.msra.mxu0 0.0
        %2684 = vmatprep.subr.mxu0 0.0
        %2685 = vmatpush1.msra.mxu0 0.0
        %2686 = vmatprep.subr.mxu0 0.0
        %2687 = vmatpush1.msra.mxu0 0.0
        %2688 = vmatprep.subr.mxu0 0.0
        %2689 = vmatpush1.msra.mxu0 0.0
        %2690 = vmatprep.subr.mxu0 0.0
        %2691 = vmatpush1.msra.mxu0 0.0
        %2692 = vmatprep.subr.mxu0 0.0
        %2693 = vmatpush1.msra.mxu0 0.0
        %2694 = vmatprep.subr.mxu0 0.0
        %2695 = vmatpush1.msra.mxu0 0.0
        %2696 = vmatprep.subr.mxu0 0.0
        %2697 = vmatpush1.msra.mxu0 0.0
        %2698 = vmatprep.subr.mxu0 0.0
        %2699 = vmatpush1.msra.mxu0 0.0
        %2700 = vmatprep.subr.mxu0 0.0
        %2701 = vmatpush1.msra.mxu0 0.0
        %2702 = vmatprep.subr.mxu0 0.0
        %2703 = vmatpush1.msra.mxu0 0.0
        %2704 = vmatprep.mubr.f32.mxu0 0.0
        %2705 = vmatmul.mubr.f32.gmra.mrb[0].mxu0 %v1867
        %v2706 = vpop.f32.mrb[0].mxu0
        %v2707 = vadd.f32 0.0, %v2706
        %v2708 = vpop.f32.mrb[0].mxu0
        %2709 = vmatprep.mubr.f32.mxu0 0.0
        %2710 = vmatmul.mubr.f32.gmra.mrb[0].mxu0 %v1869
        %v2711 = vpop.f32.mrb[0].mxu0
        %v2712 = vadd.f32 0.0, %v2711
        %v2713 = vpop.f32.mrb[0].mxu0
        %2714 = vmatprep.mubr.f32.mxu0 0.0
        %2715 = vmatmul.mubr.f32.gmra.mrb[0].mxu0 %v1871
        %v2716 = vpop.f32.mrb[0].mxu0
        %v2717 = vadd.f32 0.0, %v2716
        %v2718 = vpop.f32.mrb[0].mxu0
        %2719 = vmatprep.mubr.f32.mxu0 0.0
        %2720 = vmatmul.mubr.f32.gmra.mrb[0].mxu0 %v1873
        %v2721 = vpop.f32.mrb[0].mxu0
        %v2722 = vadd.f32 0.0, %v2721
        %v2723 = vpop.f32.mrb[0].mxu0
        %2724 = vmatprep.mubr.f32.mxu0 0.0
        %2725 = vmatmul.mubr.f32.gmra.mrb[0].mxu0 %v1875
        %v2726 = vpop.f32.mrb[0].mxu0
        %v2727 = vadd.f32 0.0, %v2726
        %v2728 = vpop.f32.mrb[0].mxu0
        %2729 = vmatprep.mubr.f32.mxu0 0.0
        %2730 = vmatmul.mubr.f32.gmra.mrb[0].mxu0 %v1877
        %v2731 = vpop.f32.mrb[0].mxu0
        %v2732 = vadd.f32 0.0, %v2731
        %v2733 = vpop.f32.mrb[0].mxu0
        %2734 = vmatprep.mubr.f32.mxu0 0.0
        %2735 = vmatmul.mubr.f32.gmra.mrb[0].mxu0 %v1879
        %v2736 = vpop.f32.mrb[0].mxu0
        %v2737 = vadd.f32 0.0, %v2736
        %v2738 = vpop.f32.mrb[0].mxu0
        %2739 = vmatprep.mubr.f32.mxu0 0.0
        %2740 = vmatmul.mubr.f32.gmra.mrb[0].mxu0 %v1881
        %v2741 = vpop.f32.mrb[0].mxu0
        %v2742 = vadd.f32 0.0, %v2741
        %v2743 = vpop.f32.mrb[0].mxu0
        %2744 = vmatprep.mubr.f32.mxu0 0.0
        %2745 = vmatmul.mubr.f32.gmra.mrb[0].mxu0 %v1883
        %v2746 = vpop.f32.mrb[0].mxu0
        %v2747 = vadd.f32 0.0, %v2746
        %v2748 = vpop.f32.mrb[0].mxu0
        %2749 = vmatprep.mubr.f32.mxu0 0.0
        %2750 = vmatmul.mubr.f32.gmra.mrb[0].mxu0 %v1885
        %v2751 = vpop.f32.mrb[0].mxu0
        %v2752 = vadd.f32 0.0, %v2751
        %v2753 = vpop.f32.mrb[0].mxu0
        %2754 = vmatprep.mubr.f32.mxu0 0.0
        %2755 = vmatmul.mubr.f32.gmra.mrb[0].mxu0 %v1887
        %v2756 = vpop.f32.mrb[0].mxu0
        %v2757 = vadd.f32 0.0, %v2756
        %v2758 = vpop.f32.mrb[0].mxu0
        %2759 = vmatprep.mubr.f32.mxu0 0.0
        %2760 = vmatmul.mubr.f32.gmra.mrb[0].mxu0 %v1889
        %v2761 = vpop.f32.mrb[0].mxu0
        %v2762 = vadd.f32 0.0, %v2761
        %v2763 = vpop.f32.mrb[0].mxu0
        %2764 = vmatprep.mubr.f32.mxu0 0.0
        %2765 = vmatmul.mubr.f32.gmra.mrb[0].mxu0 %v1891
        %v2766 = vpop.f32.mrb[0].mxu0
        %v2767 = vadd.f32 0.0, %v2766
        %v2768 = vpop.f32.mrb[0].mxu0
        %2769 = vmatprep.mubr.f32.mxu0 0.0
        %2770 = vmatmul.mubr.f32.gmra.mrb[0].mxu0 %v1893
        %v2771 = vpop.f32.mrb[0].mxu0
        %v2772 = vadd.f32 0.0, %v2771
        %v2773 = vpop.f32.mrb[0].mxu0
        %2774 = vmatprep.mubr.f32.mxu0 0.0
        %2775 = vmatmul.mubr.f32.gmra.mrb[0].mxu0 %v2636
        %v2776 = vpop.f32.mrb[0].mxu0
        %v2777 = vadd.f32 0.0, %v2776
        %v2778 = vpop.f32.mrb[0].mxu0
        %2779 = vmatprep.mubr.f32.mxu0 0.0
        %2780 = vmatmul.mubr.f32.gmra.mrb[0].mxu0 %v2638
        %v2781 = vpop.f32.mrb[0].mxu0
        %v2782 = vadd.f32 0.0, %v2781
        %v2783 = vpop.f32.mrb[0].mxu0
        %2784 = vdwg.mxu0
        %v2785 = vadd.f32 %v2611, %v2707
        %v2786 = vadd.f32 %v2612, %v2712
        %v2787 = vadd.f32 %v2613, %v2717
        %v2788 = vadd.f32 %v2614, %v2722
        %v2789 = vadd.f32 %v2615, %v2727
        %v2790 = vadd.f32 %v2616, %v2732
        %v2791 = vadd.f32 %v2617, %v2737
        %v2792 = vadd.f32 %v2618, %v2742
        %v2793 = vadd.f32 %v2619, %v2747
        %v2794 = vadd.f32 %v2620, %v2752
        %v2795 = vadd.f32 %v2621, %v2757
        %v2796 = vadd.f32 %v2622, %v2762
        %v2797 = vadd.f32 %v2623, %v2767
        %v2798 = vadd.f32 %v2624, %v2772
        %v2799 = vadd.f32 %v2625, %v2777
        %v2800 = vadd.f32 %v2626, %v2782
        %s2801 = scalar_lea.vmem %s7, 320
        %v2802 = vld [vmem:[%s2801] sm:$0xff]
        %v2803 = vld [vmem:[%s2801 + $0x8] sm:$0xff]
        %v2804 = vld [vmem:[%s2801 + $0x10] sm:$0xff]
        %v2805 = vld [vmem:[%s2801 + $0x18] sm:$0xff]
        %v2806 = vld [vmem:[%s2801 + $0x20] sm:$0xff]
        %v2807 = vld [vmem:[%s2801 + $0x28] sm:$0xff]
        %v2808 = vld [vmem:[%s2801 + $0x30] sm:$0xff]
        %v2809 = vld [vmem:[%s2801 + $0x38] sm:$0xff]
        %v2811 = vsel %vm465, %v1827, 0
        %v2814 = vsel %vm465, %v1828, 0
        %2816 = vmatprep.subr.mxu0 0.0
        %2817 = vmatpush1.msra.mxu0 %v2802
        %2818 = vmatprep.subr.mxu0 0.0
        %2819 = vmatpush1.msra.mxu0 %v2803
        %2820 = vmatprep.subr.mxu0 0.0
        %2821 = vmatpush1.msra.mxu0 %v2804
        %2822 = vmatprep.subr.mxu0 0.0
        %2823 = vmatpush1.msra.mxu0 %v2805
        %2824 = vmatprep.subr.mxu0 0.0
        %2825 = vmatpush1.msra.mxu0 %v2806
        %2826 = vmatprep.subr.mxu0 0.0
        %2827 = vmatpush1.msra.mxu0 %v2807
        %2828 = vmatprep.subr.mxu0 0.0
        %2829 = vmatpush1.msra.mxu0 %v2808
        %2830 = vmatprep.subr.mxu0 0.0
        %2831 = vmatpush1.msra.mxu0 %v2809
        %2832 = vmatprep.subr.mxu0 0.0
        %2833 = vmatpush1.msra.mxu0 0.0
        %2834 = vmatprep.subr.mxu0 0.0
        %2835 = vmatpush1.msra.mxu0 0.0
        %2836 = vmatprep.subr.mxu0 0.0
        %2837 = vmatpush1.msra.mxu0 0.0
        %2838 = vmatprep.subr.mxu0 0.0
        %2839 = vmatpush1.msra.mxu0 0.0
        %2840 = vmatprep.subr.mxu0 0.0
        %2841 = vmatpush1.msra.mxu0 0.0
        %2842 = vmatprep.subr.mxu0 0.0
        %2843 = vmatpush1.msra.mxu0 0.0
        %2844 = vmatprep.subr.mxu0 0.0
        %2845 = vmatpush1.msra.mxu0 0.0
        %2846 = vmatprep.subr.mxu0 0.0
        %2847 = vmatpush1.msra.mxu0 0.0
        %2848 = vmatprep.subr.mxu0 0.0
        %2849 = vmatpush1.msra.mxu0 0.0
        %2850 = vmatprep.subr.mxu0 0.0
        %2851 = vmatpush1.msra.mxu0 0.0
        %2852 = vmatprep.subr.mxu0 0.0
        %2853 = vmatpush1.msra.mxu0 0.0
        %2854 = vmatprep.subr.mxu0 0.0
        %2855 = vmatpush1.msra.mxu0 0.0
        %2856 = vmatprep.subr.mxu0 0.0
        %2857 = vmatpush1.msra.mxu0 0.0
        %2858 = vmatprep.subr.mxu0 0.0
        %2859 = vmatpush1.msra.mxu0 0.0
        %2860 = vmatprep.subr.mxu0 0.0
        %2861 = vmatpush1.msra.mxu0 0.0
        %2862 = vmatprep.subr.mxu0 0.0
        %2863 = vmatpush1.msra.mxu0 0.0
        %2864 = vmatprep.subr.mxu0 0.0
        %2865 = vmatpush1.msra.mxu0 0.0
        %2866 = vmatprep.subr.mxu0 0.0
        %2867 = vmatpush1.msra.mxu0 0.0
        %2868 = vmatprep.subr.mxu0 0.0
        %2869 = vmatpush1.msra.mxu0 0.0
        %2870 = vmatprep.subr.mxu0 0.0
        %2871 = vmatpush1.msra.mxu0 0.0
        %2872 = vmatprep.subr.mxu0 0.0
        %2873 = vmatpush1.msra.mxu0 0.0
        %2874 = vmatprep.subr.mxu0 0.0
        %2875 = vmatpush1.msra.mxu0 0.0
        %2876 = vmatprep.subr.mxu0 0.0
        %2877 = vmatpush1.msra.mxu0 0.0
        %2878 = vmatprep.subr.mxu0 0.0
        %2879 = vmatpush1.msra.mxu0 0.0
        %2880 = vmatprep.mubr.f32.mxu0 0.0
        %2881 = vmatmul.mubr.f32.gmra.mrb[0].mxu0 %v2249
        %v2882 = vpop.f32.mrb[0].mxu0
        %v2883 = vadd.f32 0.0, %v2882
        %v2884 = vpop.f32.mrb[0].mxu0
        %2885 = vmatprep.mubr.f32.mxu0 0.0
        %2886 = vmatmul.mubr.f32.gmra.mrb[0].mxu0 %v2252
        %v2887 = vpop.f32.mrb[0].mxu0
        %v2888 = vadd.f32 0.0, %v2887
        %v2889 = vpop.f32.mrb[0].mxu0
        %2890 = vmatprep.mubr.f32.mxu0 0.0
        %2891 = vmatmul.mubr.f32.gmra.mrb[0].mxu0 %v2255
        %v2892 = vpop.f32.mrb[0].mxu0
        %v2893 = vadd.f32 0.0, %v2892
        %v2894 = vpop.f32.mrb[0].mxu0
        %2895 = vmatprep.mubr.f32.mxu0 0.0
        %2896 = vmatmul.mubr.f32.gmra.mrb[0].mxu0 %v2258
        %v2897 = vpop.f32.mrb[0].mxu0
        %v2898 = vadd.f32 0.0, %v2897
        %v2899 = vpop.f32.mrb[0].mxu0
        %2900 = vmatprep.mubr.f32.mxu0 0.0
        %2901 = vmatmul.mubr.f32.gmra.mrb[0].mxu0 %v2261
        %v2902 = vpop.f32.mrb[0].mxu0
        %v2903 = vadd.f32 0.0, %v2902
        %v2904 = vpop.f32.mrb[0].mxu0
        %2905 = vmatprep.mubr.f32.mxu0 0.0
        %2906 = vmatmul.mubr.f32.gmra.mrb[0].mxu0 %v2264
        %v2907 = vpop.f32.mrb[0].mxu0
        %v2908 = vadd.f32 0.0, %v2907
        %v2909 = vpop.f32.mrb[0].mxu0
        %2910 = vmatprep.mubr.f32.mxu0 0.0
        %2911 = vmatmul.mubr.f32.gmra.mrb[0].mxu0 %v2267
        %v2912 = vpop.f32.mrb[0].mxu0
        %v2913 = vadd.f32 0.0, %v2912
        %v2914 = vpop.f32.mrb[0].mxu0
        %2915 = vmatprep.mubr.f32.mxu0 0.0
        %2916 = vmatmul.mubr.f32.gmra.mrb[0].mxu0 %v2270
        %v2917 = vpop.f32.mrb[0].mxu0
        %v2918 = vadd.f32 0.0, %v2917
        %v2919 = vpop.f32.mrb[0].mxu0
        %2920 = vmatprep.mubr.f32.mxu0 0.0
        %2921 = vmatmul.mubr.f32.gmra.mrb[0].mxu0 %v2273
        %v2922 = vpop.f32.mrb[0].mxu0
        %v2923 = vadd.f32 0.0, %v2922
        %v2924 = vpop.f32.mrb[0].mxu0
        %2925 = vmatprep.mubr.f32.mxu0 0.0
        %2926 = vmatmul.mubr.f32.gmra.mrb[0].mxu0 %v2276
        %v2927 = vpop.f32.mrb[0].mxu0
        %v2928 = vadd.f32 0.0, %v2927
        %v2929 = vpop.f32.mrb[0].mxu0
        %2930 = vmatprep.mubr.f32.mxu0 0.0
        %2931 = vmatmul.mubr.f32.gmra.mrb[0].mxu0 %v2279
        %v2932 = vpop.f32.mrb[0].mxu0
        %v2933 = vadd.f32 0.0, %v2932
        %v2934 = vpop.f32.mrb[0].mxu0
        %2935 = vmatprep.mubr.f32.mxu0 0.0
        %2936 = vmatmul.mubr.f32.gmra.mrb[0].mxu0 %v2282
        %v2937 = vpop.f32.mrb[0].mxu0
        %v2938 = vadd.f32 0.0, %v2937
        %v2939 = vpop.f32.mrb[0].mxu0
        %2940 = vmatprep.mubr.f32.mxu0 0.0
        %2941 = vmatmul.mubr.f32.gmra.mrb[0].mxu0 %v2285
        %v2942 = vpop.f32.mrb[0].mxu0
        %v2943 = vadd.f32 0.0, %v2942
        %v2944 = vpop.f32.mrb[0].mxu0
        %2945 = vmatprep.mubr.f32.mxu0 0.0
        %2946 = vmatmul.mubr.f32.gmra.mrb[0].mxu0 %v2288
        %v2947 = vpop.f32.mrb[0].mxu0
        %v2948 = vadd.f32 0.0, %v2947
        %v2949 = vpop.f32.mrb[0].mxu0
        %2950 = vmatprep.mubr.f32.mxu0 0.0
        %2951 = vmatmul.mubr.f32.gmra.mrb[0].mxu0 %v2811
        %v2952 = vpop.f32.mrb[0].mxu0
        %v2953 = vadd.f32 0.0, %v2952
        %v2954 = vpop.f32.mrb[0].mxu0
        %2955 = vmatprep.mubr.f32.mxu0 0.0
        %2956 = vmatmul.mubr.f32.gmra.mrb[0].mxu0 %v2814
        %v2957 = vpop.f32.mrb[0].mxu0
        %v2958 = vadd.f32 0.0, %v2957
        %v2959 = vpop.f32.mrb[0].mxu0
        %2960 = vdwg.mxu0
        %v2961 = vadd.f32 %v2785, %v2883
        %v2962 = vadd.f32 %v2786, %v2888
        %v2963 = vadd.f32 %v2787, %v2893
        %v2964 = vadd.f32 %v2788, %v2898
        %v2965 = vadd.f32 %v2789, %v2903
        %v2966 = vadd.f32 %v2790, %v2908
        %v2967 = vadd.f32 %v2791, %v2913
        %v2968 = vadd.f32 %v2792, %v2918
        %v2969 = vadd.f32 %v2793, %v2923
        %v2970 = vadd.f32 %v2794, %v2928
        %v2971 = vadd.f32 %v2795, %v2933
        %v2972 = vadd.f32 %v2796, %v2938
        %v2973 = vadd.f32 %v2797, %v2943
        %v2974 = vadd.f32 %v2798, %v2948
        %v2975 = vadd.f32 %v2799, %v2953
        %v2976 = vadd.f32 %v2800, %v2958
        %s2977 = scalar_lea.vmem %s7, 384
        %v2978 = vld [vmem:[%s2977] sm:$0xff]
        %v2979 = vld [vmem:[%s2977 + $0x8] sm:$0xff]
        %v2980 = vld [vmem:[%s2977 + $0x10] sm:$0xff]
        %v2981 = vld [vmem:[%s2977 + $0x18] sm:$0xff]
        %v2982 = vld [vmem:[%s2977 + $0x20] sm:$0xff]
        %v2983 = vld [vmem:[%s2977 + $0x28] sm:$0xff]
        %v2984 = vld [vmem:[%s2977 + $0x30] sm:$0xff]
        %v2985 = vld [vmem:[%s2977 + $0x38] sm:$0xff]
        %v2987 = vsel %vm465, %v1655, 0
        %v2990 = vsel %vm465, %v1656, 0
        %2992 = vmatprep.subr.mxu0 0.0
        %2993 = vmatpush1.msra.mxu0 %v2978
        %2994 = vmatprep.subr.mxu0 0.0
        %2995 = vmatpush1.msra.mxu0 %v2979
        %2996 = vmatprep.subr.mxu0 0.0
        %2997 = vmatpush1.msra.mxu0 %v2980
        %2998 = vmatprep.subr.mxu0 0.0
        %2999 = vmatpush1.msra.mxu0 %v2981
        %3000 = vmatprep.subr.mxu0 0.0
        %3001 = vmatpush1.msra.mxu0 %v2982
        %3002 = vmatprep.subr.mxu0 0.0
        %3003 = vmatpush1.msra.mxu0 %v2983
        %3004 = vmatprep.subr.mxu0 0.0
        %3005 = vmatpush1.msra.mxu0 %v2984
        %3006 = vmatprep.subr.mxu0 0.0
        %3007 = vmatpush1.msra.mxu0 %v2985
        %3008 = vmatprep.subr.mxu0 0.0
        %3009 = vmatpush1.msra.mxu0 0.0
        %3010 = vmatprep.subr.mxu0 0.0
        %3011 = vmatpush1.msra.mxu0 0.0
        %3012 = vmatprep.subr.mxu0 0.0
        %3013 = vmatpush1.msra.mxu0 0.0
        %3014 = vmatprep.subr.mxu0 0.0
        %3015 = vmatpush1.msra.mxu0 0.0
        %3016 = vmatprep.subr.mxu0 0.0
        %3017 = vmatpush1.msra.mxu0 0.0
        %3018 = vmatprep.subr.mxu0 0.0
        %3019 = vmatpush1.msra.mxu0 0.0
        %3020 = vmatprep.subr.mxu0 0.0
        %3021 = vmatpush1.msra.mxu0 0.0
        %3022 = vmatprep.subr.mxu0 0.0
        %3023 = vmatpush1.msra.mxu0 0.0
        %3024 = vmatprep.subr.mxu0 0.0
        %3025 = vmatpush1.msra.mxu0 0.0
        %3026 = vmatprep.subr.mxu0 0.0
        %3027 = vmatpush1.msra.mxu0 0.0
        %3028 = vmatprep.subr.mxu0 0.0
        %3029 = vmatpush1.msra.mxu0 0.0
        %3030 = vmatprep.subr.mxu0 0.0
        %3031 = vmatpush1.msra.mxu0 0.0
        %3032 = vmatprep.subr.mxu0 0.0
        %3033 = vmatpush1.msra.mxu0 0.0
        %3034 = vmatprep.subr.mxu0 0.0
        %3035 = vmatpush1.msra.mxu0 0.0
        %3036 = vmatprep.subr.mxu0 0.0
        %3037 = vmatpush1.msra.mxu0 0.0
        %3038 = vmatprep.subr.mxu0 0.0
        %3039 = vmatpush1.msra.mxu0 0.0
        %3040 = vmatprep.subr.mxu0 0.0
        %3041 = vmatpush1.msra.mxu0 0.0
        %3042 = vmatprep.subr.mxu0 0.0
        %3043 = vmatpush1.msra.mxu0 0.0
        %3044 = vmatprep.subr.mxu0 0.0
        %3045 = vmatpush1.msra.mxu0 0.0
        %3046 = vmatprep.subr.mxu0 0.0
        %3047 = vmatpush1.msra.mxu0 0.0
        %3048 = vmatprep.subr.mxu0 0.0
        %3049 = vmatpush1.msra.mxu0 0.0
        %3050 = vmatprep.subr.mxu0 0.0
        %3051 = vmatpush1.msra.mxu0 0.0
        %3052 = vmatprep.subr.mxu0 0.0
        %3053 = vmatpush1.msra.mxu0 0.0
        %3054 = vmatprep.subr.mxu0 0.0
        %3055 = vmatpush1.msra.mxu0 0.0
        %3056 = vmatprep.mubr.f32.mxu0 0.0
        %3057 = vmatmul.mubr.f32.gmra.mrb[0].mxu0 %v2053
        %v3058 = vpop.f32.mrb[0].mxu0
        %v3059 = vadd.f32 0.0, %v3058
        %v3060 = vpop.f32.mrb[0].mxu0
        %3061 = vmatprep.mubr.f32.mxu0 0.0
        %3062 = vmatmul.mubr.f32.gmra.mrb[0].mxu0 %v2056
        %v3063 = vpop.f32.mrb[0].mxu0
        %v3064 = vadd.f32 0.0, %v3063
        %v3065 = vpop.f32.mrb[0].mxu0
        %3066 = vmatprep.mubr.f32.mxu0 0.0
        %3067 = vmatmul.mubr.f32.gmra.mrb[0].mxu0 %v2059
        %v3068 = vpop.f32.mrb[0].mxu0
        %v3069 = vadd.f32 0.0, %v3068
        %v3070 = vpop.f32.mrb[0].mxu0
        %3071 = vmatprep.mubr.f32.mxu0 0.0
        %3072 = vmatmul.mubr.f32.gmra.mrb[0].mxu0 %v2062
        %v3073 = vpop.f32.mrb[0].mxu0
        %v3074 = vadd.f32 0.0, %v3073
        %v3075 = vpop.f32.mrb[0].mxu0
        %3076 = vmatprep.mubr.f32.mxu0 0.0
        %3077 = vmatmul.mubr.f32.gmra.mrb[0].mxu0 %v2065
        %v3078 = vpop.f32.mrb[0].mxu0
        %v3079 = vadd.f32 0.0, %v3078
        %v3080 = vpop.f32.mrb[0].mxu0
        %3081 = vmatprep.mubr.f32.mxu0 0.0
        %3082 = vmatmul.mubr.f32.gmra.mrb[0].mxu0 %v2068
        %v3083 = vpop.f32.mrb[0].mxu0
        %v3084 = vadd.f32 0.0, %v3083
        %v3085 = vpop.f32.mrb[0].mxu0
        %3086 = vmatprep.mubr.f32.mxu0 0.0
        %3087 = vmatmul.mubr.f32.gmra.mrb[0].mxu0 %v2071
        %v3088 = vpop.f32.mrb[0].mxu0
        %v3089 = vadd.f32 0.0, %v3088
        %v3090 = vpop.f32.mrb[0].mxu0
        %3091 = vmatprep.mubr.f32.mxu0 0.0
        %3092 = vmatmul.mubr.f32.gmra.mrb[0].mxu0 %v2074
        %v3093 = vpop.f32.mrb[0].mxu0
        %v3094 = vadd.f32 0.0, %v3093
        %v3095 = vpop.f32.mrb[0].mxu0
        %3096 = vmatprep.mubr.f32.mxu0 0.0
        %3097 = vmatmul.mubr.f32.gmra.mrb[0].mxu0 %v2077
        %v3098 = vpop.f32.mrb[0].mxu0
        %v3099 = vadd.f32 0.0, %v3098
        %v3100 = vpop.f32.mrb[0].mxu0
        %3101 = vmatprep.mubr.f32.mxu0 0.0
        %3102 = vmatmul.mubr.f32.gmra.mrb[0].mxu0 %v2080
        %v3103 = vpop.f32.mrb[0].mxu0
        %v3104 = vadd.f32 0.0, %v3103
        %v3105 = vpop.f32.mrb[0].mxu0
        %3106 = vmatprep.mubr.f32.mxu0 0.0
        %3107 = vmatmul.mubr.f32.gmra.mrb[0].mxu0 %v2083
        %v3108 = vpop.f32.mrb[0].mxu0
        %v3109 = vadd.f32 0.0, %v3108
        %v3110 = vpop.f32.mrb[0].mxu0
        %3111 = vmatprep.mubr.f32.mxu0 0.0
        %3112 = vmatmul.mubr.f32.gmra.mrb[0].mxu0 %v2086
        %v3113 = vpop.f32.mrb[0].mxu0
        %v3114 = vadd.f32 0.0, %v3113
        %v3115 = vpop.f32.mrb[0].mxu0
        %3116 = vmatprep.mubr.f32.mxu0 0.0
        %3117 = vmatmul.mubr.f32.gmra.mrb[0].mxu0 %v2461
        %v3118 = vpop.f32.mrb[0].mxu0
        %v3119 = vadd.f32 0.0, %v3118
        %v3120 = vpop.f32.mrb[0].mxu0
        %3121 = vmatprep.mubr.f32.mxu0 0.0
        %3122 = vmatmul.mubr.f32.gmra.mrb[0].mxu0 %v2464
        %v3123 = vpop.f32.mrb[0].mxu0
        %v3124 = vadd.f32 0.0, %v3123
        %v3125 = vpop.f32.mrb[0].mxu0
        %3126 = vmatprep.mubr.f32.mxu0 0.0
        %3127 = vmatmul.mubr.f32.gmra.mrb[0].mxu0 %v2987
        %v3128 = vpop.f32.mrb[0].mxu0
        %v3129 = vadd.f32 0.0, %v3128
        %v3130 = vpop.f32.mrb[0].mxu0
        %3131 = vmatprep.mubr.f32.mxu0 0.0
        %3132 = vmatmul.mubr.f32.gmra.mrb[0].mxu0 %v2990
        %v3133 = vpop.f32.mrb[0].mxu0
        %v3134 = vadd.f32 0.0, %v3133
        %v3135 = vpop.f32.mrb[0].mxu0
        %3136 = vdwg.mxu0
        %v3137 = vadd.f32 %v2961, %v3059
        %v3138 = vadd.f32 %v2962, %v3064
        %v3139 = vadd.f32 %v2963, %v3069
        %v3140 = vadd.f32 %v2964, %v3074
        %v3141 = vadd.f32 %v2965, %v3079
        %v3142 = vadd.f32 %v2966, %v3084
        %v3143 = vadd.f32 %v2967, %v3089
        %v3144 = vadd.f32 %v2968, %v3094
        %v3145 = vadd.f32 %v2969, %v3099
        %v3146 = vadd.f32 %v2970, %v3104
        %v3147 = vadd.f32 %v2971, %v3109
        %v3148 = vadd.f32 %v2972, %v3114
        %v3149 = vadd.f32 %v2973, %v3119
        %v3150 = vadd.f32 %v2974, %v3124
        %v3151 = vadd.f32 %v2975, %v3129
        %v3152 = vadd.f32 %v2976, %v3134
        %s3153 = scalar_lea.vmem %s7, 448
        %v3154 = vld [vmem:[%s3153] sm:$0xff]
        %v3155 = vld [vmem:[%s3153 + $0x8] sm:$0xff]
        %v3156 = vld [vmem:[%s3153 + $0x10] sm:$0xff]
        %v3157 = vld [vmem:[%s3153 + $0x18] sm:$0xff]
        %v3158 = vld [vmem:[%s3153 + $0x20] sm:$0xff]
        %v3159 = vld [vmem:[%s3153 + $0x28] sm:$0xff]
        %v3160 = vld [vmem:[%s3153 + $0x30] sm:$0xff]
        %v3161 = vld [vmem:[%s3153 + $0x38] sm:$0xff]
        %v3162 = vsel %vm465, %v1377, 0
        %v3164 = vsel %vm465, %v1378, 0
        %3166 = vmatprep.subr.mxu0 0.0
        %3167 = vmatpush1.msra.mxu0 %v3154
        %3168 = vmatprep.subr.mxu0 0.0
        %3169 = vmatpush1.msra.mxu0 %v3155
        %3170 = vmatprep.subr.mxu0 0.0
        %3171 = vmatpush1.msra.mxu0 %v3156
        %3172 = vmatprep.subr.mxu0 0.0
        %3173 = vmatpush1.msra.mxu0 %v3157
        %3174 = vmatprep.subr.mxu0 0.0
        %3175 = vmatpush1.msra.mxu0 %v3158
        %3176 = vmatprep.subr.mxu0 0.0
        %3177 = vmatpush1.msra.mxu0 %v3159
        %3178 = vmatprep.subr.mxu0 0.0
        %3179 = vmatpush1.msra.mxu0 %v3160
        %3180 = vmatprep.subr.mxu0 0.0
        %3181 = vmatpush1.msra.mxu0 %v3161
        %3182 = vmatprep.subr.mxu0 0.0
        %3183 = vmatpush1.msra.mxu0 0.0
        %3184 = vmatprep.subr.mxu0 0.0
        %3185 = vmatpush1.msra.mxu0 0.0
        %3186 = vmatprep.subr.mxu0 0.0
        %3187 = vmatpush1.msra.mxu0 0.0
        %3188 = vmatprep.subr.mxu0 0.0
        %3189 = vmatpush1.msra.mxu0 0.0
        %3190 = vmatprep.subr.mxu0 0.0
        %3191 = vmatpush1.msra.mxu0 0.0
        %3192 = vmatprep.subr.mxu0 0.0
        %3193 = vmatpush1.msra.mxu0 0.0
        %3194 = vmatprep.subr.mxu0 0.0
        %3195 = vmatpush1.msra.mxu0 0.0
        %3196 = vmatprep.subr.mxu0 0.0
        %3197 = vmatpush1.msra.mxu0 0.0
        %3198 = vmatprep.subr.mxu0 0.0
        %3199 = vmatpush1.msra.mxu0 0.0
        %3200 = vmatprep.subr.mxu0 0.0
        %3201 = vmatpush1.msra.mxu0 0.0
        %3202 = vmatprep.subr.mxu0 0.0
        %3203 = vmatpush1.msra.mxu0 0.0
        %3204 = vmatprep.subr.mxu0 0.0
        %3205 = vmatpush1.msra.mxu0 0.0
        %3206 = vmatprep.subr.mxu0 0.0
        %3207 = vmatpush1.msra.mxu0 0.0
        %3208 = vmatprep.subr.mxu0 0.0
        %3209 = vmatpush1.msra.mxu0 0.0
        %3210 = vmatprep.subr.mxu0 0.0
        %3211 = vmatpush1.msra.mxu0 0.0
        %3212 = vmatprep.subr.mxu0 0.0
        %3213 = vmatpush1.msra.mxu0 0.0
        %3214 = vmatprep.subr.mxu0 0.0
        %3215 = vmatpush1.msra.mxu0 0.0
        %3216 = vmatprep.subr.mxu0 0.0
        %3217 = vmatpush1.msra.mxu0 0.0
        %3218 = vmatprep.subr.mxu0 0.0
        %3219 = vmatpush1.msra.mxu0 0.0
        %3220 = vmatprep.subr.mxu0 0.0
        %3221 = vmatpush1.msra.mxu0 0.0
        %3222 = vmatprep.subr.mxu0 0.0
        %3223 = vmatpush1.msra.mxu0 0.0
        %3224 = vmatprep.subr.mxu0 0.0
        %3225 = vmatpush1.msra.mxu0 0.0
        %3226 = vmatprep.subr.mxu0 0.0
        %3227 = vmatpush1.msra.mxu0 0.0
        %3228 = vmatprep.subr.mxu0 0.0
        %3229 = vmatpush1.msra.mxu0 0.0
        %3230 = vmatprep.mubr.f32.mxu0 0.0
        %3231 = vmatmul.mubr.f32.gmra.mrb[0].mxu0 %v1871
        %v3232 = vpop.f32.mrb[0].mxu0
        %v3233 = vadd.f32 0.0, %v3232
        %v3234 = vpop.f32.mrb[0].mxu0
        %3235 = vmatprep.mubr.f32.mxu0 0.0
        %3236 = vmatmul.mubr.f32.gmra.mrb[0].mxu0 %v1873
        %v3237 = vpop.f32.mrb[0].mxu0
        %v3238 = vadd.f32 0.0, %v3237
        %v3239 = vpop.f32.mrb[0].mxu0
        %3240 = vmatprep.mubr.f32.mxu0 0.0
        %3241 = vmatmul.mubr.f32.gmra.mrb[0].mxu0 %v1875
        %v3242 = vpop.f32.mrb[0].mxu0
        %v3243 = vadd.f32 0.0, %v3242
        %v3244 = vpop.f32.mrb[0].mxu0
        %3245 = vmatprep.mubr.f32.mxu0 0.0
        %3246 = vmatmul.mubr.f32.gmra.mrb[0].mxu0 %v1877
        %v3247 = vpop.f32.mrb[0].mxu0
        %v3248 = vadd.f32 0.0, %v3247
        %v3249 = vpop.f32.mrb[0].mxu0
        %3250 = vmatprep.mubr.f32.mxu0 0.0
        %3251 = vmatmul.mubr.f32.gmra.mrb[0].mxu0 %v1879
        %v3252 = vpop.f32.mrb[0].mxu0
        %v3253 = vadd.f32 0.0, %v3252
        %v3254 = vpop.f32.mrb[0].mxu0
        %3255 = vmatprep.mubr.f32.mxu0 0.0
        %3256 = vmatmul.mubr.f32.gmra.mrb[0].mxu0 %v1881
        %v3257 = vpop.f32.mrb[0].mxu0
        %v3258 = vadd.f32 0.0, %v3257
        %v3259 = vpop.f32.mrb[0].mxu0
        %3260 = vmatprep.mubr.f32.mxu0 0.0
        %3261 = vmatmul.mubr.f32.gmra.mrb[0].mxu0 %v1883
        %v3262 = vpop.f32.mrb[0].mxu0
        %v3263 = vadd.f32 0.0, %v3262
        %v3264 = vpop.f32.mrb[0].mxu0
        %3265 = vmatprep.mubr.f32.mxu0 0.0
        %3266 = vmatmul.mubr.f32.gmra.mrb[0].mxu0 %v1885
        %v3267 = vpop.f32.mrb[0].mxu0
        %v3268 = vadd.f32 0.0, %v3267
        %v3269 = vpop.f32.mrb[0].mxu0
        %3270 = vmatprep.mubr.f32.mxu0 0.0
        %3271 = vmatmul.mubr.f32.gmra.mrb[0].mxu0 %v1887
        %v3272 = vpop.f32.mrb[0].mxu0
        %v3273 = vadd.f32 0.0, %v3272
        %v3274 = vpop.f32.mrb[0].mxu0
        %3275 = vmatprep.mubr.f32.mxu0 0.0
        %3276 = vmatmul.mubr.f32.gmra.mrb[0].mxu0 %v1889
        %v3277 = vpop.f32.mrb[0].mxu0
        %v3278 = vadd.f32 0.0, %v3277
        %v3279 = vpop.f32.mrb[0].mxu0
        %3280 = vmatprep.mubr.f32.mxu0 0.0
        %3281 = vmatmul.mubr.f32.gmra.mrb[0].mxu0 %v1891
        %v3282 = vpop.f32.mrb[0].mxu0
        %v3283 = vadd.f32 0.0, %v3282
        %v3284 = vpop.f32.mrb[0].mxu0
        %3285 = vmatprep.mubr.f32.mxu0 0.0
        %3286 = vmatmul.mubr.f32.gmra.mrb[0].mxu0 %v1893
        %v3287 = vpop.f32.mrb[0].mxu0
        %v3288 = vadd.f32 0.0, %v3287
        %v3289 = vpop.f32.mrb[0].mxu0
        %3290 = vmatprep.mubr.f32.mxu0 0.0
        %3291 = vmatmul.mubr.f32.gmra.mrb[0].mxu0 %v2636
        %v3292 = vpop.f32.mrb[0].mxu0
        %v3293 = vadd.f32 0.0, %v3292
        %v3294 = vpop.f32.mrb[0].mxu0
        %3295 = vmatprep.mubr.f32.mxu0 0.0
        %3296 = vmatmul.mubr.f32.gmra.mrb[0].mxu0 %v2638
        %v3297 = vpop.f32.mrb[0].mxu0
        %v3298 = vadd.f32 0.0, %v3297
        %v3299 = vpop.f32.mrb[0].mxu0
        %3300 = vmatprep.mubr.f32.mxu0 0.0
        %3301 = vmatmul.mubr.f32.gmra.mrb[0].mxu0 %v3162
        %v3302 = vpop.f32.mrb[0].mxu0
        %v3303 = vadd.f32 0.0, %v3302
        %v3304 = vpop.f32.mrb[0].mxu0
        %3305 = vmatprep.mubr.f32.mxu0 0.0
        %3306 = vmatmul.mubr.f32.gmra.mrb[0].mxu0 %v3164
        %v3307 = vpop.f32.mrb[0].mxu0
        %v3308 = vadd.f32 0.0, %v3307
        %v3309 = vpop.f32.mrb[0].mxu0
        %3310 = vdwg.mxu0
        %v3311 = vadd.f32 %v3137, %v3233
        %v3312 = vadd.f32 %v3138, %v3238
        %v3313 = vadd.f32 %v3139, %v3243
        %v3314 = vadd.f32 %v3140, %v3248
        %v3315 = vadd.f32 %v3141, %v3253
        %v3316 = vadd.f32 %v3142, %v3258
        %v3317 = vadd.f32 %v3143, %v3263
        %v3318 = vadd.f32 %v3144, %v3268
        %v3319 = vadd.f32 %v3145, %v3273
        %v3320 = vadd.f32 %v3146, %v3278
        %v3321 = vadd.f32 %v3147, %v3283
        %v3322 = vadd.f32 %v3148, %v3288
        %v3323 = vadd.f32 %v3149, %v3293
        %v3324 = vadd.f32 %v3150, %v3298
        %v3325 = vadd.f32 %v3151, %v3303
        %v3326 = vadd.f32 %v3152, %v3308
        %s3327 = scalar_lea.vmem %s7, 512
        %v3328 = vld [vmem:[%s3327] sm:$0xff]
        %v3329 = vld [vmem:[%s3327 + $0x8] sm:$0xff]
        %v3330 = vld [vmem:[%s3327 + $0x10] sm:$0xff]
        %v3331 = vld [vmem:[%s3327 + $0x18] sm:$0xff]
        %v3332 = vld [vmem:[%s3327 + $0x20] sm:$0xff]
        %v3333 = vld [vmem:[%s3327 + $0x28] sm:$0xff]
        %v3334 = vld [vmem:[%s3327 + $0x30] sm:$0xff]
        %v3335 = vld [vmem:[%s3327 + $0x38] sm:$0xff]
        %v3337 = vsel %vm465, %v1829, 0
        %v3340 = vsel %vm465, %v1830, 0
        %3342 = vmatprep.subr.mxu0 0.0
        %3343 = vmatpush1.msra.mxu0 %v3328
        %3344 = vmatprep.subr.mxu0 0.0
        %3345 = vmatpush1.msra.mxu0 %v3329
        %3346 = vmatprep.subr.mxu0 0.0
        %3347 = vmatpush1.msra.mxu0 %v3330
        %3348 = vmatprep.subr.mxu0 0.0
        %3349 = vmatpush1.msra.mxu0 %v3331
        %3350 = vmatprep.subr.mxu0 0.0
        %3351 = vmatpush1.msra.mxu0 %v3332
        %3352 = vmatprep.subr.mxu0 0.0
        %3353 = vmatpush1.msra.mxu0 %v3333
        %3354 = vmatprep.subr.mxu0 0.0
        %3355 = vmatpush1.msra.mxu0 %v3334
        %3356 = vmatprep.subr.mxu0 0.0
        %3357 = vmatpush1.msra.mxu0 %v3335
        %3358 = vmatprep.subr.mxu0 0.0
        %3359 = vmatpush1.msra.mxu0 0.0
        %3360 = vmatprep.subr.mxu0 0.0
        %3361 = vmatpush1.msra.mxu0 0.0
        %3362 = vmatprep.subr.mxu0 0.0
        %3363 = vmatpush1.msra.mxu0 0.0
        %3364 = vmatprep.subr.mxu0 0.0
        %3365 = vmatpush1.msra.mxu0 0.0
        %3366 = vmatprep.subr.mxu0 0.0
        %3367 = vmatpush1.msra.mxu0 0.0
        %3368 = vmatprep.subr.mxu0 0.0
        %3369 = vmatpush1.msra.mxu0 0.0
        %3370 = vmatprep.subr.mxu0 0.0
        %3371 = vmatpush1.msra.mxu0 0.0
        %3372 = vmatprep.subr.mxu0 0.0
        %3373 = vmatpush1.msra.mxu0 0.0
        %3374 = vmatprep.subr.mxu0 0.0
        %3375 = vmatpush1.msra.mxu0 0.0
        %3376 = vmatprep.subr.mxu0 0.0
        %3377 = vmatpush1.msra.mxu0 0.0
        %3378 = vmatprep.subr.mxu0 0.0
        %3379 = vmatpush1.msra.mxu0 0.0
        %3380 = vmatprep.subr.mxu0 0.0
        %3381 = vmatpush1.msra.mxu0 0.0
        %3382 = vmatprep.subr.mxu0 0.0
        %3383 = vmatpush1.msra.mxu0 0.0
        %3384 = vmatprep.subr.mxu0 0.0
        %3385 = vmatpush1.msra.mxu0 0.0
        %3386 = vmatprep.subr.mxu0 0.0
        %3387 = vmatpush1.msra.mxu0 0.0
        %3388 = vmatprep.subr.mxu0 0.0
        %3389 = vmatpush1.msra.mxu0 0.0
        %3390 = vmatprep.subr.mxu0 0.0
        %3391 = vmatpush1.msra.mxu0 0.0
        %3392 = vmatprep.subr.mxu0 0.0
        %3393 = vmatpush1.msra.mxu0 0.0
        %3394 = vmatprep.subr.mxu0 0.0
        %3395 = vmatpush1.msra.mxu0 0.0
        %3396 = vmatprep.subr.mxu0 0.0
        %3397 = vmatpush1.msra.mxu0 0.0
        %3398 = vmatprep.subr.mxu0 0.0
        %3399 = vmatpush1.msra.mxu0 0.0
        %3400 = vmatprep.subr.mxu0 0.0
        %3401 = vmatpush1.msra.mxu0 0.0
        %3402 = vmatprep.subr.mxu0 0.0
        %3403 = vmatpush1.msra.mxu0 0.0
        %3404 = vmatprep.subr.mxu0 0.0
        %3405 = vmatpush1.msra.mxu0 0.0
        %3406 = vmatprep.mubr.f32.mxu0 0.0
        %3407 = vmatmul.mubr.f32.gmra.mrb[0].mxu0 %v2255
        %v3408 = vpop.f32.mrb[0].mxu0
        %v3409 = vadd.f32 0.0, %v3408
        %v3410 = vpop.f32.mrb[0].mxu0
        %3411 = vmatprep.mubr.f32.mxu0 0.0
        %3412 = vmatmul.mubr.f32.gmra.mrb[0].mxu0 %v2258
        %v3413 = vpop.f32.mrb[0].mxu0
        %v3414 = vadd.f32 0.0, %v3413
        %v3415 = vpop.f32.mrb[0].mxu0
        %3416 = vmatprep.mubr.f32.mxu0 0.0
        %3417 = vmatmul.mubr.f32.gmra.mrb[0].mxu0 %v2261
        %v3418 = vpop.f32.mrb[0].mxu0
        %v3419 = vadd.f32 0.0, %v3418
        %v3420 = vpop.f32.mrb[0].mxu0
        %3421 = vmatprep.mubr.f32.mxu0 0.0
        %3422 = vmatmul.mubr.f32.gmra.mrb[0].mxu0 %v2264
        %v3423 = vpop.f32.mrb[0].mxu0
        %v3424 = vadd.f32 0.0, %v3423
        %v3425 = vpop.f32.mrb[0].mxu0
        %3426 = vmatprep.mubr.f32.mxu0 0.0
        %3427 = vmatmul.mubr.f32.gmra.mrb[0].mxu0 %v2267
        %v3428 = vpop.f32.mrb[0].mxu0
        %v3429 = vadd.f32 0.0, %v3428
        %v3430 = vpop.f32.mrb[0].mxu0
        %3431 = vmatprep.mubr.f32.mxu0 0.0
        %3432 = vmatmul.mubr.f32.gmra.mrb[0].mxu0 %v2270
        %v3433 = vpop.f32.mrb[0].mxu0
        %v3434 = vadd.f32 0.0, %v3433
        %v3435 = vpop.f32.mrb[0].mxu0
        %3436 = vmatprep.mubr.f32.mxu0 0.0
        %3437 = vmatmul.mubr.f32.gmra.mrb[0].mxu0 %v2273
        %v3438 = vpop.f32.mrb[0].mxu0
        %v3439 = vadd.f32 0.0, %v3438
        %v3440 = vpop.f32.mrb[0].mxu0
        %3441 = vmatprep.mubr.f32.mxu0 0.0
        %3442 = vmatmul.mubr.f32.gmra.mrb[0].mxu0 %v2276
        %v3443 = vpop.f32.mrb[0].mxu0
        %v3444 = vadd.f32 0.0, %v3443
        %v3445 = vpop.f32.mrb[0].mxu0
        %3446 = vmatprep.mubr.f32.mxu0 0.0
        %3447 = vmatmul.mubr.f32.gmra.mrb[0].mxu0 %v2279
        %v3448 = vpop.f32.mrb[0].mxu0
        %v3449 = vadd.f32 0.0, %v3448
        %v3450 = vpop.f32.mrb[0].mxu0
        %3451 = vmatprep.mubr.f32.mxu0 0.0
        %3452 = vmatmul.mubr.f32.gmra.mrb[0].mxu0 %v2282
        %v3453 = vpop.f32.mrb[0].mxu0
        %v3454 = vadd.f32 0.0, %v3453
        %v3455 = vpop.f32.mrb[0].mxu0
        %3456 = vmatprep.mubr.f32.mxu0 0.0
        %3457 = vmatmul.mubr.f32.gmra.mrb[0].mxu0 %v2285
        %v3458 = vpop.f32.mrb[0].mxu0
        %v3459 = vadd.f32 0.0, %v3458
        %v3460 = vpop.f32.mrb[0].mxu0
        %3461 = vmatprep.mubr.f32.mxu0 0.0
        %3462 = vmatmul.mubr.f32.gmra.mrb[0].mxu0 %v2288
        %v3463 = vpop.f32.mrb[0].mxu0
        %v3464 = vadd.f32 0.0, %v3463
        %v3465 = vpop.f32.mrb[0].mxu0
        %3466 = vmatprep.mubr.f32.mxu0 0.0
        %3467 = vmatmul.mubr.f32.gmra.mrb[0].mxu0 %v2811
        %v3468 = vpop.f32.mrb[0].mxu0
        %v3469 = vadd.f32 0.0, %v3468
        %v3470 = vpop.f32.mrb[0].mxu0
        %3471 = vmatprep.mubr.f32.mxu0 0.0
        %3472 = vmatmul.mubr.f32.gmra.mrb[0].mxu0 %v2814
        %v3473 = vpop.f32.mrb[0].mxu0
        %v3474 = vadd.f32 0.0, %v3473
        %v3475 = vpop.f32.mrb[0].mxu0
        %3476 = vmatprep.mubr.f32.mxu0 0.0
        %3477 = vmatmul.mubr.f32.gmra.mrb[0].mxu0 %v3337
        %v3478 = vpop.f32.mrb[0].mxu0
        %v3479 = vadd.f32 0.0, %v3478
        %v3480 = vpop.f32.mrb[0].mxu0
        %3481 = vmatprep.mubr.f32.mxu0 0.0
        %3482 = vmatmul.mubr.f32.gmra.mrb[0].mxu0 %v3340
        %v3483 = vpop.f32.mrb[0].mxu0
        %v3484 = vadd.f32 0.0, %v3483
        %v3485 = vpop.f32.mrb[0].mxu0
        %3486 = vdwg.mxu0
        %v3487 = vadd.f32 %v3311, %v3409
        %v3488 = vadd.f32 %v3312, %v3414
        %v3489 = vadd.f32 %v3313, %v3419
        %v3490 = vadd.f32 %v3314, %v3424
        %v3491 = vadd.f32 %v3315, %v3429
        %v3492 = vadd.f32 %v3316, %v3434
        %v3493 = vadd.f32 %v3317, %v3439
        %v3494 = vadd.f32 %v3318, %v3444
        %v3495 = vadd.f32 %v3319, %v3449
        %v3496 = vadd.f32 %v3320, %v3454
        %v3497 = vadd.f32 %v3321, %v3459
        %v3498 = vadd.f32 %v3322, %v3464
        %v3499 = vadd.f32 %v3323, %v3469
        %v3500 = vadd.f32 %v3324, %v3474
        %v3501 = vadd.f32 %v3325, %v3479
        %v3502 = vadd.f32 %v3326, %v3484
        %v3504 = vlaneseq
        %v3505 = vshrl.u32 %v3504, 7
        %v3506 = vsub.s32 0, %v3505
        %v3507 = vrot.slane %v1847, %v3506
        %v3509 = vadd.f32 %v3487, %v3507
        %v3510 = vadd.f32 %v3488, %v3507
        %v3511 = vadd.f32 %v3489, %v3507
        %v3512 = vadd.f32 %v3490, %v3507
        %v3513 = vadd.f32 %v3491, %v3507
        %v3514 = vadd.f32 %v3492, %v3507
        %v3515 = vadd.f32 %v3493, %v3507
        %v3516 = vadd.f32 %v3494, %v3507
        %v3517 = vadd.f32 %v3495, %v3507
        %v3518 = vadd.f32 %v3496, %v3507
        %v3519 = vadd.f32 %v3497, %v3507
        %v3520 = vadd.f32 %v3498, %v3507
        %v3521 = vadd.f32 %v3499, %v3507
        %v3522 = vadd.f32 %v3500, %v3507
        %v3523 = vadd.f32 %v3501, %v3507
        %v3524 = vadd.f32 %v3502, %v3507
        %v3525 = vmax.f32 %v3509, 0.0
        %v3526 = vmax.f32 %v3510, 0.0
        %v3527 = vmax.f32 %v3511, 0.0
        %v3528 = vmax.f32 %v3512, 0.0
        %v3529 = vmax.f32 %v3513, 0.0
        %v3530 = vmax.f32 %v3514, 0.0
        %v3531 = vmax.f32 %v3515, 0.0
        %v3532 = vmax.f32 %v3516, 0.0
        %v3533 = vmax.f32 %v3517, 0.0
        %v3534 = vmax.f32 %v3518, 0.0
        %v3535 = vmax.f32 %v3519, 0.0
        %v3536 = vmax.f32 %v3520, 0.0
        %v3537 = vmax.f32 %v3521, 0.0
        %v3538 = vmax.f32 %v3522, 0.0
        %v3539 = vmax.f32 %v3523, 0.0
        %v3540 = vmax.f32 %v3524, 0.0
        %3541 = vst.msk [vmem:[%s376] sm:$0xff] %vm465, %v3525
        %3542 = vst.msk [vmem:[%s376 + $0x8] sm:$0xff] %vm465, %v3526
        %3543 = vst.msk [vmem:[%s376 + $0x10] sm:$0xff] %vm465, %v3527
        %3544 = vst.msk [vmem:[%s376 + $0x18] sm:$0xff] %vm465, %v3528
        %3545 = vst.msk [vmem:[%s376 + $0x20] sm:$0xff] %vm465, %v3529
        %3546 = vst.msk [vmem:[%s376 + $0x28] sm:$0xff] %vm465, %v3530
        %3547 = vst.msk [vmem:[%s376 + $0x30] sm:$0xff] %vm465, %v3531
        %3548 = vst.msk [vmem:[%s376 + $0x38] sm:$0xff] %vm465, %v3532
        %3549 = vst.msk [vmem:[%s376 + $0x40] sm:$0xff] %vm465, %v3533
        %3550 = vst.msk [vmem:[%s376 + $0x48] sm:$0xff] %vm465, %v3534
        %3551 = vst.msk [vmem:[%s376 + $0x50] sm:$0xff] %vm465, %v3535
        %3552 = vst.msk [vmem:[%s376 + $0x58] sm:$0xff] %vm465, %v3536
        %3553 = vst.msk [vmem:[%s376 + $0x60] sm:$0xff] %vm465, %v3537
        %3554 = vst.msk [vmem:[%s376 + $0x68] sm:$0xff] %vm465, %v3538
        %3555 = vst.msk [vmem:[%s376 + $0x70] sm:$0xff] %vm465, %v3539
        %3556 = vst.msk [vmem:[%s376 + $0x78] sm:$0xff] %vm465, %v3540
        %v3557 = vld [vmem:[%s7] sm:$0xff]
        %v3558 = vld [vmem:[%s7 + $0x8] sm:$0xff]
        %v3559 = vld [vmem:[%s7 + $0x10] sm:$0xff]
        %v3560 = vld [vmem:[%s7 + $0x18] sm:$0xff]
        %v3561 = vld [vmem:[%s7 + $0x20] sm:$0xff]
        %v3562 = vld [vmem:[%s7 + $0x28] sm:$0xff]
        %v3563 = vld [vmem:[%s7 + $0x30] sm:$0xff]
        %v3564 = vld [vmem:[%s7 + $0x38] sm:$0xff]
        %v3565 = vld [vmem:[%s1856] sm:$0xff]
        %v3566 = vld [vmem:[%s1856 + $0x8] sm:$0xff]
        %v3567 = vld [vmem:[%s1856 + $0x10] sm:$0xff]
        %v3568 = vld [vmem:[%s1856 + $0x18] sm:$0xff]
        %v3569 = vld [vmem:[%s1856 + $0x20] sm:$0xff]
        %v3570 = vld [vmem:[%s1856 + $0x28] sm:$0xff]
        %v3571 = vld [vmem:[%s1856 + $0x30] sm:$0xff]
        %v3572 = vld [vmem:[%s1856 + $0x38] sm:$0xff]
        %v3573 = vsel %vm465, %v1379, 0
        %v3575 = vsel %vm465, %v1380, 0
        %v3577 = vsel %vm465, %v1381, 0
        %v3579 = vsel %vm465, %v1382, 0
        %v3581 = vsel %vm465, %v1383, 0
        %v3583 = vsel %vm465, %v1384, 0
        %v3585 = vsel %vm465, %v1385, 0
        %v3587 = vsel %vm465, %v1386, 0
        %v3589 = vsel %vm465, %v1387, 0
        %v3591 = vsel %vm465, %v1388, 0
        %v3593 = vsel %vm465, %v1389, 0
        %v3595 = vsel %vm465, %v1390, 0
        %3597 = vmatprep.subr.mxu0 0.0
        %3598 = vmatpush1.msra.mxu0 %v3565
        %3599 = vmatprep.subr.mxu0 0.0
        %3600 = vmatpush1.msra.mxu0 %v3566
        %3601 = vmatprep.subr.mxu0 0.0
        %3602 = vmatpush1.msra.mxu0 %v3567
        %3603 = vmatprep.subr.mxu0 0.0
        %3604 = vmatpush1.msra.mxu0 %v3568
        %3605 = vmatprep.subr.mxu0 0.0
        %3606 = vmatpush1.msra.mxu0 %v3569
        %3607 = vmatprep.subr.mxu0 0.0
        %3608 = vmatpush1.msra.mxu0 %v3570
        %3609 = vmatprep.subr.mxu0 0.0
        %3610 = vmatpush1.msra.mxu0 %v3571
        %3611 = vmatprep.subr.mxu0 0.0
        %3612 = vmatpush1.msra.mxu0 %v3572
        %3613 = vmatprep.subr.mxu0 0.0
        %3614 = vmatpush1.msra.mxu0 0.0
        %3615 = vmatprep.subr.mxu0 0.0
        %3616 = vmatpush1.msra.mxu0 0.0
        %3617 = vmatprep.subr.mxu0 0.0
        %3618 = vmatpush1.msra.mxu0 0.0
        %3619 = vmatprep.subr.mxu0 0.0
        %3620 = vmatpush1.msra.mxu0 0.0
        %3621 = vmatprep.subr.mxu0 0.0
        %3622 = vmatpush1.msra.mxu0 0.0
        %3623 = vmatprep.subr.mxu0 0.0
        %3624 = vmatpush1.msra.mxu0 0.0
        %3625 = vmatprep.subr.mxu0 0.0
        %3626 = vmatpush1.msra.mxu0 0.0
        %3627 = vmatprep.subr.mxu0 0.0
        %3628 = vmatpush1.msra.mxu0 0.0
        %3629 = vmatprep.subr.mxu0 0.0
        %3630 = vmatpush1.msra.mxu0 0.0
        %3631 = vmatprep.subr.mxu0 0.0
        %3632 = vmatpush1.msra.mxu0 0.0
        %3633 = vmatprep.subr.mxu0 0.0
        %3634 = vmatpush1.msra.mxu0 0.0
        %3635 = vmatprep.subr.mxu0 0.0
        %3636 = vmatpush1.msra.mxu0 0.0
        %3637 = vmatprep.subr.mxu0 0.0
        %3638 = vmatpush1.msra.mxu0 0.0
        %3639 = vmatprep.subr.mxu0 0.0
        %3640 = vmatpush1.msra.mxu0 0.0
        %3641 = vmatprep.subr.mxu0 0.0
        %3642 = vmatpush1.msra.mxu0 0.0
        %3643 = vmatprep.subr.mxu0 0.0
        %3644 = vmatpush1.msra.mxu0 0.0
        %3645 = vmatprep.subr.mxu0 0.0
        %3646 = vmatpush1.msra.mxu0 0.0
        %3647 = vmatprep.subr.mxu0 0.0
        %3648 = vmatpush1.msra.mxu0 0.0
        %3649 = vmatprep.subr.mxu0 0.0
        %3650 = vmatpush1.msra.mxu0 0.0
        %3651 = vmatprep.subr.mxu0 0.0
        %3652 = vmatpush1.msra.mxu0 0.0
        %3653 = vmatprep.subr.mxu0 0.0
        %3654 = vmatpush1.msra.mxu0 0.0
        %3655 = vmatprep.subr.mxu0 0.0
        %3656 = vmatpush1.msra.mxu0 0.0
        %3657 = vmatprep.subr.mxu0 0.0
        %3658 = vmatpush1.msra.mxu0 0.0
        %3659 = vmatprep.subr.mxu0 0.0
        %3660 = vmatpush1.msra.mxu0 0.0
        %3661 = vmatprep.mubr.f32.mxu0 0.0
        %3662 = vmatmul.mubr.f32.gmra.mrb[0].mxu0 %v2636
        %v3663 = vpop.f32.mrb[0].mxu0
        %v3664 = vadd.f32 0.0, %v3663
        %v3665 = vpop.f32.mrb[0].mxu0
        %3666 = vmatprep.mubr.f32.mxu0 0.0
        %3667 = vmatmul.mubr.f32.gmra.mrb[0].mxu0 %v2638
        %v3668 = vpop.f32.mrb[0].mxu0
        %v3669 = vadd.f32 0.0, %v3668
        %v3670 = vpop.f32.mrb[0].mxu0
        %3671 = vmatprep.mubr.f32.mxu0 0.0
        %3672 = vmatmul.mubr.f32.gmra.mrb[0].mxu0 %v3162
        %v3673 = vpop.f32.mrb[0].mxu0
        %v3674 = vadd.f32 0.0, %v3673
        %v3675 = vpop.f32.mrb[0].mxu0
        %3676 = vmatprep.mubr.f32.mxu0 0.0
        %3677 = vmatmul.mubr.f32.gmra.mrb[0].mxu0 %v3164
        %v3678 = vpop.f32.mrb[0].mxu0
        %v3679 = vadd.f32 0.0, %v3678
        %v3680 = vpop.f32.mrb[0].mxu0
        %3681 = vmatprep.mubr.f32.mxu0 0.0
        %3682 = vmatmul.mubr.f32.gmra.mrb[0].mxu0 %v3573
        %v3683 = vpop.f32.mrb[0].mxu0
        %v3684 = vadd.f32 0.0, %v3683
        %v3685 = vpop.f32.mrb[0].mxu0
        %3686 = vmatprep.mubr.f32.mxu0 0.0
        %3687 = vmatmul.mubr.f32.gmra.mrb[0].mxu0 %v3575
        %v3688 = vpop.f32.mrb[0].mxu0
        %v3689 = vadd.f32 0.0, %v3688
        %v3690 = vpop.f32.mrb[0].mxu0
        %3691 = vmatprep.mubr.f32.mxu0 0.0
        %3692 = vmatmul.mubr.f32.gmra.mrb[0].mxu0 %v3577
        %v3693 = vpop.f32.mrb[0].mxu0
        %v3694 = vadd.f32 0.0, %v3693
        %v3695 = vpop.f32.mrb[0].mxu0
        %3696 = vmatprep.mubr.f32.mxu0 0.0
        %3697 = vmatmul.mubr.f32.gmra.mrb[0].mxu0 %v3579
        %v3698 = vpop.f32.mrb[0].mxu0
        %v3699 = vadd.f32 0.0, %v3698
        %v3700 = vpop.f32.mrb[0].mxu0
        %3701 = vmatprep.mubr.f32.mxu0 0.0
        %3702 = vmatmul.mubr.f32.gmra.mrb[0].mxu0 %v3581
        %v3703 = vpop.f32.mrb[0].mxu0
        %v3704 = vadd.f32 0.0, %v3703
        %v3705 = vpop.f32.mrb[0].mxu0
        %3706 = vmatprep.mubr.f32.mxu0 0.0
        %3707 = vmatmul.mubr.f32.gmra.mrb[0].mxu0 %v3583
        %v3708 = vpop.f32.mrb[0].mxu0
        %v3709 = vadd.f32 0.0, %v3708
        %v3710 = vpop.f32.mrb[0].mxu0
        %3711 = vmatprep.mubr.f32.mxu0 0.0
        %3712 = vmatmul.mubr.f32.gmra.mrb[0].mxu0 %v3585
        %v3713 = vpop.f32.mrb[0].mxu0
        %v3714 = vadd.f32 0.0, %v3713
        %v3715 = vpop.f32.mrb[0].mxu0
        %3716 = vmatprep.mubr.f32.mxu0 0.0
        %3717 = vmatmul.mubr.f32.gmra.mrb[0].mxu0 %v3587
        %v3718 = vpop.f32.mrb[0].mxu0
        %v3719 = vadd.f32 0.0, %v3718
        %v3720 = vpop.f32.mrb[0].mxu0
        %3721 = vmatprep.mubr.f32.mxu0 0.0
        %3722 = vmatmul.mubr.f32.gmra.mrb[0].mxu0 %v3589
        %v3723 = vpop.f32.mrb[0].mxu0
        %v3724 = vadd.f32 0.0, %v3723
        %v3725 = vpop.f32.mrb[0].mxu0
        %3726 = vmatprep.mubr.f32.mxu0 0.0
        %3727 = vmatmul.mubr.f32.gmra.mrb[0].mxu0 %v3591
        %v3728 = vpop.f32.mrb[0].mxu0
        %v3729 = vadd.f32 0.0, %v3728
        %v3730 = vpop.f32.mrb[0].mxu0
        %3731 = vmatprep.mubr.f32.mxu0 0.0
        %3732 = vmatmul.mubr.f32.gmra.mrb[0].mxu0 %v3593
        %v3733 = vpop.f32.mrb[0].mxu0
        %v3734 = vadd.f32 0.0, %v3733
        %v3735 = vpop.f32.mrb[0].mxu0
        %3736 = vmatprep.mubr.f32.mxu0 0.0
        %3737 = vmatmul.mubr.f32.gmra.mrb[0].mxu0 %v3595
        %v3738 = vpop.f32.mrb[0].mxu0
        %v3739 = vadd.f32 0.0, %v3738
        %v3740 = vpop.f32.mrb[0].mxu0
        %3741 = vdwg.mxu0
        %v3743 = vsel %vm465, %v1657, 0
        %v3746 = vsel %vm465, %v1658, 0
        %v3749 = vsel %vm465, %v1659, 0
        %v3752 = vsel %vm465, %v1660, 0
        %v3755 = vsel %vm465, %v1661, 0
        %v3758 = vsel %vm465, %v1662, 0
        %v3761 = vsel %vm465, %v1663, 0
        %v3764 = vsel %vm465, %v1664, 0
        %v3767 = vsel %vm465, %v1665, 0
        %v3770 = vsel %vm465, %v1666, 0
        %v3773 = vsel %vm465, %v1667, 0
        %v3776 = vsel %vm465, %v1668, 0
        %3778 = vmatprep.subr.mxu0 0.0
        %3779 = vmatpush1.msra.mxu0 %v3557
        %3780 = vmatprep.subr.mxu0 0.0
        %3781 = vmatpush1.msra.mxu0 %v3558
        %3782 = vmatprep.subr.mxu0 0.0
        %3783 = vmatpush1.msra.mxu0 %v3559
        %3784 = vmatprep.subr.mxu0 0.0
        %3785 = vmatpush1.msra.mxu0 %v3560
        %3786 = vmatprep.subr.mxu0 0.0
        %3787 = vmatpush1.msra.mxu0 %v3561
        %3788 = vmatprep.subr.mxu0 0.0
        %3789 = vmatpush1.msra.mxu0 %v3562
        %3790 = vmatprep.subr.mxu0 0.0
        %3791 = vmatpush1.msra.mxu0 %v3563
        %3792 = vmatprep.subr.mxu0 0.0
        %3793 = vmatpush1.msra.mxu0 %v3564
        %3794 = vmatprep.subr.mxu0 0.0
        %3795 = vmatpush1.msra.mxu0 0.0
        %3796 = vmatprep.subr.mxu0 0.0
        %3797 = vmatpush1.msra.mxu0 0.0
        %3798 = vmatprep.subr.mxu0 0.0
        %3799 = vmatpush1.msra.mxu0 0.0
        %3800 = vmatprep.subr.mxu0 0.0
        %3801 = vmatpush1.msra.mxu0 0.0
        %3802 = vmatprep.subr.mxu0 0.0
        %3803 = vmatpush1.msra.mxu0 0.0
        %3804 = vmatprep.subr.mxu0 0.0
        %3805 = vmatpush1.msra.mxu0 0.0
        %3806 = vmatprep.subr.mxu0 0.0
        %3807 = vmatpush1.msra.mxu0 0.0
        %3808 = vmatprep.subr.mxu0 0.0
        %3809 = vmatpush1.msra.mxu0 0.0
        %3810 = vmatprep.subr.mxu0 0.0
        %3811 = vmatpush1.msra.mxu0 0.0
        %3812 = vmatprep.subr.mxu0 0.0
        %3813 = vmatpush1.msra.mxu0 0.0
        %3814 = vmatprep.subr.mxu0 0.0
        %3815 = vmatpush1.msra.mxu0 0.0
        %3816 = vmatprep.subr.mxu0 0.0
        %3817 = vmatpush1.msra.mxu0 0.0
        %3818 = vmatprep.subr.mxu0 0.0
        %3819 = vmatpush1.msra.mxu0 0.0
        %3820 = vmatprep.subr.mxu0 0.0
        %3821 = vmatpush1.msra.mxu0 0.0
        %3822 = vmatprep.subr.mxu0 0.0
        %3823 = vmatpush1.msra.mxu0 0.0
        %3824 = vmatprep.subr.mxu0 0.0
        %3825 = vmatpush1.msra.mxu0 0.0
        %3826 = vmatprep.subr.mxu0 0.0
        %3827 = vmatpush1.msra.mxu0 0.0
        %3828 = vmatprep.subr.mxu0 0.0
        %3829 = vmatpush1.msra.mxu0 0.0
        %3830 = vmatprep.subr.mxu0 0.0
        %3831 = vmatpush1.msra.mxu0 0.0
        %3832 = vmatprep.subr.mxu0 0.0
        %3833 = vmatpush1.msra.mxu0 0.0
        %3834 = vmatprep.subr.mxu0 0.0
        %3835 = vmatpush1.msra.mxu0 0.0
        %3836 = vmatprep.subr.mxu0 0.0
        %3837 = vmatpush1.msra.mxu0 0.0
        %3838 = vmatprep.subr.mxu0 0.0
        %3839 = vmatpush1.msra.mxu0 0.0
        %3840 = vmatprep.subr.mxu0 0.0
        %3841 = vmatpush1.msra.mxu0 0.0
        %3842 = vmatprep.mubr.f32.mxu0 0.0
        %3843 = vmatmul.mubr.f32.gmra.mrb[0].mxu0 %v2461
        %v3844 = vpop.f32.mrb[0].mxu0
        %v3845 = vadd.f32 %v3664, %v3844
        %v3846 = vpop.f32.mrb[0].mxu0
        %3847 = vmatprep.mubr.f32.mxu0 0.0
        %3848 = vmatmul.mubr.f32.gmra.mrb[0].mxu0 %v2464
        %v3849 = vpop.f32.mrb[0].mxu0
        %v3850 = vadd.f32 %v3669, %v3849
        %v3851 = vpop.f32.mrb[0].mxu0
        %3852 = vmatprep.mubr.f32.mxu0 0.0
        %3853 = vmatmul.mubr.f32.gmra.mrb[0].mxu0 %v2987
        %v3854 = vpop.f32.mrb[0].mxu0
        %v3855 = vadd.f32 %v3674, %v3854
        %v3856 = vpop.f32.mrb[0].mxu0
        %3857 = vmatprep.mubr.f32.mxu0 0.0
        %3858 = vmatmul.mubr.f32.gmra.mrb[0].mxu0 %v2990
        %v3859 = vpop.f32.mrb[0].mxu0
        %v3860 = vadd.f32 %v3679, %v3859
        %v3861 = vpop.f32.mrb[0].mxu0
        %3862 = vmatprep.mubr.f32.mxu0 0.0
        %3863 = vmatmul.mubr.f32.gmra.mrb[0].mxu0 %v3743
        %v3864 = vpop.f32.mrb[0].mxu0
        %v3865 = vadd.f32 %v3684, %v3864
        %v3866 = vpop.f32.mrb[0].mxu0
        %3867 = vmatprep.mubr.f32.mxu0 0.0
        %3868 = vmatmul.mubr.f32.gmra.mrb[0].mxu0 %v3746
        %v3869 = vpop.f32.mrb[0].mxu0
        %v3870 = vadd.f32 %v3689, %v3869
        %v3871 = vpop.f32.mrb[0].mxu0
        %3872 = vmatprep.mubr.f32.mxu0 0.0
        %3873 = vmatmul.mubr.f32.gmra.mrb[0].mxu0 %v3749
        %v3874 = vpop.f32.mrb[0].mxu0
        %v3875 = vadd.f32 %v3694, %v3874
        %v3876 = vpop.f32.mrb[0].mxu0
        %3877 = vmatprep.mubr.f32.mxu0 0.0
        %3878 = vmatmul.mubr.f32.gmra.mrb[0].mxu0 %v3752
        %v3879 = vpop.f32.mrb[0].mxu0
        %v3880 = vadd.f32 %v3699, %v3879
        %v3881 = vpop.f32.mrb[0].mxu0
        %3882 = vmatprep.mubr.f32.mxu0 0.0
        %3883 = vmatmul.mubr.f32.gmra.mrb[0].mxu0 %v3755
        %v3884 = vpop.f32.mrb[0].mxu0
        %v3885 = vadd.f32 %v3704, %v3884
        %v3886 = vpop.f32.mrb[0].mxu0
        %3887 = vmatprep.mubr.f32.mxu0 0.0
        %3888 = vmatmul.mubr.f32.gmra.mrb[0].mxu0 %v3758
        %v3889 = vpop.f32.mrb[0].mxu0
        %v3890 = vadd.f32 %v3709, %v3889
        %v3891 = vpop.f32.mrb[0].mxu0
        %3892 = vmatprep.mubr.f32.mxu0 0.0
        %3893 = vmatmul.mubr.f32.gmra.mrb[0].mxu0 %v3761
        %v3894 = vpop.f32.mrb[0].mxu0
        %v3895 = vadd.f32 %v3714, %v3894
        %v3896 = vpop.f32.mrb[0].mxu0
        %3897 = vmatprep.mubr.f32.mxu0 0.0
        %3898 = vmatmul.mubr.f32.gmra.mrb[0].mxu0 %v3764
        %v3899 = vpop.f32.mrb[0].mxu0
        %v3900 = vadd.f32 %v3719, %v3899
        %v3901 = vpop.f32.mrb[0].mxu0
        %3902 = vmatprep.mubr.f32.mxu0 0.0
        %3903 = vmatmul.mubr.f32.gmra.mrb[0].mxu0 %v3767
        %v3904 = vpop.f32.mrb[0].mxu0
        %v3905 = vadd.f32 %v3724, %v3904
        %v3906 = vpop.f32.mrb[0].mxu0
        %3907 = vmatprep.mubr.f32.mxu0 0.0
        %3908 = vmatmul.mubr.f32.gmra.mrb[0].mxu0 %v3770
        %v3909 = vpop.f32.mrb[0].mxu0
        %v3910 = vadd.f32 %v3729, %v3909
        %v3911 = vpop.f32.mrb[0].mxu0
        %3912 = vmatprep.mubr.f32.mxu0 0.0
        %3913 = vmatmul.mubr.f32.gmra.mrb[0].mxu0 %v3773
        %v3914 = vpop.f32.mrb[0].mxu0
        %v3915 = vadd.f32 %v3734, %v3914
        %v3916 = vpop.f32.mrb[0].mxu0
        %3917 = vmatprep.mubr.f32.mxu0 0.0
        %3918 = vmatmul.mubr.f32.gmra.mrb[0].mxu0 %v3776
        %v3919 = vpop.f32.mrb[0].mxu0
        %v3920 = vadd.f32 %v3739, %v3919
        %v3921 = vpop.f32.mrb[0].mxu0
        %3922 = vdwg.mxu0
        %v3923 = vld [vmem:[%s2233] sm:$0xff]
        %v3924 = vld [vmem:[%s2233 + $0x8] sm:$0xff]
        %v3925 = vld [vmem:[%s2233 + $0x10] sm:$0xff]
        %v3926 = vld [vmem:[%s2233 + $0x18] sm:$0xff]
        %v3927 = vld [vmem:[%s2233 + $0x20] sm:$0xff]
        %v3928 = vld [vmem:[%s2233 + $0x28] sm:$0xff]
        %v3929 = vld [vmem:[%s2233 + $0x30] sm:$0xff]
        %v3930 = vld [vmem:[%s2233 + $0x38] sm:$0xff]
        %v3932 = vsel %vm465, %v1831, 0
        %v3935 = vsel %vm465, %v1832, 0
        %v3938 = vsel %vm465, %v1833, 0
        %v3941 = vsel %vm465, %v1834, 0
        %v3944 = vsel %vm465, %v1835, 0
        %v3947 = vsel %vm465, %v1836, 0
        %v3950 = vsel %vm465, %v1837, 0
        %v3953 = vsel %vm465, %v1838, 0
        %v3956 = vsel %vm465, %v1839, 0
        %v3959 = vsel %vm465, %v1840, 0
        %v3962 = vsel %vm465, %v1841, 0
        %v3965 = vsel %vm465, %v1842, 0
        %3967 = vmatprep.subr.mxu0 0.0
        %3968 = vmatpush1.msra.mxu0 %v3923
        %3969 = vmatprep.subr.mxu0 0.0
        %3970 = vmatpush1.msra.mxu0 %v3924
        %3971 = vmatprep.subr.mxu0 0.0
        %3972 = vmatpush1.msra.mxu0 %v3925
        %3973 = vmatprep.subr.mxu0 0.0
        %3974 = vmatpush1.msra.mxu0 %v3926
        %3975 = vmatprep.subr.mxu0 0.0
        %3976 = vmatpush1.msra.mxu0 %v3927
        %3977 = vmatprep.subr.mxu0 0.0
        %3978 = vmatpush1.msra.mxu0 %v3928
        %3979 = vmatprep.subr.mxu0 0.0
        %3980 = vmatpush1.msra.mxu0 %v3929
        %3981 = vmatprep.subr.mxu0 0.0
        %3982 = vmatpush1.msra.mxu0 %v3930
        %3983 = vmatprep.subr.mxu0 0.0
        %3984 = vmatpush1.msra.mxu0 0.0
        %3985 = vmatprep.subr.mxu0 0.0
        %3986 = vmatpush1.msra.mxu0 0.0
        %3987 = vmatprep.subr.mxu0 0.0
        %3988 = vmatpush1.msra.mxu0 0.0
        %3989 = vmatprep.subr.mxu0 0.0
        %3990 = vmatpush1.msra.mxu0 0.0
        %3991 = vmatprep.subr.mxu0 0.0
        %3992 = vmatpush1.msra.mxu0 0.0
        %3993 = vmatprep.subr.mxu0 0.0
        %3994 = vmatpush1.msra.mxu0 0.0
        %3995 = vmatprep.subr.mxu0 0.0
        %3996 = vmatpush1.msra.mxu0 0.0
        %3997 = vmatprep.subr.mxu0 0.0
        %3998 = vmatpush1.msra.mxu0 0.0
        %3999 = vmatprep.subr.mxu0 0.0
        %4000 = vmatpush1.msra.mxu0 0.0
        %4001 = vmatprep.subr.mxu0 0.0
        %4002 = vmatpush1.msra.mxu0 0.0
        %4003 = vmatprep.subr.mxu0 0.0
        %4004 = vmatpush1.msra.mxu0 0.0
        %4005 = vmatprep.subr.mxu0 0.0
        %4006 = vmatpush1.msra.mxu0 0.0
        %4007 = vmatprep.subr.mxu0 0.0
        %4008 = vmatpush1.msra.mxu0 0.0
        %4009 = vmatprep.subr.mxu0 0.0
        %4010 = vmatpush1.msra.mxu0 0.0
        %4011 = vmatprep.subr.mxu0 0.0
        %4012 = vmatpush1.msra.mxu0 0.0
        %4013 = vmatprep.subr.mxu0 0.0
        %4014 = vmatpush1.msra.mxu0 0.0
        %4015 = vmatprep.subr.mxu0 0.0
        %4016 = vmatpush1.msra.mxu0 0.0
        %4017 = vmatprep.subr.mxu0 0.0
        %4018 = vmatpush1.msra.mxu0 0.0
        %4019 = vmatprep.subr.mxu0 0.0
        %4020 = vmatpush1.msra.mxu0 0.0
        %4021 = vmatprep.subr.mxu0 0.0
        %4022 = vmatpush1.msra.mxu0 0.0
        %4023 = vmatprep.subr.mxu0 0.0
        %4024 = vmatpush1.msra.mxu0 0.0
        %4025 = vmatprep.subr.mxu0 0.0
        %4026 = vmatpush1.msra.mxu0 0.0
        %4027 = vmatprep.subr.mxu0 0.0
        %4028 = vmatpush1.msra.mxu0 0.0
        %4029 = vmatprep.subr.mxu0 0.0
        %4030 = vmatpush1.msra.mxu0 0.0
        %4031 = vmatprep.mubr.f32.mxu0 0.0
        %4032 = vmatmul.mubr.f32.gmra.mrb[0].mxu0 %v2811
        %v4033 = vpop.f32.mrb[0].mxu0
        %v4034 = vadd.f32 0.0, %v4033
        %v4035 = vpop.f32.mrb[0].mxu0
        %4036 = vmatprep.mubr.f32.mxu0 0.0
        %4037 = vmatmul.mubr.f32.gmra.mrb[0].mxu0 %v2814
        %v4038 = vpop.f32.mrb[0].mxu0
        %v4039 = vadd.f32 0.0, %v4038
        %v4040 = vpop.f32.mrb[0].mxu0
        %4041 = vmatprep.mubr.f32.mxu0 0.0
        %4042 = vmatmul.mubr.f32.gmra.mrb[0].mxu0 %v3337
        %v4043 = vpop.f32.mrb[0].mxu0
        %v4044 = vadd.f32 0.0, %v4043
        %v4045 = vpop.f32.mrb[0].mxu0
        %4046 = vmatprep.mubr.f32.mxu0 0.0
        %4047 = vmatmul.mubr.f32.gmra.mrb[0].mxu0 %v3340
        %v4048 = vpop.f32.mrb[0].mxu0
        %v4049 = vadd.f32 0.0, %v4048
        %v4050 = vpop.f32.mrb[0].mxu0
        %4051 = vmatprep.mubr.f32.mxu0 0.0
        %4052 = vmatmul.mubr.f32.gmra.mrb[0].mxu0 %v3932
        %v4053 = vpop.f32.mrb[0].mxu0
        %v4054 = vadd.f32 0.0, %v4053
        %v4055 = vpop.f32.mrb[0].mxu0
        %4056 = vmatprep.mubr.f32.mxu0 0.0
        %4057 = vmatmul.mubr.f32.gmra.mrb[0].mxu0 %v3935
        %v4058 = vpop.f32.mrb[0].mxu0
        %v4059 = vadd.f32 0.0, %v4058
        %v4060 = vpop.f32.mrb[0].mxu0
        %4061 = vmatprep.mubr.f32.mxu0 0.0
        %4062 = vmatmul.mubr.f32.gmra.mrb[0].mxu0 %v3938
        %v4063 = vpop.f32.mrb[0].mxu0
        %v4064 = vadd.f32 0.0, %v4063
        %v4065 = vpop.f32.mrb[0].mxu0
        %4066 = vmatprep.mubr.f32.mxu0 0.0
        %4067 = vmatmul.mubr.f32.gmra.mrb[0].mxu0 %v3941
        %v4068 = vpop.f32.mrb[0].mxu0
        %v4069 = vadd.f32 0.0, %v4068
        %v4070 = vpop.f32.mrb[0].mxu0
        %4071 = vmatprep.mubr.f32.mxu0 0.0
        %4072 = vmatmul.mubr.f32.gmra.mrb[0].mxu0 %v3944
        %v4073 = vpop.f32.mrb[0].mxu0
        %v4074 = vadd.f32 0.0, %v4073
        %v4075 = vpop.f32.mrb[0].mxu0
        %4076 = vmatprep.mubr.f32.mxu0 0.0
        %4077 = vmatmul.mubr.f32.gmra.mrb[0].mxu0 %v3947
        %v4078 = vpop.f32.mrb[0].mxu0
        %v4079 = vadd.f32 0.0, %v4078
        %v4080 = vpop.f32.mrb[0].mxu0
        %4081 = vmatprep.mubr.f32.mxu0 0.0
        %4082 = vmatmul.mubr.f32.gmra.mrb[0].mxu0 %v3950
        %v4083 = vpop.f32.mrb[0].mxu0
        %v4084 = vadd.f32 0.0, %v4083
        %v4085 = vpop.f32.mrb[0].mxu0
        %4086 = vmatprep.mubr.f32.mxu0 0.0
        %4087 = vmatmul.mubr.f32.gmra.mrb[0].mxu0 %v3953
        %v4088 = vpop.f32.mrb[0].mxu0
        %v4089 = vadd.f32 0.0, %v4088
        %v4090 = vpop.f32.mrb[0].mxu0
        %4091 = vmatprep.mubr.f32.mxu0 0.0
        %4092 = vmatmul.mubr.f32.gmra.mrb[0].mxu0 %v3956
        %v4093 = vpop.f32.mrb[0].mxu0
        %v4094 = vadd.f32 0.0, %v4093
        %v4095 = vpop.f32.mrb[0].mxu0
        %4096 = vmatprep.mubr.f32.mxu0 0.0
        %4097 = vmatmul.mubr.f32.gmra.mrb[0].mxu0 %v3959
        %v4098 = vpop.f32.mrb[0].mxu0
        %v4099 = vadd.f32 0.0, %v4098
        %v4100 = vpop.f32.mrb[0].mxu0
        %4101 = vmatprep.mubr.f32.mxu0 0.0
        %4102 = vmatmul.mubr.f32.gmra.mrb[0].mxu0 %v3962
        %v4103 = vpop.f32.mrb[0].mxu0
        %v4104 = vadd.f32 0.0, %v4103
        %v4105 = vpop.f32.mrb[0].mxu0
        %4106 = vmatprep.mubr.f32.mxu0 0.0
        %4107 = vmatmul.mubr.f32.gmra.mrb[0].mxu0 %v3965
        %v4108 = vpop.f32.mrb[0].mxu0
        %v4109 = vadd.f32 0.0, %v4108
        %v4110 = vpop.f32.mrb[0].mxu0
        %4111 = vdwg.mxu0
        %v4112 = vadd.f32 %v3845, %v4034
        %v4113 = vadd.f32 %v3850, %v4039
        %v4114 = vadd.f32 %v3855, %v4044
        %v4115 = vadd.f32 %v3860, %v4049
        %v4116 = vadd.f32 %v3865, %v4054
        %v4117 = vadd.f32 %v3870, %v4059
        %v4118 = vadd.f32 %v3875, %v4064
        %v4119 = vadd.f32 %v3880, %v4069
        %v4120 = vadd.f32 %v3885, %v4074
        %v4121 = vadd.f32 %v3890, %v4079
        %v4122 = vadd.f32 %v3895, %v4084
        %v4123 = vadd.f32 %v3900, %v4089
        %v4124 = vadd.f32 %v3905, %v4094
        %v4125 = vadd.f32 %v3910, %v4099
        %v4126 = vadd.f32 %v3915, %v4104
        %v4127 = vadd.f32 %v3920, %v4109
        %v4128 = vld [vmem:[%s2451] sm:$0xff]
        %v4129 = vld [vmem:[%s2451 + $0x8] sm:$0xff]
        %v4130 = vld [vmem:[%s2451 + $0x10] sm:$0xff]
        %v4131 = vld [vmem:[%s2451 + $0x18] sm:$0xff]
        %v4132 = vld [vmem:[%s2451 + $0x20] sm:$0xff]
        %v4133 = vld [vmem:[%s2451 + $0x28] sm:$0xff]
        %v4134 = vld [vmem:[%s2451 + $0x30] sm:$0xff]
        %v4135 = vld [vmem:[%s2451 + $0x38] sm:$0xff]
        %v4137 = vsel %vm465, %v1669, 0
        %v4140 = vsel %vm465, %v1670, 0
        %4142 = vmatprep.subr.mxu0 0.0
        %4143 = vmatpush1.msra.mxu0 %v4128
        %4144 = vmatprep.subr.mxu0 0.0
        %4145 = vmatpush1.msra.mxu0 %v4129
        %4146 = vmatprep.subr.mxu0 0.0
        %4147 = vmatpush1.msra.mxu0 %v4130
        %4148 = vmatprep.subr.mxu0 0.0
        %4149 = vmatpush1.msra.mxu0 %v4131
        %4150 = vmatprep.subr.mxu0 0.0
        %4151 = vmatpush1.msra.mxu0 %v4132
        %4152 = vmatprep.subr.mxu0 0.0
        %4153 = vmatpush1.msra.mxu0 %v4133
        %4154 = vmatprep.subr.mxu0 0.0
        %4155 = vmatpush1.msra.mxu0 %v4134
        %4156 = vmatprep.subr.mxu0 0.0
        %4157 = vmatpush1.msra.mxu0 %v4135
        %4158 = vmatprep.subr.mxu0 0.0
        %4159 = vmatpush1.msra.mxu0 0.0
        %4160 = vmatprep.subr.mxu0 0.0
        %4161 = vmatpush1.msra.mxu0 0.0
        %4162 = vmatprep.subr.mxu0 0.0
        %4163 = vmatpush1.msra.mxu0 0.0
        %4164 = vmatprep.subr.mxu0 0.0
        %4165 = vmatpush1.msra.mxu0 0.0
        %4166 = vmatprep.subr.mxu0 0.0
        %4167 = vmatpush1.msra.mxu0 0.0
        %4168 = vmatprep.subr.mxu0 0.0
        %4169 = vmatpush1.msra.mxu0 0.0
        %4170 = vmatprep.subr.mxu0 0.0
        %4171 = vmatpush1.msra.mxu0 0.0
        %4172 = vmatprep.subr.mxu0 0.0
        %4173 = vmatpush1.msra.mxu0 0.0
        %4174 = vmatprep.subr.mxu0 0.0
        %4175 = vmatpush1.msra.mxu0 0.0
        %4176 = vmatprep.subr.mxu0 0.0
        %4177 = vmatpush1.msra.mxu0 0.0
        %4178 = vmatprep.subr.mxu0 0.0
        %4179 = vmatpush1.msra.mxu0 0.0
        %4180 = vmatprep.subr.mxu0 0.0
        %4181 = vmatpush1.msra.mxu0 0.0
        %4182 = vmatprep.subr.mxu0 0.0
        %4183 = vmatpush1.msra.mxu0 0.0
        %4184 = vmatprep.subr.mxu0 0.0
        %4185 = vmatpush1.msra.mxu0 0.0
        %4186 = vmatprep.subr.mxu0 0.0
        %4187 = vmatpush1.msra.mxu0 0.0
        %4188 = vmatprep.subr.mxu0 0.0
        %4189 = vmatpush1.msra.mxu0 0.0
        %4190 = vmatprep.subr.mxu0 0.0
        %4191 = vmatpush1.msra.mxu0 0.0
        %4192 = vmatprep.subr.mxu0 0.0
        %4193 = vmatpush1.msra.mxu0 0.0
        %4194 = vmatprep.subr.mxu0 0.0
        %4195 = vmatpush1.msra.mxu0 0.0
        %4196 = vmatprep.subr.mxu0 0.0
        %4197 = vmatpush1.msra.mxu0 0.0
        %4198 = vmatprep.subr.mxu0 0.0
        %4199 = vmatpush1.msra.mxu0 0.0
        %4200 = vmatprep.subr.mxu0 0.0
        %4201 = vmatpush1.msra.mxu0 0.0
        %4202 = vmatprep.subr.mxu0 0.0
        %4203 = vmatpush1.msra.mxu0 0.0
        %4204 = vmatprep.subr.mxu0 0.0
        %4205 = vmatpush1.msra.mxu0 0.0
        %4206 = vmatprep.mubr.f32.mxu0 0.0
        %4207 = vmatmul.mubr.f32.gmra.mrb[0].mxu0 %v2987
        %v4208 = vpop.f32.mrb[0].mxu0
        %v4209 = vadd.f32 0.0, %v4208
        %v4210 = vpop.f32.mrb[0].mxu0
        %4211 = vmatprep.mubr.f32.mxu0 0.0
        %4212 = vmatmul.mubr.f32.gmra.mrb[0].mxu0 %v2990
        %v4213 = vpop.f32.mrb[0].mxu0
        %v4214 = vadd.f32 0.0, %v4213
        %v4215 = vpop.f32.mrb[0].mxu0
        %4216 = vmatprep.mubr.f32.mxu0 0.0
        %4217 = vmatmul.mubr.f32.gmra.mrb[0].mxu0 %v3743
        %v4218 = vpop.f32.mrb[0].mxu0
        %v4219 = vadd.f32 0.0, %v4218
        %v4220 = vpop.f32.mrb[0].mxu0
        %4221 = vmatprep.mubr.f32.mxu0 0.0
        %4222 = vmatmul.mubr.f32.gmra.mrb[0].mxu0 %v3746
        %v4223 = vpop.f32.mrb[0].mxu0
        %v4224 = vadd.f32 0.0, %v4223
        %v4225 = vpop.f32.mrb[0].mxu0
        %4226 = vmatprep.mubr.f32.mxu0 0.0
        %4227 = vmatmul.mubr.f32.gmra.mrb[0].mxu0 %v3749
        %v4228 = vpop.f32.mrb[0].mxu0
        %v4229 = vadd.f32 0.0, %v4228
        %v4230 = vpop.f32.mrb[0].mxu0
        %4231 = vmatprep.mubr.f32.mxu0 0.0
        %4232 = vmatmul.mubr.f32.gmra.mrb[0].mxu0 %v3752
        %v4233 = vpop.f32.mrb[0].mxu0
        %v4234 = vadd.f32 0.0, %v4233
        %v4235 = vpop.f32.mrb[0].mxu0
        %4236 = vmatprep.mubr.f32.mxu0 0.0
        %4237 = vmatmul.mubr.f32.gmra.mrb[0].mxu0 %v3755
        %v4238 = vpop.f32.mrb[0].mxu0
        %v4239 = vadd.f32 0.0, %v4238
        %v4240 = vpop.f32.mrb[0].mxu0
        %4241 = vmatprep.mubr.f32.mxu0 0.0
        %4242 = vmatmul.mubr.f32.gmra.mrb[0].mxu0 %v3758
        %v4243 = vpop.f32.mrb[0].mxu0
        %v4244 = vadd.f32 0.0, %v4243
        %v4245 = vpop.f32.mrb[0].mxu0
        %4246 = vmatprep.mubr.f32.mxu0 0.0
        %4247 = vmatmul.mubr.f32.gmra.mrb[0].mxu0 %v3761
        %v4248 = vpop.f32.mrb[0].mxu0
        %v4249 = vadd.f32 0.0, %v4248
        %v4250 = vpop.f32.mrb[0].mxu0
        %4251 = vmatprep.mubr.f32.mxu0 0.0
        %4252 = vmatmul.mubr.f32.gmra.mrb[0].mxu0 %v3764
        %v4253 = vpop.f32.mrb[0].mxu0
        %v4254 = vadd.f32 0.0, %v4253
        %v4255 = vpop.f32.mrb[0].mxu0
        %4256 = vmatprep.mubr.f32.mxu0 0.0
        %4257 = vmatmul.mubr.f32.gmra.mrb[0].mxu0 %v3767
        %v4258 = vpop.f32.mrb[0].mxu0
        %v4259 = vadd.f32 0.0, %v4258
        %v4260 = vpop.f32.mrb[0].mxu0
        %4261 = vmatprep.mubr.f32.mxu0 0.0
        %4262 = vmatmul.mubr.f32.gmra.mrb[0].mxu0 %v3770
        %v4263 = vpop.f32.mrb[0].mxu0
        %v4264 = vadd.f32 0.0, %v4263
        %v4265 = vpop.f32.mrb[0].mxu0
        %4266 = vmatprep.mubr.f32.mxu0 0.0
        %4267 = vmatmul.mubr.f32.gmra.mrb[0].mxu0 %v3773
        %v4268 = vpop.f32.mrb[0].mxu0
        %v4269 = vadd.f32 0.0, %v4268
        %v4270 = vpop.f32.mrb[0].mxu0
        %4271 = vmatprep.mubr.f32.mxu0 0.0
        %4272 = vmatmul.mubr.f32.gmra.mrb[0].mxu0 %v3776
        %v4273 = vpop.f32.mrb[0].mxu0
        %v4274 = vadd.f32 0.0, %v4273
        %v4275 = vpop.f32.mrb[0].mxu0
        %4276 = vmatprep.mubr.f32.mxu0 0.0
        %4277 = vmatmul.mubr.f32.gmra.mrb[0].mxu0 %v4137
        %v4278 = vpop.f32.mrb[0].mxu0
        %v4279 = vadd.f32 0.0, %v4278
        %v4280 = vpop.f32.mrb[0].mxu0
        %4281 = vmatprep.mubr.f32.mxu0 0.0
        %4282 = vmatmul.mubr.f32.gmra.mrb[0].mxu0 %v4140
        %v4283 = vpop.f32.mrb[0].mxu0
        %v4284 = vadd.f32 0.0, %v4283
        %v4285 = vpop.f32.mrb[0].mxu0
        %4286 = vdwg.mxu0
        %v4287 = vadd.f32 %v4112, %v4209
        %v4288 = vadd.f32 %v4113, %v4214
        %v4289 = vadd.f32 %v4114, %v4219
        %v4290 = vadd.f32 %v4115, %v4224
        %v4291 = vadd.f32 %v4116, %v4229
        %v4292 = vadd.f32 %v4117, %v4234
        %v4293 = vadd.f32 %v4118, %v4239
        %v4294 = vadd.f32 %v4119, %v4244
        %v4295 = vadd.f32 %v4120, %v4249
        %v4296 = vadd.f32 %v4121, %v4254
        %v4297 = vadd.f32 %v4122, %v4259
        %v4298 = vadd.f32 %v4123, %v4264
        %v4299 = vadd.f32 %v4124, %v4269
        %v4300 = vadd.f32 %v4125, %v4274
        %v4301 = vadd.f32 %v4126, %v4279
        %v4302 = vadd.f32 %v4127, %v4284
        %v4303 = vld [vmem:[%s2627] sm:$0xff]
        %v4304 = vld [vmem:[%s2627 + $0x8] sm:$0xff]
        %v4305 = vld [vmem:[%s2627 + $0x10] sm:$0xff]
        %v4306 = vld [vmem:[%s2627 + $0x18] sm:$0xff]
        %v4307 = vld [vmem:[%s2627 + $0x20] sm:$0xff]
        %v4308 = vld [vmem:[%s2627 + $0x28] sm:$0xff]
        %v4309 = vld [vmem:[%s2627 + $0x30] sm:$0xff]
        %v4310 = vld [vmem:[%s2627 + $0x38] sm:$0xff]
        %v4311 = vsel %vm465, %v1391, 0
        %v4313 = vsel %vm465, %v1392, 0
        %4315 = vmatprep.subr.mxu0 0.0
        %4316 = vmatpush1.msra.mxu0 %v4303
        %4317 = vmatprep.subr.mxu0 0.0
        %4318 = vmatpush1.msra.mxu0 %v4304
        %4319 = vmatprep.subr.mxu0 0.0
        %4320 = vmatpush1.msra.mxu0 %v4305
        %4321 = vmatprep.subr.mxu0 0.0
        %4322 = vmatpush1.msra.mxu0 %v4306
        %4323 = vmatprep.subr.mxu0 0.0
        %4324 = vmatpush1.msra.mxu0 %v4307
        %4325 = vmatprep.subr.mxu0 0.0
        %4326 = vmatpush1.msra.mxu0 %v4308
        %4327 = vmatprep.subr.mxu0 0.0
        %4328 = vmatpush1.msra.mxu0 %v4309
        %4329 = vmatprep.subr.mxu0 0.0
        %4330 = vmatpush1.msra.mxu0 %v4310
        %4331 = vmatprep.subr.mxu0 0.0
        %4332 = vmatpush1.msra.mxu0 0.0
        %4333 = vmatprep.subr.mxu0 0.0
        %4334 = vmatpush1.msra.mxu0 0.0
        %4335 = vmatprep.subr.mxu0 0.0
        %4336 = vmatpush1.msra.mxu0 0.0
        %4337 = vmatprep.subr.mxu0 0.0
        %4338 = vmatpush1.msra.mxu0 0.0
        %4339 = vmatprep.subr.mxu0 0.0
        %4340 = vmatpush1.msra.mxu0 0.0
        %4341 = vmatprep.subr.mxu0 0.0
        %4342 = vmatpush1.msra.mxu0 0.0
        %4343 = vmatprep.subr.mxu0 0.0
        %4344 = vmatpush1.msra.mxu0 0.0
        %4345 = vmatprep.subr.mxu0 0.0
        %4346 = vmatpush1.msra.mxu0 0.0
        %4347 = vmatprep.subr.mxu0 0.0
        %4348 = vmatpush1.msra.mxu0 0.0
        %4349 = vmatprep.subr.mxu0 0.0
        %4350 = vmatpush1.msra.mxu0 0.0
        %4351 = vmatprep.subr.mxu0 0.0
        %4352 = vmatpush1.msra.mxu0 0.0
        %4353 = vmatprep.subr.mxu0 0.0
        %4354 = vmatpush1.msra.mxu0 0.0
        %4355 = vmatprep.subr.mxu0 0.0
        %4356 = vmatpush1.msra.mxu0 0.0
        %4357 = vmatprep.subr.mxu0 0.0
        %4358 = vmatpush1.msra.mxu0 0.0
        %4359 = vmatprep.subr.mxu0 0.0
        %4360 = vmatpush1.msra.mxu0 0.0
        %4361 = vmatprep.subr.mxu0 0.0
        %4362 = vmatpush1.msra.mxu0 0.0
        %4363 = vmatprep.subr.mxu0 0.0
        %4364 = vmatpush1.msra.mxu0 0.0
        %4365 = vmatprep.subr.mxu0 0.0
        %4366 = vmatpush1.msra.mxu0 0.0
        %4367 = vmatprep.subr.mxu0 0.0
        %4368 = vmatpush1.msra.mxu0 0.0
        %4369 = vmatprep.subr.mxu0 0.0
        %4370 = vmatpush1.msra.mxu0 0.0
        %4371 = vmatprep.subr.mxu0 0.0
        %4372 = vmatpush1.msra.mxu0 0.0
        %4373 = vmatprep.subr.mxu0 0.0
        %4374 = vmatpush1.msra.mxu0 0.0
        %4375 = vmatprep.subr.mxu0 0.0
        %4376 = vmatpush1.msra.mxu0 0.0
        %4377 = vmatprep.subr.mxu0 0.0
        %4378 = vmatpush1.msra.mxu0 0.0
        %4379 = vmatprep.mubr.f32.mxu0 0.0
        %4380 = vmatmul.mubr.f32.gmra.mrb[0].mxu0 %v3162
        %v4381 = vpop.f32.mrb[0].mxu0
        %v4382 = vadd.f32 0.0, %v4381
        %v4383 = vpop.f32.mrb[0].mxu0
        %4384 = vmatprep.mubr.f32.mxu0 0.0
        %4385 = vmatmul.mubr.f32.gmra.mrb[0].mxu0 %v3164
        %v4386 = vpop.f32.mrb[0].mxu0
        %v4387 = vadd.f32 0.0, %v4386
        %v4388 = vpop.f32.mrb[0].mxu0
        %4389 = vmatprep.mubr.f32.mxu0 0.0
        %4390 = vmatmul.mubr.f32.gmra.mrb[0].mxu0 %v3573
        %v4391 = vpop.f32.mrb[0].mxu0
        %v4392 = vadd.f32 0.0, %v4391
        %v4393 = vpop.f32.mrb[0].mxu0
        %4394 = vmatprep.mubr.f32.mxu0 0.0
        %4395 = vmatmul.mubr.f32.gmra.mrb[0].mxu0 %v3575
        %v4396 = vpop.f32.mrb[0].mxu0
        %v4397 = vadd.f32 0.0, %v4396
        %v4398 = vpop.f32.mrb[0].mxu0
        %4399 = vmatprep.mubr.f32.mxu0 0.0
        %4400 = vmatmul.mubr.f32.gmra.mrb[0].mxu0 %v3577
        %v4401 = vpop.f32.mrb[0].mxu0
        %v4402 = vadd.f32 0.0, %v4401
        %v4403 = vpop.f32.mrb[0].mxu0
        %4404 = vmatprep.mubr.f32.mxu0 0.0
        %4405 = vmatmul.mubr.f32.gmra.mrb[0].mxu0 %v3579
        %v4406 = vpop.f32.mrb[0].mxu0
        %v4407 = vadd.f32 0.0, %v4406
        %v4408 = vpop.f32.mrb[0].mxu0
        %4409 = vmatprep.mubr.f32.mxu0 0.0
        %4410 = vmatmul.mubr.f32.gmra.mrb[0].mxu0 %v3581
        %v4411 = vpop.f32.mrb[0].mxu0
        %v4412 = vadd.f32 0.0, %v4411
        %v4413 = vpop.f32.mrb[0].mxu0
        %4414 = vmatprep.mubr.f32.mxu0 0.0
        %4415 = vmatmul.mubr.f32.gmra.mrb[0].mxu0 %v3583
        %v4416 = vpop.f32.mrb[0].mxu0
        %v4417 = vadd.f32 0.0, %v4416
        %v4418 = vpop.f32.mrb[0].mxu0
        %4419 = vmatprep.mubr.f32.mxu0 0.0
        %4420 = vmatmul.mubr.f32.gmra.mrb[0].mxu0 %v3585
        %v4421 = vpop.f32.mrb[0].mxu0
        %v4422 = vadd.f32 0.0, %v4421
        %v4423 = vpop.f32.mrb[0].mxu0
        %4424 = vmatprep.mubr.f32.mxu0 0.0
        %4425 = vmatmul.mubr.f32.gmra.mrb[0].mxu0 %v3587
        %v4426 = vpop.f32.mrb[0].mxu0
        %v4427 = vadd.f32 0.0, %v4426
        %v4428 = vpop.f32.mrb[0].mxu0
        %4429 = vmatprep.mubr.f32.mxu0 0.0
        %4430 = vmatmul.mubr.f32.gmra.mrb[0].mxu0 %v3589
        %v4431 = vpop.f32.mrb[0].mxu0
        %v4432 = vadd.f32 0.0, %v4431
        %v4433 = vpop.f32.mrb[0].mxu0
        %4434 = vmatprep.mubr.f32.mxu0 0.0
        %4435 = vmatmul.mubr.f32.gmra.mrb[0].mxu0 %v3591
        %v4436 = vpop.f32.mrb[0].mxu0
        %v4437 = vadd.f32 0.0, %v4436
        %v4438 = vpop.f32.mrb[0].mxu0
        %4439 = vmatprep.mubr.f32.mxu0 0.0
        %4440 = vmatmul.mubr.f32.gmra.mrb[0].mxu0 %v3593
        %v4441 = vpop.f32.mrb[0].mxu0
        %v4442 = vadd.f32 0.0, %v4441
        %v4443 = vpop.f32.mrb[0].mxu0
        %4444 = vmatprep.mubr.f32.mxu0 0.0
        %4445 = vmatmul.mubr.f32.gmra.mrb[0].mxu0 %v3595
        %v4446 = vpop.f32.mrb[0].mxu0
        %v4447 = vadd.f32 0.0, %v4446
        %v4448 = vpop.f32.mrb[0].mxu0
        %4449 = vmatprep.mubr.f32.mxu0 0.0
        %4450 = vmatmul.mubr.f32.gmra.mrb[0].mxu0 %v4311
        %v4451 = vpop.f32.mrb[0].mxu0
        %v4452 = vadd.f32 0.0, %v4451
        %v4453 = vpop.f32.mrb[0].mxu0
        %4454 = vmatprep.mubr.f32.mxu0 0.0
        %4455 = vmatmul.mubr.f32.gmra.mrb[0].mxu0 %v4313
        %v4456 = vpop.f32.mrb[0].mxu0
        %v4457 = vadd.f32 0.0, %v4456
        %v4458 = vpop.f32.mrb[0].mxu0
        %4459 = vdwg.mxu0
        %v4460 = vadd.f32 %v4287, %v4382
        %v4461 = vadd.f32 %v4288, %v4387
        %v4462 = vadd.f32 %v4289, %v4392
        %v4463 = vadd.f32 %v4290, %v4397
        %v4464 = vadd.f32 %v4291, %v4402
        %v4465 = vadd.f32 %v4292, %v4407
        %v4466 = vadd.f32 %v4293, %v4412
        %v4467 = vadd.f32 %v4294, %v4417
        %v4468 = vadd.f32 %v4295, %v4422
        %v4469 = vadd.f32 %v4296, %v4427
        %v4470 = vadd.f32 %v4297, %v4432
        %v4471 = vadd.f32 %v4298, %v4437
        %v4472 = vadd.f32 %v4299, %v4442
        %v4473 = vadd.f32 %v4300, %v4447
        %v4474 = vadd.f32 %v4301, %v4452
        %v4475 = vadd.f32 %v4302, %v4457
        %v4476 = vld [vmem:[%s2801] sm:$0xff]
        %v4477 = vld [vmem:[%s2801 + $0x8] sm:$0xff]
        %v4478 = vld [vmem:[%s2801 + $0x10] sm:$0xff]
        %v4479 = vld [vmem:[%s2801 + $0x18] sm:$0xff]
        %v4480 = vld [vmem:[%s2801 + $0x20] sm:$0xff]
        %v4481 = vld [vmem:[%s2801 + $0x28] sm:$0xff]
        %v4482 = vld [vmem:[%s2801 + $0x30] sm:$0xff]
        %v4483 = vld [vmem:[%s2801 + $0x38] sm:$0xff]
        %v4485 = vsel %vm465, %v1843, 0
        %v4488 = vsel %vm465, %v1844, 0
        %4490 = vmatprep.subr.mxu0 0.0
        %4491 = vmatpush1.msra.mxu0 %v4476
        %4492 = vmatprep.subr.mxu0 0.0
        %4493 = vmatpush1.msra.mxu0 %v4477
        %4494 = vmatprep.subr.mxu0 0.0
        %4495 = vmatpush1.msra.mxu0 %v4478
        %4496 = vmatprep.subr.mxu0 0.0
        %4497 = vmatpush1.msra.mxu0 %v4479
        %4498 = vmatprep.subr.mxu0 0.0
        %4499 = vmatpush1.msra.mxu0 %v4480
        %4500 = vmatprep.subr.mxu0 0.0
        %4501 = vmatpush1.msra.mxu0 %v4481
        %4502 = vmatprep.subr.mxu0 0.0
        %4503 = vmatpush1.msra.mxu0 %v4482
        %4504 = vmatprep.subr.mxu0 0.0
        %4505 = vmatpush1.msra.mxu0 %v4483
        %4506 = vmatprep.subr.mxu0 0.0
        %4507 = vmatpush1.msra.mxu0 0.0
        %4508 = vmatprep.subr.mxu0 0.0
        %4509 = vmatpush1.msra.mxu0 0.0
        %4510 = vmatprep.subr.mxu0 0.0
        %4511 = vmatpush1.msra.mxu0 0.0
        %4512 = vmatprep.subr.mxu0 0.0
        %4513 = vmatpush1.msra.mxu0 0.0
        %4514 = vmatprep.subr.mxu0 0.0
        %4515 = vmatpush1.msra.mxu0 0.0
        %4516 = vmatprep.subr.mxu0 0.0
        %4517 = vmatpush1.msra.mxu0 0.0
        %4518 = vmatprep.subr.mxu0 0.0
        %4519 = vmatpush1.msra.mxu0 0.0
        %4520 = vmatprep.subr.mxu0 0.0
        %4521 = vmatpush1.msra.mxu0 0.0
        %4522 = vmatprep.subr.mxu0 0.0
        %4523 = vmatpush1.msra.mxu0 0.0
        %4524 = vmatprep.subr.mxu0 0.0
        %4525 = vmatpush1.msra.mxu0 0.0
        %4526 = vmatprep.subr.mxu0 0.0
        %4527 = vmatpush1.msra.mxu0 0.0
        %4528 = vmatprep.subr.mxu0 0.0
        %4529 = vmatpush1.msra.mxu0 0.0
        %4530 = vmatprep.subr.mxu0 0.0
        %4531 = vmatpush1.msra.mxu0 0.0
        %4532 = vmatprep.subr.mxu0 0.0
        %4533 = vmatpush1.msra.mxu0 0.0
        %4534 = vmatprep.subr.mxu0 0.0
        %4535 = vmatpush1.msra.mxu0 0.0
        %4536 = vmatprep.subr.mxu0 0.0
        %4537 = vmatpush1.msra.mxu0 0.0
        %4538 = vmatprep.subr.mxu0 0.0
        %4539 = vmatpush1.msra.mxu0 0.0
        %4540 = vmatprep.subr.mxu0 0.0
        %4541 = vmatpush1.msra.mxu0 0.0
        %4542 = vmatprep.subr.mxu0 0.0
        %4543 = vmatpush1.msra.mxu0 0.0
        %4544 = vmatprep.subr.mxu0 0.0
        %4545 = vmatpush1.msra.mxu0 0.0
        %4546 = vmatprep.subr.mxu0 0.0
        %4547 = vmatpush1.msra.mxu0 0.0
        %4548 = vmatprep.subr.mxu0 0.0
        %4549 = vmatpush1.msra.mxu0 0.0
        %4550 = vmatprep.subr.mxu0 0.0
        %4551 = vmatpush1.msra.mxu0 0.0
        %4552 = vmatprep.subr.mxu0 0.0
        %4553 = vmatpush1.msra.mxu0 0.0
        %4554 = vmatprep.mubr.f32.mxu0 0.0
        %4555 = vmatmul.mubr.f32.gmra.mrb[0].mxu0 %v3337
        %v4556 = vpop.f32.mrb[0].mxu0
        %v4557 = vadd.f32 0.0, %v4556
        %v4558 = vpop.f32.mrb[0].mxu0
        %4559 = vmatprep.mubr.f32.mxu0 0.0
        %4560 = vmatmul.mubr.f32.gmra.mrb[0].mxu0 %v3340
        %v4561 = vpop.f32.mrb[0].mxu0
        %v4562 = vadd.f32 0.0, %v4561
        %v4563 = vpop.f32.mrb[0].mxu0
        %4564 = vmatprep.mubr.f32.mxu0 0.0
        %4565 = vmatmul.mubr.f32.gmra.mrb[0].mxu0 %v3932
        %v4566 = vpop.f32.mrb[0].mxu0
        %v4567 = vadd.f32 0.0, %v4566
        %v4568 = vpop.f32.mrb[0].mxu0
        %4569 = vmatprep.mubr.f32.mxu0 0.0
        %4570 = vmatmul.mubr.f32.gmra.mrb[0].mxu0 %v3935
        %v4571 = vpop.f32.mrb[0].mxu0
        %v4572 = vadd.f32 0.0, %v4571
        %v4573 = vpop.f32.mrb[0].mxu0
        %4574 = vmatprep.mubr.f32.mxu0 0.0
        %4575 = vmatmul.mubr.f32.gmra.mrb[0].mxu0 %v3938
        %v4576 = vpop.f32.mrb[0].mxu0
        %v4577 = vadd.f32 0.0, %v4576
        %v4578 = vpop.f32.mrb[0].mxu0
        %4579 = vmatprep.mubr.f32.mxu0 0.0
        %4580 = vmatmul.mubr.f32.gmra.mrb[0].mxu0 %v3941
        %v4581 = vpop.f32.mrb[0].mxu0
        %v4582 = vadd.f32 0.0, %v4581
        %v4583 = vpop.f32.mrb[0].mxu0
        %4584 = vmatprep.mubr.f32.mxu0 0.0
        %4585 = vmatmul.mubr.f32.gmra.mrb[0].mxu0 %v3944
        %v4586 = vpop.f32.mrb[0].mxu0
        %v4587 = vadd.f32 0.0, %v4586
        %v4588 = vpop.f32.mrb[0].mxu0
        %4589 = vmatprep.mubr.f32.mxu0 0.0
        %4590 = vmatmul.mubr.f32.gmra.mrb[0].mxu0 %v3947
        %v4591 = vpop.f32.mrb[0].mxu0
        %v4592 = vadd.f32 0.0, %v4591
        %v4593 = vpop.f32.mrb[0].mxu0
        %4594 = vmatprep.mubr.f32.mxu0 0.0
        %4595 = vmatmul.mubr.f32.gmra.mrb[0].mxu0 %v3950
        %v4596 = vpop.f32.mrb[0].mxu0
        %v4597 = vadd.f32 0.0, %v4596
        %v4598 = vpop.f32.mrb[0].mxu0
        %4599 = vmatprep.mubr.f32.mxu0 0.0
        %4600 = vmatmul.mubr.f32.gmra.mrb[0].mxu0 %v3953
        %v4601 = vpop.f32.mrb[0].mxu0
        %v4602 = vadd.f32 0.0, %v4601
        %v4603 = vpop.f32.mrb[0].mxu0
        %4604 = vmatprep.mubr.f32.mxu0 0.0
        %4605 = vmatmul.mubr.f32.gmra.mrb[0].mxu0 %v3956
        %v4606 = vpop.f32.mrb[0].mxu0
        %v4607 = vadd.f32 0.0, %v4606
        %v4608 = vpop.f32.mrb[0].mxu0
        %4609 = vmatprep.mubr.f32.mxu0 0.0
        %4610 = vmatmul.mubr.f32.gmra.mrb[0].mxu0 %v3959
        %v4611 = vpop.f32.mrb[0].mxu0
        %v4612 = vadd.f32 0.0, %v4611
        %v4613 = vpop.f32.mrb[0].mxu0
        %4614 = vmatprep.mubr.f32.mxu0 0.0
        %4615 = vmatmul.mubr.f32.gmra.mrb[0].mxu0 %v3962
        %v4616 = vpop.f32.mrb[0].mxu0
        %v4617 = vadd.f32 0.0, %v4616
        %v4618 = vpop.f32.mrb[0].mxu0
        %4619 = vmatprep.mubr.f32.mxu0 0.0
        %4620 = vmatmul.mubr.f32.gmra.mrb[0].mxu0 %v3965
        %v4621 = vpop.f32.mrb[0].mxu0
        %v4622 = vadd.f32 0.0, %v4621
        %v4623 = vpop.f32.mrb[0].mxu0
        %4624 = vmatprep.mubr.f32.mxu0 0.0
        %4625 = vmatmul.mubr.f32.gmra.mrb[0].mxu0 %v4485
        %v4626 = vpop.f32.mrb[0].mxu0
        %v4627 = vadd.f32 0.0, %v4626
        %v4628 = vpop.f32.mrb[0].mxu0
        %4629 = vmatprep.mubr.f32.mxu0 0.0
        %4630 = vmatmul.mubr.f32.gmra.mrb[0].mxu0 %v4488
        %v4631 = vpop.f32.mrb[0].mxu0
        %v4632 = vadd.f32 0.0, %v4631
        %v4633 = vpop.f32.mrb[0].mxu0
        %4634 = vdwg.mxu0
        %v4635 = vadd.f32 %v4460, %v4557
        %v4636 = vadd.f32 %v4461, %v4562
        %v4637 = vadd.f32 %v4462, %v4567
        %v4638 = vadd.f32 %v4463, %v4572
        %v4639 = vadd.f32 %v4464, %v4577
        %v4640 = vadd.f32 %v4465, %v4582
        %v4641 = vadd.f32 %v4466, %v4587
        %v4642 = vadd.f32 %v4467, %v4592
        %v4643 = vadd.f32 %v4468, %v4597
        %v4644 = vadd.f32 %v4469, %v4602
        %v4645 = vadd.f32 %v4470, %v4607
        %v4646 = vadd.f32 %v4471, %v4612
        %v4647 = vadd.f32 %v4472, %v4617
        %v4648 = vadd.f32 %v4473, %v4622
        %v4649 = vadd.f32 %v4474, %v4627
        %v4650 = vadd.f32 %v4475, %v4632
        %v4651 = vld [vmem:[%s2977] sm:$0xff]
        %v4652 = vld [vmem:[%s2977 + $0x8] sm:$0xff]
        %v4653 = vld [vmem:[%s2977 + $0x10] sm:$0xff]
        %v4654 = vld [vmem:[%s2977 + $0x18] sm:$0xff]
        %v4655 = vld [vmem:[%s2977 + $0x20] sm:$0xff]
        %v4656 = vld [vmem:[%s2977 + $0x28] sm:$0xff]
        %v4657 = vld [vmem:[%s2977 + $0x30] sm:$0xff]
        %v4658 = vld [vmem:[%s2977 + $0x38] sm:$0xff]
        %v4660 = vsel %vm465, %v1671, 0
        %v4663 = vsel %vm465, %v1672, 0
        %4665 = vmatprep.subr.mxu0 0.0
        %4666 = vmatpush1.msra.mxu0 %v4651
        %4667 = vmatprep.subr.mxu0 0.0
        %4668 = vmatpush1.msra.mxu0 %v4652
        %4669 = vmatprep.subr.mxu0 0.0
        %4670 = vmatpush1.msra.mxu0 %v4653
        %4671 = vmatprep.subr.mxu0 0.0
        %4672 = vmatpush1.msra.mxu0 %v4654
        %4673 = vmatprep.subr.mxu0 0.0
        %4674 = vmatpush1.msra.mxu0 %v4655
        %4675 = vmatprep.subr.mxu0 0.0
        %4676 = vmatpush1.msra.mxu0 %v4656
        %4677 = vmatprep.subr.mxu0 0.0
        %4678 = vmatpush1.msra.mxu0 %v4657
        %4679 = vmatprep.subr.mxu0 0.0
        %4680 = vmatpush1.msra.mxu0 %v4658
        %4681 = vmatprep.subr.mxu0 0.0
        %4682 = vmatpush1.msra.mxu0 0.0
        %4683 = vmatprep.subr.mxu0 0.0
        %4684 = vmatpush1.msra.mxu0 0.0
        %4685 = vmatprep.subr.mxu0 0.0
        %4686 = vmatpush1.msra.mxu0 0.0
        %4687 = vmatprep.subr.mxu0 0.0
        %4688 = vmatpush1.msra.mxu0 0.0
        %4689 = vmatprep.subr.mxu0 0.0
        %4690 = vmatpush1.msra.mxu0 0.0
        %4691 = vmatprep.subr.mxu0 0.0
        %4692 = vmatpush1.msra.mxu0 0.0
        %4693 = vmatprep.subr.mxu0 0.0
        %4694 = vmatpush1.msra.mxu0 0.0
        %4695 = vmatprep.subr.mxu0 0.0
        %4696 = vmatpush1.msra.mxu0 0.0
        %4697 = vmatprep.subr.mxu0 0.0
        %4698 = vmatpush1.msra.mxu0 0.0
        %4699 = vmatprep.subr.mxu0 0.0
        %4700 = vmatpush1.msra.mxu0 0.0
        %4701 = vmatprep.subr.mxu0 0.0
        %4702 = vmatpush1.msra.mxu0 0.0
        %4703 = vmatprep.subr.mxu0 0.0
        %4704 = vmatpush1.msra.mxu0 0.0
        %4705 = vmatprep.subr.mxu0 0.0
        %4706 = vmatpush1.msra.mxu0 0.0
        %4707 = vmatprep.subr.mxu0 0.0
        %4708 = vmatpush1.msra.mxu0 0.0
        %4709 = vmatprep.subr.mxu0 0.0
        %4710 = vmatpush1.msra.mxu0 0.0
        %4711 = vmatprep.subr.mxu0 0.0
        %4712 = vmatpush1.msra.mxu0 0.0
        %4713 = vmatprep.subr.mxu0 0.0
        %4714 = vmatpush1.msra.mxu0 0.0
        %4715 = vmatprep.subr.mxu0 0.0
        %4716 = vmatpush1.msra.mxu0 0.0
        %4717 = vmatprep.subr.mxu0 0.0
        %4718 = vmatpush1.msra.mxu0 0.0
        %4719 = vmatprep.subr.mxu0 0.0
        %4720 = vmatpush1.msra.mxu0 0.0
        %4721 = vmatprep.subr.mxu0 0.0
        %4722 = vmatpush1.msra.mxu0 0.0
        %4723 = vmatprep.subr.mxu0 0.0
        %4724 = vmatpush1.msra.mxu0 0.0
        %4725 = vmatprep.subr.mxu0 0.0
        %4726 = vmatpush1.msra.mxu0 0.0
        %4727 = vmatprep.subr.mxu0 0.0
        %4728 = vmatpush1.msra.mxu0 0.0
        %4729 = vmatprep.mubr.f32.mxu0 0.0
        %4730 = vmatmul.mubr.f32.gmra.mrb[0].mxu0 %v3743
        %v4731 = vpop.f32.mrb[0].mxu0
        %v4732 = vadd.f32 0.0, %v4731
        %v4733 = vpop.f32.mrb[0].mxu0
        %4734 = vmatprep.mubr.f32.mxu0 0.0
        %4735 = vmatmul.mubr.f32.gmra.mrb[0].mxu0 %v3746
        %v4736 = vpop.f32.mrb[0].mxu0
        %v4737 = vadd.f32 0.0, %v4736
        %v4738 = vpop.f32.mrb[0].mxu0
        %4739 = vmatprep.mubr.f32.mxu0 0.0
        %4740 = vmatmul.mubr.f32.gmra.mrb[0].mxu0 %v3749
        %v4741 = vpop.f32.mrb[0].mxu0
        %v4742 = vadd.f32 0.0, %v4741
        %v4743 = vpop.f32.mrb[0].mxu0
        %4744 = vmatprep.mubr.f32.mxu0 0.0
        %4745 = vmatmul.mubr.f32.gmra.mrb[0].mxu0 %v3752
        %v4746 = vpop.f32.mrb[0].mxu0
        %v4747 = vadd.f32 0.0, %v4746
        %v4748 = vpop.f32.mrb[0].mxu0
        %4749 = vmatprep.mubr.f32.mxu0 0.0
        %4750 = vmatmul.mubr.f32.gmra.mrb[0].mxu0 %v3755
        %v4751 = vpop.f32.mrb[0].mxu0
        %v4752 = vadd.f32 0.0, %v4751
        %v4753 = vpop.f32.mrb[0].mxu0
        %4754 = vmatprep.mubr.f32.mxu0 0.0
        %4755 = vmatmul.mubr.f32.gmra.mrb[0].mxu0 %v3758
        %v4756 = vpop.f32.mrb[0].mxu0
        %v4757 = vadd.f32 0.0, %v4756
        %v4758 = vpop.f32.mrb[0].mxu0
        %4759 = vmatprep.mubr.f32.mxu0 0.0
        %4760 = vmatmul.mubr.f32.gmra.mrb[0].mxu0 %v3761
        %v4761 = vpop.f32.mrb[0].mxu0
        %v4762 = vadd.f32 0.0, %v4761
        %v4763 = vpop.f32.mrb[0].mxu0
        %4764 = vmatprep.mubr.f32.mxu0 0.0
        %4765 = vmatmul.mubr.f32.gmra.mrb[0].mxu0 %v3764
        %v4766 = vpop.f32.mrb[0].mxu0
        %v4767 = vadd.f32 0.0, %v4766
        %v4768 = vpop.f32.mrb[0].mxu0
        %4769 = vmatprep.mubr.f32.mxu0 0.0
        %4770 = vmatmul.mubr.f32.gmra.mrb[0].mxu0 %v3767
        %v4771 = vpop.f32.mrb[0].mxu0
        %v4772 = vadd.f32 0.0, %v4771
        %v4773 = vpop.f32.mrb[0].mxu0
        %4774 = vmatprep.mubr.f32.mxu0 0.0
        %4775 = vmatmul.mubr.f32.gmra.mrb[0].mxu0 %v3770
        %v4776 = vpop.f32.mrb[0].mxu0
        %v4777 = vadd.f32 0.0, %v4776
        %v4778 = vpop.f32.mrb[0].mxu0
        %4779 = vmatprep.mubr.f32.mxu0 0.0
        %4780 = vmatmul.mubr.f32.gmra.mrb[0].mxu0 %v3773
        %v4781 = vpop.f32.mrb[0].mxu0
        %v4782 = vadd.f32 0.0, %v4781
        %v4783 = vpop.f32.mrb[0].mxu0
        %4784 = vmatprep.mubr.f32.mxu0 0.0
        %4785 = vmatmul.mubr.f32.gmra.mrb[0].mxu0 %v3776
        %v4786 = vpop.f32.mrb[0].mxu0
        %v4787 = vadd.f32 0.0, %v4786
        %v4788 = vpop.f32.mrb[0].mxu0
        %4789 = vmatprep.mubr.f32.mxu0 0.0
        %4790 = vmatmul.mubr.f32.gmra.mrb[0].mxu0 %v4137
        %v4791 = vpop.f32.mrb[0].mxu0
        %v4792 = vadd.f32 0.0, %v4791
        %v4793 = vpop.f32.mrb[0].mxu0
        %4794 = vmatprep.mubr.f32.mxu0 0.0
        %4795 = vmatmul.mubr.f32.gmra.mrb[0].mxu0 %v4140
        %v4796 = vpop.f32.mrb[0].mxu0
        %v4797 = vadd.f32 0.0, %v4796
        %v4798 = vpop.f32.mrb[0].mxu0
        %4799 = vmatprep.mubr.f32.mxu0 0.0
        %4800 = vmatmul.mubr.f32.gmra.mrb[0].mxu0 %v4660
        %v4801 = vpop.f32.mrb[0].mxu0
        %v4802 = vadd.f32 0.0, %v4801
        %v4803 = vpop.f32.mrb[0].mxu0
        %4804 = vmatprep.mubr.f32.mxu0 0.0
        %4805 = vmatmul.mubr.f32.gmra.mrb[0].mxu0 %v4663
        %v4806 = vpop.f32.mrb[0].mxu0
        %v4807 = vadd.f32 0.0, %v4806
        %v4808 = vpop.f32.mrb[0].mxu0
        %4809 = vdwg.mxu0
        %v4810 = vadd.f32 %v4635, %v4732
        %v4811 = vadd.f32 %v4636, %v4737
        %v4812 = vadd.f32 %v4637, %v4742
        %v4813 = vadd.f32 %v4638, %v4747
        %v4814 = vadd.f32 %v4639, %v4752
        %v4815 = vadd.f32 %v4640, %v4757
        %v4816 = vadd.f32 %v4641, %v4762
        %v4817 = vadd.f32 %v4642, %v4767
        %v4818 = vadd.f32 %v4643, %v4772
        %v4819 = vadd.f32 %v4644, %v4777
        %v4820 = vadd.f32 %v4645, %v4782
        %v4821 = vadd.f32 %v4646, %v4787
        %v4822 = vadd.f32 %v4647, %v4792
        %v4823 = vadd.f32 %v4648, %v4797
        %v4824 = vadd.f32 %v4649, %v4802
        %v4825 = vadd.f32 %v4650, %v4807
        %v4826 = vld [vmem:[%s3153] sm:$0xff]
        %v4827 = vld [vmem:[%s3153 + $0x8] sm:$0xff]
        %v4828 = vld [vmem:[%s3153 + $0x10] sm:$0xff]
        %v4829 = vld [vmem:[%s3153 + $0x18] sm:$0xff]
        %v4830 = vld [vmem:[%s3153 + $0x20] sm:$0xff]
        %v4831 = vld [vmem:[%s3153 + $0x28] sm:$0xff]
        %v4832 = vld [vmem:[%s3153 + $0x30] sm:$0xff]
        %v4833 = vld [vmem:[%s3153 + $0x38] sm:$0xff]
        %4834 = vmatprep.subr.mxu0 0.0
        %4835 = vmatpush1.msra.mxu0 %v4826
        %4836 = vmatprep.subr.mxu0 0.0
        %4837 = vmatpush1.msra.mxu0 %v4827
        %4838 = vmatprep.subr.mxu0 0.0
        %4839 = vmatpush1.msra.mxu0 %v4828
        %4840 = vmatprep.subr.mxu0 0.0
        %4841 = vmatpush1.msra.mxu0 %v4829
        %4842 = vmatprep.subr.mxu0 0.0
        %4843 = vmatpush1.msra.mxu0 %v4830
        %4844 = vmatprep.subr.mxu0 0.0
        %4845 = vmatpush1.msra.mxu0 %v4831
        %4846 = vmatprep.subr.mxu0 0.0
        %4847 = vmatpush1.msra.mxu0 %v4832
        %4848 = vmatprep.subr.mxu0 0.0
        %4849 = vmatpush1.msra.mxu0 %v4833
        %4850 = vmatprep.subr.mxu0 0.0
        %4851 = vmatpush1.msra.mxu0 0.0
        %4852 = vmatprep.subr.mxu0 0.0
        %4853 = vmatpush1.msra.mxu0 0.0
        %4854 = vmatprep.subr.mxu0 0.0
        %4855 = vmatpush1.msra.mxu0 0.0
        %4856 = vmatprep.subr.mxu0 0.0
        %4857 = vmatpush1.msra.mxu0 0.0
        %4858 = vmatprep.subr.mxu0 0.0
        %4859 = vmatpush1.msra.mxu0 0.0
        %4860 = vmatprep.subr.mxu0 0.0
        %4861 = vmatpush1.msra.mxu0 0.0
        %4862 = vmatprep.subr.mxu0 0.0
        %4863 = vmatpush1.msra.mxu0 0.0
        %4864 = vmatprep.subr.mxu0 0.0
        %4865 = vmatpush1.msra.mxu0 0.0
        %4866 = vmatprep.subr.mxu0 0.0
        %4867 = vmatpush1.msra.mxu0 0.0
        %4868 = vmatprep.subr.mxu0 0.0
        %4869 = vmatpush1.msra.mxu0 0.0
        %4870 = vmatprep.subr.mxu0 0.0
        %4871 = vmatpush1.msra.mxu0 0.0
        %4872 = vmatprep.subr.mxu0 0.0
        %4873 = vmatpush1.msra.mxu0 0.0
        %4874 = vmatprep.subr.mxu0 0.0
        %4875 = vmatpush1.msra.mxu0 0.0
        %4876 = vmatprep.subr.mxu0 0.0
        %4877 = vmatpush1.msra.mxu0 0.0
        %4878 = vmatprep.subr.mxu0 0.0
        %4879 = vmatpush1.msra.mxu0 0.0
        %4880 = vmatprep.subr.mxu0 0.0
        %4881 = vmatpush1.msra.mxu0 0.0
        %4882 = vmatprep.subr.mxu0 0.0
        %4883 = vmatpush1.msra.mxu0 0.0
        %4884 = vmatprep.subr.mxu0 0.0
        %4885 = vmatpush1.msra.mxu0 0.0
        %4886 = vmatprep.subr.mxu0 0.0
        %4887 = vmatpush1.msra.mxu0 0.0
        %4888 = vmatprep.subr.mxu0 0.0
        %4889 = vmatpush1.msra.mxu0 0.0
        %4890 = vmatprep.subr.mxu0 0.0
        %4891 = vmatpush1.msra.mxu0 0.0
        %4892 = vmatprep.subr.mxu0 0.0
        %4893 = vmatpush1.msra.mxu0 0.0
        %4894 = vmatprep.subr.mxu0 0.0
        %4895 = vmatpush1.msra.mxu0 0.0
        %4896 = vmatprep.subr.mxu0 0.0
        %4897 = vmatpush1.msra.mxu0 0.0
        %4898 = vmatprep.mubr.f32.mxu0 0.0
        %4899 = vmatmul.mubr.f32.gmra.mrb[0].mxu0 %v3573
        %v4900 = vpop.f32.mrb[0].mxu0
        %v4901 = vadd.f32 0.0, %v4900
        %v4902 = vpop.f32.mrb[0].mxu0
        %4903 = vmatprep.mubr.f32.mxu0 0.0
        %4904 = vmatmul.mubr.f32.gmra.mrb[0].mxu0 %v3575
        %v4905 = vpop.f32.mrb[0].mxu0
        %v4906 = vadd.f32 0.0, %v4905
        %v4907 = vpop.f32.mrb[0].mxu0
        %4908 = vmatprep.mubr.f32.mxu0 0.0
        %4909 = vmatmul.mubr.f32.gmra.mrb[0].mxu0 %v3577
        %v4910 = vpop.f32.mrb[0].mxu0
        %v4911 = vadd.f32 0.0, %v4910
        %v4912 = vpop.f32.mrb[0].mxu0
        %4913 = vmatprep.mubr.f32.mxu0 0.0
        %4914 = vmatmul.mubr.f32.gmra.mrb[0].mxu0 %v3579
        %v4915 = vpop.f32.mrb[0].mxu0
        %v4916 = vadd.f32 0.0, %v4915
        %v4917 = vpop.f32.mrb[0].mxu0
        %4918 = vmatprep.mubr.f32.mxu0 0.0
        %4919 = vmatmul.mubr.f32.gmra.mrb[0].mxu0 %v3581
        %v4920 = vpop.f32.mrb[0].mxu0
        %v4921 = vadd.f32 0.0, %v4920
        %v4922 = vpop.f32.mrb[0].mxu0
        %4923 = vmatprep.mubr.f32.mxu0 0.0
        %4924 = vmatmul.mubr.f32.gmra.mrb[0].mxu0 %v3583
        %v4925 = vpop.f32.mrb[0].mxu0
        %v4926 = vadd.f32 0.0, %v4925
        %v4927 = vpop.f32.mrb[0].mxu0
        %4928 = vmatprep.mubr.f32.mxu0 0.0
        %4929 = vmatmul.mubr.f32.gmra.mrb[0].mxu0 %v3585
        %v4930 = vpop.f32.mrb[0].mxu0
        %v4931 = vadd.f32 0.0, %v4930
        %v4932 = vpop.f32.mrb[0].mxu0
        %4933 = vmatprep.mubr.f32.mxu0 0.0
        %4934 = vmatmul.mubr.f32.gmra.mrb[0].mxu0 %v3587
        %v4935 = vpop.f32.mrb[0].mxu0
        %v4936 = vadd.f32 0.0, %v4935
        %v4937 = vpop.f32.mrb[0].mxu0
        %4938 = vmatprep.mubr.f32.mxu0 0.0
        %4939 = vmatmul.mubr.f32.gmra.mrb[0].mxu0 %v3589
        %v4940 = vpop.f32.mrb[0].mxu0
        %v4941 = vadd.f32 0.0, %v4940
        %v4942 = vpop.f32.mrb[0].mxu0
        %4943 = vmatprep.mubr.f32.mxu0 0.0
        %4944 = vmatmul.mubr.f32.gmra.mrb[0].mxu0 %v3591
        %v4945 = vpop.f32.mrb[0].mxu0
        %v4946 = vadd.f32 0.0, %v4945
        %v4947 = vpop.f32.mrb[0].mxu0
        %4948 = vmatprep.mubr.f32.mxu0 0.0
        %4949 = vmatmul.mubr.f32.gmra.mrb[0].mxu0 %v3593
        %v4950 = vpop.f32.mrb[0].mxu0
        %v4951 = vadd.f32 0.0, %v4950
        %v4952 = vpop.f32.mrb[0].mxu0
        %4953 = vmatprep.mubr.f32.mxu0 0.0
        %4954 = vmatmul.mubr.f32.gmra.mrb[0].mxu0 %v3595
        %v4955 = vpop.f32.mrb[0].mxu0
        %v4956 = vadd.f32 0.0, %v4955
        %v4957 = vpop.f32.mrb[0].mxu0
        %4958 = vmatprep.mubr.f32.mxu0 0.0
        %4959 = vmatmul.mubr.f32.gmra.mrb[0].mxu0 %v4311
        %v4960 = vpop.f32.mrb[0].mxu0
        %v4961 = vadd.f32 0.0, %v4960
        %v4962 = vpop.f32.mrb[0].mxu0
        %4963 = vmatprep.mubr.f32.mxu0 0.0
        %4964 = vmatmul.mubr.f32.gmra.mrb[0].mxu0 %v4313
        %v4965 = vpop.f32.mrb[0].mxu0
        %v4966 = vadd.f32 0.0, %v4965
        %v4967 = vpop.f32.mrb[0].mxu0
        %4968 = vmatprep.mubr.f32.mxu0 0.0
        %4969 = vmatmul.mubr.f32.gmra.mrb[0].mxu0 %v1865
        %v4970 = vpop.f32.mrb[0].mxu0
        %v4971 = vadd.f32 0.0, %v4970
        %v4972 = vpop.f32.mrb[0].mxu0
        %4973 = vmatprep.mubr.f32.mxu0 0.0
        %4974 = vmatmul.mubr.f32.gmra.mrb[0].mxu0 %v1865
        %v4975 = vpop.f32.mrb[0].mxu0
        %v4976 = vadd.f32 0.0, %v4975
        %v4977 = vpop.f32.mrb[0].mxu0
        %4978 = vdwg.mxu0
        %v4979 = vadd.f32 %v4810, %v4901
        %v4980 = vadd.f32 %v4811, %v4906
        %v4981 = vadd.f32 %v4812, %v4911
        %v4982 = vadd.f32 %v4813, %v4916
        %v4983 = vadd.f32 %v4814, %v4921
        %v4984 = vadd.f32 %v4815, %v4926
        %v4985 = vadd.f32 %v4816, %v4931
        %v4986 = vadd.f32 %v4817, %v4936
        %v4987 = vadd.f32 %v4818, %v4941
        %v4988 = vadd.f32 %v4819, %v4946
        %v4989 = vadd.f32 %v4820, %v4951
        %v4990 = vadd.f32 %v4821, %v4956
        %v4991 = vadd.f32 %v4822, %v4961
        %v4992 = vadd.f32 %v4823, %v4966
        %v4993 = vadd.f32 %v4824, %v4971
        %v4994 = vadd.f32 %v4825, %v4976
        %v4995 = vld [vmem:[%s3327] sm:$0xff]
        %v4996 = vld [vmem:[%s3327 + $0x8] sm:$0xff]
        %v4997 = vld [vmem:[%s3327 + $0x10] sm:$0xff]
        %v4998 = vld [vmem:[%s3327 + $0x18] sm:$0xff]
        %v4999 = vld [vmem:[%s3327 + $0x20] sm:$0xff]
        %v5000 = vld [vmem:[%s3327 + $0x28] sm:$0xff]
        %v5001 = vld [vmem:[%s3327 + $0x30] sm:$0xff]
        %v5002 = vld [vmem:[%s3327 + $0x38] sm:$0xff]
        %v5004 = vsel %vm465, %v1845, 0
        %v5007 = vsel %vm465, %v1846, 0
        %5009 = vmatprep.subr.mxu0 0.0
        %5010 = vmatpush1.msra.mxu0 %v4995
        %5011 = vmatprep.subr.mxu0 0.0
        %5012 = vmatpush1.msra.mxu0 %v4996
        %5013 = vmatprep.subr.mxu0 0.0
        %5014 = vmatpush1.msra.mxu0 %v4997
        %5015 = vmatprep.subr.mxu0 0.0
        %5016 = vmatpush1.msra.mxu0 %v4998
        %5017 = vmatprep.subr.mxu0 0.0
        %5018 = vmatpush1.msra.mxu0 %v4999
        %5019 = vmatprep.subr.mxu0 0.0
        %5020 = vmatpush1.msra.mxu0 %v5000
        %5021 = vmatprep.subr.mxu0 0.0
        %5022 = vmatpush1.msra.mxu0 %v5001
        %5023 = vmatprep.subr.mxu0 0.0
        %5024 = vmatpush1.msra.mxu0 %v5002
        %5025 = vmatprep.subr.mxu0 0.0
        %5026 = vmatpush1.msra.mxu0 0.0
        %5027 = vmatprep.subr.mxu0 0.0
        %5028 = vmatpush1.msra.mxu0 0.0
        %5029 = vmatprep.subr.mxu0 0.0
        %5030 = vmatpush1.msra.mxu0 0.0
        %5031 = vmatprep.subr.mxu0 0.0
        %5032 = vmatpush1.msra.mxu0 0.0
        %5033 = vmatprep.subr.mxu0 0.0
        %5034 = vmatpush1.msra.mxu0 0.0
        %5035 = vmatprep.subr.mxu0 0.0
        %5036 = vmatpush1.msra.mxu0 0.0
        %5037 = vmatprep.subr.mxu0 0.0
        %5038 = vmatpush1.msra.mxu0 0.0
        %5039 = vmatprep.subr.mxu0 0.0
        %5040 = vmatpush1.msra.mxu0 0.0
        %5041 = vmatprep.subr.mxu0 0.0
        %5042 = vmatpush1.msra.mxu0 0.0
        %5043 = vmatprep.subr.mxu0 0.0
        %5044 = vmatpush1.msra.mxu0 0.0
        %5045 = vmatprep.subr.mxu0 0.0
        %5046 = vmatpush1.msra.mxu0 0.0
        %5047 = vmatprep.subr.mxu0 0.0
        %5048 = vmatpush1.msra.mxu0 0.0
        %5049 = vmatprep.subr.mxu0 0.0
        %5050 = vmatpush1.msra.mxu0 0.0
        %5051 = vmatprep.subr.mxu0 0.0
        %5052 = vmatpush1.msra.mxu0 0.0
        %5053 = vmatprep.subr.mxu0 0.0
        %5054 = vmatpush1.msra.mxu0 0.0
        %5055 = vmatprep.subr.mxu0 0.0
        %5056 = vmatpush1.msra.mxu0 0.0
        %5057 = vmatprep.subr.mxu0 0.0
        %5058 = vmatpush1.msra.mxu0 0.0
        %5059 = vmatprep.subr.mxu0 0.0
        %5060 = vmatpush1.msra.mxu0 0.0
        %5061 = vmatprep.subr.mxu0 0.0
        %5062 = vmatpush1.msra.mxu0 0.0
        %5063 = vmatprep.subr.mxu0 0.0
        %5064 = vmatpush1.msra.mxu0 0.0
        %5065 = vmatprep.subr.mxu0 0.0
        %5066 = vmatpush1.msra.mxu0 0.0
        %5067 = vmatprep.subr.mxu0 0.0
        %5068 = vmatpush1.msra.mxu0 0.0
        %5069 = vmatprep.subr.mxu0 0.0
        %5070 = vmatpush1.msra.mxu0 0.0
        %5071 = vmatprep.subr.mxu0 0.0
        %5072 = vmatpush1.msra.mxu0 0.0
        %5073 = vmatprep.mubr.f32.mxu0 0.0
        %5074 = vmatmul.mubr.f32.gmra.mrb[0].mxu0 %v3932
        %v5075 = vpop.f32.mrb[0].mxu0
        %v5076 = vadd.f32 0.0, %v5075
        %v5077 = vpop.f32.mrb[0].mxu0
        %5078 = vmatprep.mubr.f32.mxu0 0.0
        %5079 = vmatmul.mubr.f32.gmra.mrb[0].mxu0 %v3935
        %v5080 = vpop.f32.mrb[0].mxu0
        %v5081 = vadd.f32 0.0, %v5080
        %v5082 = vpop.f32.mrb[0].mxu0
        %5083 = vmatprep.mubr.f32.mxu0 0.0
        %5084 = vmatmul.mubr.f32.gmra.mrb[0].mxu0 %v3938
        %v5085 = vpop.f32.mrb[0].mxu0
        %v5086 = vadd.f32 0.0, %v5085
        %v5087 = vpop.f32.mrb[0].mxu0
        %5088 = vmatprep.mubr.f32.mxu0 0.0
        %5089 = vmatmul.mubr.f32.gmra.mrb[0].mxu0 %v3941
        %v5090 = vpop.f32.mrb[0].mxu0
        %v5091 = vadd.f32 0.0, %v5090
        %v5092 = vpop.f32.mrb[0].mxu0
        %5093 = vmatprep.mubr.f32.mxu0 0.0
        %5094 = vmatmul.mubr.f32.gmra.mrb[0].mxu0 %v3944
        %v5095 = vpop.f32.mrb[0].mxu0
        %v5096 = vadd.f32 0.0, %v5095
        %v5097 = vpop.f32.mrb[0].mxu0
        %5098 = vmatprep.mubr.f32.mxu0 0.0
        %5099 = vmatmul.mubr.f32.gmra.mrb[0].mxu0 %v3947
        %v5100 = vpop.f32.mrb[0].mxu0
        %v5101 = vadd.f32 0.0, %v5100
        %v5102 = vpop.f32.mrb[0].mxu0
        %5103 = vmatprep.mubr.f32.mxu0 0.0
        %5104 = vmatmul.mubr.f32.gmra.mrb[0].mxu0 %v3950
        %v5105 = vpop.f32.mrb[0].mxu0
        %v5106 = vadd.f32 0.0, %v5105
        %v5107 = vpop.f32.mrb[0].mxu0
        %5108 = vmatprep.mubr.f32.mxu0 0.0
        %5109 = vmatmul.mubr.f32.gmra.mrb[0].mxu0 %v3953
        %v5110 = vpop.f32.mrb[0].mxu0
        %v5111 = vadd.f32 0.0, %v5110
        %v5112 = vpop.f32.mrb[0].mxu0
        %5113 = vmatprep.mubr.f32.mxu0 0.0
        %5114 = vmatmul.mubr.f32.gmra.mrb[0].mxu0 %v3956
        %v5115 = vpop.f32.mrb[0].mxu0
        %v5116 = vadd.f32 0.0, %v5115
        %v5117 = vpop.f32.mrb[0].mxu0
        %5118 = vmatprep.mubr.f32.mxu0 0.0
        %5119 = vmatmul.mubr.f32.gmra.mrb[0].mxu0 %v3959
        %v5120 = vpop.f32.mrb[0].mxu0
        %v5121 = vadd.f32 0.0, %v5120
        %v5122 = vpop.f32.mrb[0].mxu0
        %5123 = vmatprep.mubr.f32.mxu0 0.0
        %5124 = vmatmul.mubr.f32.gmra.mrb[0].mxu0 %v3962
        %v5125 = vpop.f32.mrb[0].mxu0
        %v5126 = vadd.f32 0.0, %v5125
        %v5127 = vpop.f32.mrb[0].mxu0
        %5128 = vmatprep.mubr.f32.mxu0 0.0
        %5129 = vmatmul.mubr.f32.gmra.mrb[0].mxu0 %v3965
        %v5130 = vpop.f32.mrb[0].mxu0
        %v5131 = vadd.f32 0.0, %v5130
        %v5132 = vpop.f32.mrb[0].mxu0
        %5133 = vmatprep.mubr.f32.mxu0 0.0
        %5134 = vmatmul.mubr.f32.gmra.mrb[0].mxu0 %v4485
        %v5135 = vpop.f32.mrb[0].mxu0
        %v5136 = vadd.f32 0.0, %v5135
        %v5137 = vpop.f32.mrb[0].mxu0
        %5138 = vmatprep.mubr.f32.mxu0 0.0
        %5139 = vmatmul.mubr.f32.gmra.mrb[0].mxu0 %v4488
        %v5140 = vpop.f32.mrb[0].mxu0
        %v5141 = vadd.f32 0.0, %v5140
        %v5142 = vpop.f32.mrb[0].mxu0
        %5143 = vmatprep.mubr.f32.mxu0 0.0
        %5144 = vmatmul.mubr.f32.gmra.mrb[0].mxu0 %v5004
        %v5145 = vpop.f32.mrb[0].mxu0
        %v5146 = vadd.f32 0.0, %v5145
        %v5147 = vpop.f32.mrb[0].mxu0
        %5148 = vmatprep.mubr.f32.mxu0 0.0
        %5149 = vmatmul.mubr.f32.gmra.mrb[0].mxu0 %v5007
        %v5150 = vpop.f32.mrb[0].mxu0
        %v5151 = vadd.f32 0.0, %v5150
        %v5152 = vpop.f32.mrb[0].mxu0
        %5153 = vdwg.mxu0
        %v5154 = vadd.f32 %v4979, %v5076
        %v5155 = vadd.f32 %v4980, %v5081
        %v5156 = vadd.f32 %v4981, %v5086
        %v5157 = vadd.f32 %v4982, %v5091
        %v5158 = vadd.f32 %v4983, %v5096
        %v5159 = vadd.f32 %v4984, %v5101
        %v5160 = vadd.f32 %v4985, %v5106
        %v5161 = vadd.f32 %v4986, %v5111
        %v5162 = vadd.f32 %v4987, %v5116
        %v5163 = vadd.f32 %v4988, %v5121
        %v5164 = vadd.f32 %v4989, %v5126
        %v5165 = vadd.f32 %v4990, %v5131
        %v5166 = vadd.f32 %v4991, %v5136
        %v5167 = vadd.f32 %v4992, %v5141
        %v5168 = vadd.f32 %v4993, %v5146
        %v5169 = vadd.f32 %v4994, %v5151
        %v5170 = vadd.f32 %v5154, %v3507
        %v5171 = vadd.f32 %v5155, %v3507
        %v5172 = vadd.f32 %v5156, %v3507
        %v5173 = vadd.f32 %v5157, %v3507
        %v5174 = vadd.f32 %v5158, %v3507
        %v5175 = vadd.f32 %v5159, %v3507
        %v5176 = vadd.f32 %v5160, %v3507
        %v5177 = vadd.f32 %v5161, %v3507
        %v5178 = vadd.f32 %v5162, %v3507
        %v5179 = vadd.f32 %v5163, %v3507
        %v5180 = vadd.f32 %v5164, %v3507
        %v5181 = vadd.f32 %v5165, %v3507
        %v5182 = vadd.f32 %v5166, %v3507
        %v5183 = vadd.f32 %v5167, %v3507
        %v5184 = vadd.f32 %v5168, %v3507
        %v5185 = vadd.f32 %v5169, %v3507
        %v5186 = vmax.f32 %v5170, 0.0
        %v5187 = vmax.f32 %v5171, 0.0
        %v5188 = vmax.f32 %v5172, 0.0
        %v5189 = vmax.f32 %v5173, 0.0
        %v5190 = vmax.f32 %v5174, 0.0
        %v5191 = vmax.f32 %v5175, 0.0
        %v5192 = vmax.f32 %v5176, 0.0
        %v5193 = vmax.f32 %v5177, 0.0
        %v5194 = vmax.f32 %v5178, 0.0
        %v5195 = vmax.f32 %v5179, 0.0
        %v5196 = vmax.f32 %v5180, 0.0
        %v5197 = vmax.f32 %v5181, 0.0
        %v5198 = vmax.f32 %v5182, 0.0
        %v5199 = vmax.f32 %v5183, 0.0
        %v5200 = vmax.f32 %v5184, 0.0
        %v5201 = vmax.f32 %v5185, 0.0
        %5202 = vst.msk [vmem:[%s376 + $0x80] sm:$0xff] %vm465, %v5186
        %5203 = vst.msk [vmem:[%s376 + $0x88] sm:$0xff] %vm465, %v5187
        %5204 = vst.msk [vmem:[%s376 + $0x90] sm:$0xff] %vm465, %v5188
        %5205 = vst.msk [vmem:[%s376 + $0x98] sm:$0xff] %vm465, %v5189
        %5206 = vst.msk [vmem:[%s376 + $0xa0] sm:$0xff] %vm465, %v5190
        %5207 = vst.msk [vmem:[%s376 + $0xa8] sm:$0xff] %vm465, %v5191
        %5208 = vst.msk [vmem:[%s376 + $0xb0] sm:$0xff] %vm465, %v5192
        %5209 = vst.msk [vmem:[%s376 + $0xb8] sm:$0xff] %vm465, %v5193
        %5210 = vst.msk [vmem:[%s376 + $0xc0] sm:$0xff] %vm465, %v5194
        %5211 = vst.msk [vmem:[%s376 + $0xc8] sm:$0xff] %vm465, %v5195
        %5212 = vst.msk [vmem:[%s376 + $0xd0] sm:$0xff] %vm465, %v5196
        %5213 = vst.msk [vmem:[%s376 + $0xd8] sm:$0xff] %vm465, %v5197
        %5214 = vst.msk [vmem:[%s376 + $0xe0] sm:$0xff] %vm465, %v5198
        %5215 = vst.msk [vmem:[%s376 + $0xe8] sm:$0xff] %vm465, %v5199
        %5216 = vst.msk [vmem:[%s376 + $0xf0] sm:$0xff] %vm465, %v5200
        %5217 = vst.msk [vmem:[%s376 + $0xf8] sm:$0xff] %vm465, %v5201
        %s5218 = sand.u32 %s238, 1
        %s5219 = scalar_lea.sflag [#allocation4], %s5218
        %s5220 = sand.u32 %s238, 1
        %s5221 = smul.addr %s5220, 256
        %s5222 = scalar_lea.vmem [#allocation5], %s5221
        // Predicated region
        $region61: #{asym_bi_cha_fuse.1} parent=55 // pred_check
          %p5223 = pneg %p248
        $region62: #{asym_bi_cha_fuse.1} parent=55 // pred_check_branch
          %5225 = sbr.rel (%p5223) target = $region64
        $region63: #{asym_bi_cha_fuse.1} parent=55 // pred_region
          %s5227 = ssub.s32 4096, 4096
          %5228 = vsyncadd %s5219, %s5227
          %s5229 = smul.addr %s26, 32
          %s5230 = smul.addr %s5229, 128
          %s5231 = scalar_lea.hbm %s9, %s5230
          %s5232 = sshll.u32 %s5222, 4
          %s5233 = int_to_ptr.vmem [resolvable:$true] %s5232
          %5238 = dma.vmem_to_hbm [thread:$0]  %s5233, 4096, %s5231, %s5219, 128, 128, 8
        $region64: #{asym_bi_cha_fuse.1} parent=55 // pred_fallthru
          _
      $region56: #{asym_bi_cha_fuse.1} parent=5 // pred_fallthru
        _
      %p5239 = scmp.le.s32.totalorder 2, %s21
      // Predicated region
      $region65: #{asym_bi_cha_fuse.1} parent=5 // pred_check
        %p5240 = pneg %p5239
      $region66: #{asym_bi_cha_fuse.1} parent=5 // pred_check_branch
        %5242 = sbr.rel (%p5240) target = $region68
      $region67: #{asym_bi_cha_fuse.1} parent=5 // pred_region
        %s5243 = ssub.s32 %s21, 2
        // Predicated region
        $region69: #{asym_bi_cha_fuse.1} parent=67 // pred_check
          %p5244 = pneg %p254
        $region70: #{asym_bi_cha_fuse.1} parent=67 // pred_check_branch
          %5246 = sbr.rel (%p5244) target = $region72
        $region71: #{asym_bi_cha_fuse.1} parent=67 // pred_region
          %s5247 = sand.u32 %s239, 1
          %s5248 = scalar_lea.sflag [#allocation4], %s5247
          %s5249 = sand.u32 %s239, 1
          %s5250 = smul.addr %s5249, 256
          %s5251 = scalar_lea.vmem [#allocation5], %s5250
          %5252 = dma.done %s5248, 4096
        $region72: #{asym_bi_cha_fuse.1} parent=67 // pred_fallthru
          _
      $region68: #{asym_bi_cha_fuse.1} parent=5 // pred_fallthru
        _
    $region6: #{asym_bi_cha_fuse.1} parent=1 // loop_footer
      %s25 = sadd.s32 1, %s21
    $region7: #{asym_bi_cha_fuse.1} parent=1 // loop_footer_branch
      %20 = sbr.rel target = $region3
    $region8: #{asym_bi_cha_fuse.1} parent=1 // loop_exit
      _
    %5253 = vsyncpa [#allocation3], 1
    %s5254 = scalar_lea.sflag [#allocation3], 1
    %5255 = vsyncpa %s5254, 1
    %5256 = vsyncpa [#allocation4], 1
    %s5257 = scalar_lea.sflag [#allocation4], 1
    %5258 = vsyncpa %s5257, 1

</llo_original>
